<compile_context>
chip_gen: v5e
topology: v5e:2x2
jax: 0.10.0
libtpu: 0.0.40
codegen_flags: <defaults>
</compile_context>

<pallas_src>
import functools

import jax
import jax.numpy as jnp
from jax.experimental import pallas as pl
from jax.experimental.pallas import tpu as pltpu

BN_EPS = 1e-5


# ----------------------------------------------------------------------------
# Fused whole-network kernel (runs once, no grid; everything VMEM-resident).
# ----------------------------------------------------------------------------
def _fused_net_kernel(x_ref, mask_ref, *refs, N, H, W, K, D, layer_dims):
    pd = K // 2
    Hp, Wp = H + 2 * pd, W + 2 * pd
    L = Hp * Wp                      # padded-flat length of one image
    M = N * L                        # padded-flat length of the whole batch
    MARGIN = pd * Wp + pd            # max |flat shift| of a conv tap
    n_conv = len(layer_dims)
    inv_count = 1.0 / float(N * H * W)

    o_ref = refs[-1]
    beff_ref = refs[-2]
    wemb_ref = refs[-3]
    param_refs = iter(refs[:-3])

    a = x_ref[...]                   # (1, M + 2*n_conv*MARGIN), zero-padded
    mask_full = mask_ref[...]        # (1, M + 2*n_conv*MARGIN), 1.0 at valid

    margin = n_conv * MARGIN         # spare lanes on each side of `a`
    for idx, (cin, cout, has_bn) in enumerate(layer_dims):
        w_all = next(param_refs)[...]                    # (K*K, cout, cin)
        gb = next(param_refs)[...] if has_bn else None   # (cout, 2)

        margin -= MARGIN
        b_out = M + 2 * margin                           # output buffer width

        acc = jnp.zeros((cout, b_out), jnp.float32)
        for dy in range(K):
            for dx in range(K):
                start = dy * Wp + dx                     # in [0, 2*MARGIN]
                patch = a[:, start:start + b_out]        # (cin, b_out)
                w_tap = w_all[dy * K + dx]               # (cout, cin)
                if cin == 1 or cout == 1:
                    # Degenerate contraction: VPU broadcast FMA(s).
                    contrib = w_tap[:, 0:1] * patch[0:1, :]
                    for c in range(1, cin):
                        contrib = contrib + w_tap[:, c:c + 1] * patch[c:c + 1, :]
                else:
                    # (cout, cin) @ (cin, b_out): lane-dense MXU matmul.
                    contrib = jnp.dot(w_tap, patch,
                                      preferred_element_type=jnp.float32)
                acc = acc + contrib

        if has_bn:
            # Valid-position mask in the *output* buffer's coordinates.
            off = (idx + 1) * MARGIN
            m = mask_full[:, off:off + b_out]            # (1, b_out)
            # One-pass batch statistics over (N, H, W); the conv bias cancels
            # exactly under BN mean-subtraction and is skipped.
            masked = acc * m
            s1 = jnp.sum(masked, axis=1, keepdims=True)           # (cout, 1)
            s2 = jnp.sum(masked * masked, axis=1, keepdims=True)  # (cout, 1)
            mean = s1 * inv_count
            var = s2 * inv_count - mean * mean
            y = (acc - mean) * jax.lax.rsqrt(var + BN_EPS)
            y = y * gb[:, 0:1] + gb[:, 1:2]
            a = jnp.maximum(y, 0.0) * m   # ReLU, then re-zero pad positions
        else:
            # Last conv (cout == 1): bias folded into the linear bias; pad
            # garbage is killed by the zero rows of the embedded linear weight.
            a = acc

    # Fused Flatten(start_dim=2) + Linear(D*D, D).
    # `a` is (1, N*L) in plain padded-flat coordinates (margin == 0 now).
    segs = jnp.concatenate([a[:, n * L:(n + 1) * L] for n in range(N)], axis=0)
    y = jnp.dot(segs, wemb_ref[...], preferred_element_type=jnp.float32)
    o_ref[...] = y + beff_ref[...]


# ----------------------------------------------------------------------------
# Wrapper: host-side layout/parameter preparation + single pallas_call.
# ----------------------------------------------------------------------------
def eig_conv_net_forward(x_nchw, params):
    x = x_nchw.astype(jnp.float32)
    N, c0, H, W = x.shape
    assert c0 == 1, "EigConvNet expects a single input channel"

    conv_layers = params["conv_layers"]
    n_conv = len(conv_layers)
    K = int(conv_layers[0]["w"].shape[0])
    pd = K // 2
    Hp, Wp = H + 2 * pd, W + 2 * pd
    L = Hp * Wp
    M = N * L
    MARGIN = pd * Wp + pd
    E0 = n_conv * MARGIN
    D = int(params["lin_w_t"].shape[1])

    # Network input -> zero-padded, image-major flattened, with E0 spare lanes
    # on each side (one MARGIN consumed per conv layer inside the kernel).
    xp = jnp.pad(x, ((0, 0), (0, 0), (pd, pd), (pd, pd)))      # (N, 1, Hp, Wp)
    x_buf = jnp.pad(xp.reshape(1, M), ((0, 0), (E0, E0)))      # (1, M + 2*E0)

    # Mask of valid (non-pad) positions in the same coordinates.
    ys = jnp.arange(Hp)
    xs = jnp.arange(Wp)
    m2d = ((ys[:, None] >= pd) & (ys[:, None] < pd + H) &
           (xs[None, :] >= pd) & (xs[None, :] < pd + W)).astype(jnp.float32)
    mask = jnp.pad(jnp.tile(m2d.reshape(1, L), (1, N)), ((0, 0), (E0, E0)))

    args = [x_buf, mask]
    layer_dims = []
    for i, layer in enumerate(conv_layers):
        w = layer["w"]                                   # (K, K, Cin, Cout)
        cin, cout = int(w.shape[2]), int(w.shape[3])
        has_bn = i < n_conv - 1
        layer_dims.append((cin, cout, has_bn))
        # Tap-major weights: (K*K, Cout, Cin).
        args.append(jnp.transpose(w, (0, 1, 3, 2)).reshape(K * K, cout, cin))
        if has_bn:
            # Conv bias cancels under BN -> only gamma/beta are needed.
            args.append(jnp.stack([layer["gamma"], layer["beta"]], axis=1))

    # Linear weight embedded on the padded grid (zero rows at pad positions);
    # last conv's bias folded into the linear bias.
    lw = params["lin_w_t"]                               # (H*W, D) input-major
    wemb = jnp.pad(lw.reshape(H, W, D),
                   ((pd, pd), (pd, pd), (0, 0))).reshape(L, D)
    b_last = conv_layers[-1]["b"]                        # (1,)
    b_eff = (params["lin_b"] + b_last[0] * jnp.sum(lw, axis=0)).reshape(1, D)
    args += [wemb, b_eff]

    kernel = functools.partial(
        _fused_net_kernel,
        N=N, H=H, W=W, K=K, D=D, layer_dims=tuple(layer_dims))

    vmem = pl.BlockSpec(memory_space=pltpu.MemorySpace.VMEM)
    out = pl.pallas_call(
        kernel,
        out_shape=jax.ShapeDtypeStruct((N, D), jnp.float32),
        in_specs=[vmem] * len(args),
        out_specs=vmem,
    )(*args)

    # Match PyTorch: Flatten(start_dim=2) keeps the channel dim -> (N, 1, D).
    return out.reshape(N, 1, D)


# ----------------------------------------------------------------------------
# Deterministic parameter initialization (synthetic weights).
# ----------------------------------------------------------------------------
def init_params(key, matrix_dimension, hidden_layers, filters, kernel_size):
    D, K = matrix_dimension, kernel_size
    chans = ([(1, filters)]
             + [(filters, filters)] * (hidden_layers - 1)
             + [(filters, 1)])
    params = {"conv_layers": []}
    for cin, cout in chans:
        key, k1, k2, k3, k4 = jax.random.split(key, 5)
        params["conv_layers"].append(dict(
            w=jax.random.normal(k1, (K, K, cin, cout), jnp.float32) * 0.3,
            b=jax.random.normal(k2, (cout,), jnp.float32) * 0.1,
            gamma=jax.random.uniform(k3, (cout,), jnp.float32, 0.5, 1.5),
            beta=jax.random.normal(k4, (cout,), jnp.float32) * 0.1,
        ))
    key, k1, k2 = jax.random.split(key, 3)
    params["lin_w_t"] = jax.random.normal(k1, (D * D, D), jnp.float32) / D
    params["lin_b"] = jax.random.normal(k2, (D,), jnp.float32) * 0.1
    return params


if __name__ == "__main__":
    matrix_dimension = 16
    hidden_layers = 2
    filters = 4
    kernel_size = 3
    batch = 2

    key = jax.random.PRNGKey(0)
    kx, kp = jax.random.split(key)
    x = jax.random.normal(kx, (batch, 1, matrix_dimension, matrix_dimension),
                          jnp.float32)
    params = init_params(kp, matrix_dimension, hidden_layers, filters,
                         kernel_size)

    fwd = jax.jit(eig_conv_net_forward)
    out = fwd(x, params)
    out = jax.block_until_ready(out)

    assert out.shape == (batch, 1, matrix_dimension), out.shape
    assert out.dtype == jnp.float32
    print("KERNEL_OK")
</pallas_src>

<mosaic_0001>
module attributes {stable_mosaic.version = 11 : i64} {
  func.func @_fused_net_kernel(%arg0: memref<1x762xf32, #tpu.memory_space<vmem>>, %arg1: memref<1x762xf32, #tpu.memory_space<vmem>>, %arg2: memref<9x4x1xf32, #tpu.memory_space<vmem>>, %arg3: memref<4x2xf32, #tpu.memory_space<vmem>>, %arg4: memref<9x4x4xf32, #tpu.memory_space<vmem>>, %arg5: memref<4x2xf32, #tpu.memory_space<vmem>>, %arg6: memref<9x1x4xf32, #tpu.memory_space<vmem>>, %arg7: memref<324x16xf32, #tpu.memory_space<vmem>>, %arg8: memref<1x16xf32, #tpu.memory_space<vmem>>, %arg9: memref<2x16xf32, #tpu.memory_space<vmem>>) attributes {dimension_semantics = [], scalar_prefetch = 0 : i64, scratch_operands = 0 : i64, tpu.core_type = #tpu.core_type<tc>} {
    %c0 = arith.constant 0 : index
    %c0_0 = arith.constant 0 : index
    %0 = vector.load %arg0[%c0, %c0_0] : memref<1x762xf32, #tpu.memory_space<vmem>>, vector<1x762xf32>
    %c0_1 = arith.constant 0 : index
    %c0_2 = arith.constant 0 : index
    %1 = vector.load %arg1[%c0_1, %c0_2] : memref<1x762xf32, #tpu.memory_space<vmem>>, vector<1x762xf32>
    %c0_3 = arith.constant 0 : index
    %c0_4 = arith.constant 0 : index
    %c0_5 = arith.constant 0 : index
    %2 = vector.load %arg2[%c0_3, %c0_4, %c0_5] : memref<9x4x1xf32, #tpu.memory_space<vmem>>, vector<9x4x1xf32>
    %c0_6 = arith.constant 0 : index
    %c0_7 = arith.constant 0 : index
    %3 = vector.load %arg3[%c0_6, %c0_7] : memref<4x2xf32, #tpu.memory_space<vmem>>, vector<4x2xf32>
    %cst = arith.constant 0.000000e+00 : f32
    %4 = vector.broadcast %cst : f32 to vector<4x724xf32>
    %5 = vector.extract_strided_slice %0 {offsets = [0, 0], sizes = [1, 724], strides = [1, 1]} : vector<1x762xf32> to vector<1x724xf32>
    %6 = vector.extract_strided_slice %2 {offsets = [0, 0, 0], sizes = [1, 4, 1], strides = [1, 1, 1]} : vector<9x4x1xf32> to vector<1x4x1xf32>
    %7 = vector.shape_cast %6 : vector<1x4x1xf32> to vector<4x1xf32>
    %8 = vector.broadcast %7 : vector<4x1xf32> to vector<4x724xf32>
    %9 = vector.broadcast %5 : vector<1x724xf32> to vector<4x724xf32>
    %10 = arith.mulf %8, %9 : vector<4x724xf32>
    %11 = arith.addf %4, %10 : vector<4x724xf32>
    %12 = vector.extract_strided_slice %0 {offsets = [0, 1], sizes = [1, 724], strides = [1, 1]} : vector<1x762xf32> to vector<1x724xf32>
    %13 = vector.extract_strided_slice %2 {offsets = [1, 0, 0], sizes = [1, 4, 1], strides = [1, 1, 1]} : vector<9x4x1xf32> to vector<1x4x1xf32>
    %14 = vector.shape_cast %13 : vector<1x4x1xf32> to vector<4x1xf32>
    %15 = vector.broadcast %14 : vector<4x1xf32> to vector<4x724xf32>
    %16 = vector.broadcast %12 : vector<1x724xf32> to vector<4x724xf32>
    %17 = arith.mulf %15, %16 : vector<4x724xf32>
    %18 = arith.addf %11, %17 : vector<4x724xf32>
    %19 = vector.extract_strided_slice %0 {offsets = [0, 2], sizes = [1, 724], strides = [1, 1]} : vector<1x762xf32> to vector<1x724xf32>
    %20 = vector.extract_strided_slice %2 {offsets = [2, 0, 0], sizes = [1, 4, 1], strides = [1, 1, 1]} : vector<9x4x1xf32> to vector<1x4x1xf32>
    %21 = vector.shape_cast %20 : vector<1x4x1xf32> to vector<4x1xf32>
    %22 = vector.broadcast %21 : vector<4x1xf32> to vector<4x724xf32>
    %23 = vector.broadcast %19 : vector<1x724xf32> to vector<4x724xf32>
    %24 = arith.mulf %22, %23 : vector<4x724xf32>
    %25 = arith.addf %18, %24 : vector<4x724xf32>
    %26 = vector.extract_strided_slice %0 {offsets = [0, 18], sizes = [1, 724], strides = [1, 1]} : vector<1x762xf32> to vector<1x724xf32>
    %27 = vector.extract_strided_slice %2 {offsets = [3, 0, 0], sizes = [1, 4, 1], strides = [1, 1, 1]} : vector<9x4x1xf32> to vector<1x4x1xf32>
    %28 = vector.shape_cast %27 : vector<1x4x1xf32> to vector<4x1xf32>
    %29 = vector.broadcast %28 : vector<4x1xf32> to vector<4x724xf32>
    %30 = vector.broadcast %26 : vector<1x724xf32> to vector<4x724xf32>
    %31 = arith.mulf %29, %30 : vector<4x724xf32>
    %32 = arith.addf %25, %31 : vector<4x724xf32>
    %33 = vector.extract_strided_slice %0 {offsets = [0, 19], sizes = [1, 724], strides = [1, 1]} : vector<1x762xf32> to vector<1x724xf32>
    %34 = vector.extract_strided_slice %2 {offsets = [4, 0, 0], sizes = [1, 4, 1], strides = [1, 1, 1]} : vector<9x4x1xf32> to vector<1x4x1xf32>
    %35 = vector.shape_cast %34 : vector<1x4x1xf32> to vector<4x1xf32>
    %36 = vector.broadcast %35 : vector<4x1xf32> to vector<4x724xf32>
    %37 = vector.broadcast %33 : vector<1x724xf32> to vector<4x724xf32>
    %38 = arith.mulf %36, %37 : vector<4x724xf32>
    %39 = arith.addf %32, %38 : vector<4x724xf32>
    %40 = vector.extract_strided_slice %0 {offsets = [0, 20], sizes = [1, 724], strides = [1, 1]} : vector<1x762xf32> to vector<1x724xf32>
    %41 = vector.extract_strided_slice %2 {offsets = [5, 0, 0], sizes = [1, 4, 1], strides = [1, 1, 1]} : vector<9x4x1xf32> to vector<1x4x1xf32>
    %42 = vector.shape_cast %41 : vector<1x4x1xf32> to vector<4x1xf32>
    %43 = vector.broadcast %42 : vector<4x1xf32> to vector<4x724xf32>
    %44 = vector.broadcast %40 : vector<1x724xf32> to vector<4x724xf32>
    %45 = arith.mulf %43, %44 : vector<4x724xf32>
    %46 = arith.addf %39, %45 : vector<4x724xf32>
    %47 = vector.extract_strided_slice %0 {offsets = [0, 36], sizes = [1, 724], strides = [1, 1]} : vector<1x762xf32> to vector<1x724xf32>
    %48 = vector.extract_strided_slice %2 {offsets = [6, 0, 0], sizes = [1, 4, 1], strides = [1, 1, 1]} : vector<9x4x1xf32> to vector<1x4x1xf32>
    %49 = vector.shape_cast %48 : vector<1x4x1xf32> to vector<4x1xf32>
    %50 = vector.broadcast %49 : vector<4x1xf32> to vector<4x724xf32>
    %51 = vector.broadcast %47 : vector<1x724xf32> to vector<4x724xf32>
    %52 = arith.mulf %50, %51 : vector<4x724xf32>
    %53 = arith.addf %46, %52 : vector<4x724xf32>
    %54 = vector.extract_strided_slice %0 {offsets = [0, 37], sizes = [1, 724], strides = [1, 1]} : vector<1x762xf32> to vector<1x724xf32>
    %55 = vector.extract_strided_slice %2 {offsets = [7, 0, 0], sizes = [1, 4, 1], strides = [1, 1, 1]} : vector<9x4x1xf32> to vector<1x4x1xf32>
    %56 = vector.shape_cast %55 : vector<1x4x1xf32> to vector<4x1xf32>
    %57 = vector.broadcast %56 : vector<4x1xf32> to vector<4x724xf32>
    %58 = vector.broadcast %54 : vector<1x724xf32> to vector<4x724xf32>
    %59 = arith.mulf %57, %58 : vector<4x724xf32>
    %60 = arith.addf %53, %59 : vector<4x724xf32>
    %61 = vector.extract_strided_slice %0 {offsets = [0, 38], sizes = [1, 724], strides = [1, 1]} : vector<1x762xf32> to vector<1x724xf32>
    %62 = vector.extract_strided_slice %2 {offsets = [8, 0, 0], sizes = [1, 4, 1], strides = [1, 1, 1]} : vector<9x4x1xf32> to vector<1x4x1xf32>
    %63 = vector.shape_cast %62 : vector<1x4x1xf32> to vector<4x1xf32>
    %64 = vector.broadcast %63 : vector<4x1xf32> to vector<4x724xf32>
    %65 = vector.broadcast %61 : vector<1x724xf32> to vector<4x724xf32>
    %66 = arith.mulf %64, %65 : vector<4x724xf32>
    %67 = arith.addf %60, %66 : vector<4x724xf32>
    %68 = vector.extract_strided_slice %1 {offsets = [0, 19], sizes = [1, 724], strides = [1, 1]} : vector<1x762xf32> to vector<1x724xf32>
    %69 = vector.broadcast %68 : vector<1x724xf32> to vector<4x724xf32>
    %70 = arith.mulf %67, %69 : vector<4x724xf32>
    %cst_8 = arith.constant dense<0.000000e+00> : vector<4xf32>
    %71 = vector.multi_reduction <add>, %70, %cst_8 [1] : vector<4x724xf32> to vector<4xf32>
    %72 = vector.shape_cast %71 : vector<4xf32> to vector<4x1xf32>
    %73 = arith.mulf %70, %70 : vector<4x724xf32>
    %cst_9 = arith.constant dense<0.000000e+00> : vector<4xf32>
    %74 = vector.multi_reduction <add>, %73, %cst_9 [1] : vector<4x724xf32> to vector<4xf32>
    %75 = vector.shape_cast %74 : vector<4xf32> to vector<4x1xf32>
    %cst_10 = arith.constant 0.001953125 : f32
    %76 = vector.broadcast %cst_10 : f32 to vector<4x1xf32>
    %77 = arith.mulf %72, %76 : vector<4x1xf32>
    %cst_11 = arith.constant 0.001953125 : f32
    %78 = vector.broadcast %cst_11 : f32 to vector<4x1xf32>
    %79 = arith.mulf %75, %78 : vector<4x1xf32>
    %80 = arith.mulf %77, %77 : vector<4x1xf32>
    %81 = arith.subf %79, %80 : vector<4x1xf32>
    %82 = vector.broadcast %77 : vector<4x1xf32> to vector<4x724xf32>
    %83 = arith.subf %67, %82 : vector<4x724xf32>
    %cst_12 = arith.constant 9.99999974E-6 : f32
    %84 = vector.broadcast %cst_12 : f32 to vector<4x1xf32>
    %85 = arith.addf %81, %84 : vector<4x1xf32>
    %86 = math.rsqrt %85 : vector<4x1xf32>
    %87 = vector.broadcast %86 : vector<4x1xf32> to vector<4x724xf32>
    %88 = arith.mulf %83, %87 : vector<4x724xf32>
    %89 = vector.extract_strided_slice %3 {offsets = [0, 0], sizes = [4, 1], strides = [1, 1]} : vector<4x2xf32> to vector<4x1xf32>
    %90 = vector.broadcast %89 : vector<4x1xf32> to vector<4x724xf32>
    %91 = arith.mulf %88, %90 : vector<4x724xf32>
    %92 = vector.extract_strided_slice %3 {offsets = [0, 1], sizes = [4, 1], strides = [1, 1]} : vector<4x2xf32> to vector<4x1xf32>
    %93 = vector.broadcast %92 : vector<4x1xf32> to vector<4x724xf32>
    %94 = arith.addf %91, %93 : vector<4x724xf32>
    %cst_13 = arith.constant 0.000000e+00 : f32
    %95 = vector.broadcast %cst_13 : f32 to vector<4x724xf32>
    %96 = arith.maximumf %94, %95 : vector<4x724xf32>
    %97 = vector.broadcast %68 : vector<1x724xf32> to vector<4x724xf32>
    %98 = arith.mulf %96, %97 : vector<4x724xf32>
    %c0_14 = arith.constant 0 : index
    %c0_15 = arith.constant 0 : index
    %c0_16 = arith.constant 0 : index
    %99 = vector.load %arg4[%c0_14, %c0_15, %c0_16] : memref<9x4x4xf32, #tpu.memory_space<vmem>>, vector<9x4x4xf32>
    %c0_17 = arith.constant 0 : index
    %c0_18 = arith.constant 0 : index
    %100 = vector.load %arg5[%c0_17, %c0_18] : memref<4x2xf32, #tpu.memory_space<vmem>>, vector<4x2xf32>
    %cst_19 = arith.constant 0.000000e+00 : f32
    %101 = vector.broadcast %cst_19 : f32 to vector<4x686xf32>
    %102 = vector.extract_strided_slice %98 {offsets = [0, 0], sizes = [4, 686], strides = [1, 1]} : vector<4x724xf32> to vector<4x686xf32>
    %103 = vector.extract_strided_slice %99 {offsets = [0, 0, 0], sizes = [1, 4, 4], strides = [1, 1, 1]} : vector<9x4x4xf32> to vector<1x4x4xf32>
    %104 = vector.shape_cast %103 : vector<1x4x4xf32> to vector<4x4xf32>
    %cst_20 = arith.constant dense<0.000000e+00> : vector<4x686xf32>
    %105 = tpu.matmul %104, %102, %cst_20 {dimension_numbers = #tpu.dot_dimension_numbers<[1], [0], [0], [1], [0, 0, 1, 1], [], []>} : vector<4x4xf32>, vector<4x686xf32>, vector<4x686xf32> -> vector<4x686xf32>
    %106 = arith.addf %101, %105 : vector<4x686xf32>
    %107 = vector.extract_strided_slice %98 {offsets = [0, 1], sizes = [4, 686], strides = [1, 1]} : vector<4x724xf32> to vector<4x686xf32>
    %108 = vector.extract_strided_slice %99 {offsets = [1, 0, 0], sizes = [1, 4, 4], strides = [1, 1, 1]} : vector<9x4x4xf32> to vector<1x4x4xf32>
    %109 = vector.shape_cast %108 : vector<1x4x4xf32> to vector<4x4xf32>
    %cst_21 = arith.constant dense<0.000000e+00> : vector<4x686xf32>
    %110 = tpu.matmul %109, %107, %cst_21 {dimension_numbers = #tpu.dot_dimension_numbers<[1], [0], [0], [1], [0, 0, 1, 1], [], []>} : vector<4x4xf32>, vector<4x686xf32>, vector<4x686xf32> -> vector<4x686xf32>
    %111 = arith.addf %106, %110 : vector<4x686xf32>
    %112 = vector.extract_strided_slice %98 {offsets = [0, 2], sizes = [4, 686], strides = [1, 1]} : vector<4x724xf32> to vector<4x686xf32>
    %113 = vector.extract_strided_slice %99 {offsets = [2, 0, 0], sizes = [1, 4, 4], strides = [1, 1, 1]} : vector<9x4x4xf32> to vector<1x4x4xf32>
    %114 = vector.shape_cast %113 : vector<1x4x4xf32> to vector<4x4xf32>
    %cst_22 = arith.constant dense<0.000000e+00> : vector<4x686xf32>
    %115 = tpu.matmul %114, %112, %cst_22 {dimension_numbers = #tpu.dot_dimension_numbers<[1], [0], [0], [1], [0, 0, 1, 1], [], []>} : vector<4x4xf32>, vector<4x686xf32>, vector<4x686xf32> -> vector<4x686xf32>
    %116 = arith.addf %111, %115 : vector<4x686xf32>
    %117 = vector.extract_strided_slice %98 {offsets = [0, 18], sizes = [4, 686], strides = [1, 1]} : vector<4x724xf32> to vector<4x686xf32>
    %118 = vector.extract_strided_slice %99 {offsets = [3, 0, 0], sizes = [1, 4, 4], strides = [1, 1, 1]} : vector<9x4x4xf32> to vector<1x4x4xf32>
    %119 = vector.shape_cast %118 : vector<1x4x4xf32> to vector<4x4xf32>
    %cst_23 = arith.constant dense<0.000000e+00> : vector<4x686xf32>
    %120 = tpu.matmul %119, %117, %cst_23 {dimension_numbers = #tpu.dot_dimension_numbers<[1], [0], [0], [1], [0, 0, 1, 1], [], []>} : vector<4x4xf32>, vector<4x686xf32>, vector<4x686xf32> -> vector<4x686xf32>
    %121 = arith.addf %116, %120 : vector<4x686xf32>
    %122 = vector.extract_strided_slice %98 {offsets = [0, 19], sizes = [4, 686], strides = [1, 1]} : vector<4x724xf32> to vector<4x686xf32>
    %123 = vector.extract_strided_slice %99 {offsets = [4, 0, 0], sizes = [1, 4, 4], strides = [1, 1, 1]} : vector<9x4x4xf32> to vector<1x4x4xf32>
    %124 = vector.shape_cast %123 : vector<1x4x4xf32> to vector<4x4xf32>
    %cst_24 = arith.constant dense<0.000000e+00> : vector<4x686xf32>
    %125 = tpu.matmul %124, %122, %cst_24 {dimension_numbers = #tpu.dot_dimension_numbers<[1], [0], [0], [1], [0, 0, 1, 1], [], []>} : vector<4x4xf32>, vector<4x686xf32>, vector<4x686xf32> -> vector<4x686xf32>
    %126 = arith.addf %121, %125 : vector<4x686xf32>
    %127 = vector.extract_strided_slice %98 {offsets = [0, 20], sizes = [4, 686], strides = [1, 1]} : vector<4x724xf32> to vector<4x686xf32>
    %128 = vector.extract_strided_slice %99 {offsets = [5, 0, 0], sizes = [1, 4, 4], strides = [1, 1, 1]} : vector<9x4x4xf32> to vector<1x4x4xf32>
    %129 = vector.shape_cast %128 : vector<1x4x4xf32> to vector<4x4xf32>
    %cst_25 = arith.constant dense<0.000000e+00> : vector<4x686xf32>
    %130 = tpu.matmul %129, %127, %cst_25 {dimension_numbers = #tpu.dot_dimension_numbers<[1], [0], [0], [1], [0, 0, 1, 1], [], []>} : vector<4x4xf32>, vector<4x686xf32>, vector<4x686xf32> -> vector<4x686xf32>
    %131 = arith.addf %126, %130 : vector<4x686xf32>
    %132 = vector.extract_strided_slice %98 {offsets = [0, 36], sizes = [4, 686], strides = [1, 1]} : vector<4x724xf32> to vector<4x686xf32>
    %133 = vector.extract_strided_slice %99 {offsets = [6, 0, 0], sizes = [1, 4, 4], strides = [1, 1, 1]} : vector<9x4x4xf32> to vector<1x4x4xf32>
    %134 = vector.shape_cast %133 : vector<1x4x4xf32> to vector<4x4xf32>
    %cst_26 = arith.constant dense<0.000000e+00> : vector<4x686xf32>
    %135 = tpu.matmul %134, %132, %cst_26 {dimension_numbers = #tpu.dot_dimension_numbers<[1], [0], [0], [1], [0, 0, 1, 1], [], []>} : vector<4x4xf32>, vector<4x686xf32>, vector<4x686xf32> -> vector<4x686xf32>
    %136 = arith.addf %131, %135 : vector<4x686xf32>
    %137 = vector.extract_strided_slice %98 {offsets = [0, 37], sizes = [4, 686], strides = [1, 1]} : vector<4x724xf32> to vector<4x686xf32>
    %138 = vector.extract_strided_slice %99 {offsets = [7, 0, 0], sizes = [1, 4, 4], strides = [1, 1, 1]} : vector<9x4x4xf32> to vector<1x4x4xf32>
    %139 = vector.shape_cast %138 : vector<1x4x4xf32> to vector<4x4xf32>
    %cst_27 = arith.constant dense<0.000000e+00> : vector<4x686xf32>
    %140 = tpu.matmul %139, %137, %cst_27 {dimension_numbers = #tpu.dot_dimension_numbers<[1], [0], [0], [1], [0, 0, 1, 1], [], []>} : vector<4x4xf32>, vector<4x686xf32>, vector<4x686xf32> -> vector<4x686xf32>
    %141 = arith.addf %136, %140 : vector<4x686xf32>
    %142 = vector.extract_strided_slice %98 {offsets = [0, 38], sizes = [4, 686], strides = [1, 1]} : vector<4x724xf32> to vector<4x686xf32>
    %143 = vector.extract_strided_slice %99 {offsets = [8, 0, 0], sizes = [1, 4, 4], strides = [1, 1, 1]} : vector<9x4x4xf32> to vector<1x4x4xf32>
    %144 = vector.shape_cast %143 : vector<1x4x4xf32> to vector<4x4xf32>
    %cst_28 = arith.constant dense<0.000000e+00> : vector<4x686xf32>
    %145 = tpu.matmul %144, %142, %cst_28 {dimension_numbers = #tpu.dot_dimension_numbers<[1], [0], [0], [1], [0, 0, 1, 1], [], []>} : vector<4x4xf32>, vector<4x686xf32>, vector<4x686xf32> -> vector<4x686xf32>
    %146 = arith.addf %141, %145 : vector<4x686xf32>
    %147 = vector.extract_strided_slice %1 {offsets = [0, 38], sizes = [1, 686], strides = [1, 1]} : vector<1x762xf32> to vector<1x686xf32>
    %148 = vector.broadcast %147 : vector<1x686xf32> to vector<4x686xf32>
    %149 = arith.mulf %146, %148 : vector<4x686xf32>
    %cst_29 = arith.constant dense<0.000000e+00> : vector<4xf32>
    %150 = vector.multi_reduction <add>, %149, %cst_29 [1] : vector<4x686xf32> to vector<4xf32>
    %151 = vector.shape_cast %150 : vector<4xf32> to vector<4x1xf32>
    %152 = arith.mulf %149, %149 : vector<4x686xf32>
    %cst_30 = arith.constant dense<0.000000e+00> : vector<4xf32>
    %153 = vector.multi_reduction <add>, %152, %cst_30 [1] : vector<4x686xf32> to vector<4xf32>
    %154 = vector.shape_cast %153 : vector<4xf32> to vector<4x1xf32>
    %cst_31 = arith.constant 0.001953125 : f32
    %155 = vector.broadcast %cst_31 : f32 to vector<4x1xf32>
    %156 = arith.mulf %151, %155 : vector<4x1xf32>
    %cst_32 = arith.constant 0.001953125 : f32
    %157 = vector.broadcast %cst_32 : f32 to vector<4x1xf32>
    %158 = arith.mulf %154, %157 : vector<4x1xf32>
    %159 = arith.mulf %156, %156 : vector<4x1xf32>
    %160 = arith.subf %158, %159 : vector<4x1xf32>
    %161 = vector.broadcast %156 : vector<4x1xf32> to vector<4x686xf32>
    %162 = arith.subf %146, %161 : vector<4x686xf32>
    %cst_33 = arith.constant 9.99999974E-6 : f32
    %163 = vector.broadcast %cst_33 : f32 to vector<4x1xf32>
    %164 = arith.addf %160, %163 : vector<4x1xf32>
    %165 = math.rsqrt %164 : vector<4x1xf32>
    %166 = vector.broadcast %165 : vector<4x1xf32> to vector<4x686xf32>
    %167 = arith.mulf %162, %166 : vector<4x686xf32>
    %168 = vector.extract_strided_slice %100 {offsets = [0, 0], sizes = [4, 1], strides = [1, 1]} : vector<4x2xf32> to vector<4x1xf32>
    %169 = vector.broadcast %168 : vector<4x1xf32> to vector<4x686xf32>
    %170 = arith.mulf %167, %169 : vector<4x686xf32>
    %171 = vector.extract_strided_slice %100 {offsets = [0, 1], sizes = [4, 1], strides = [1, 1]} : vector<4x2xf32> to vector<4x1xf32>
    %172 = vector.broadcast %171 : vector<4x1xf32> to vector<4x686xf32>
    %173 = arith.addf %170, %172 : vector<4x686xf32>
    %cst_34 = arith.constant 0.000000e+00 : f32
    %174 = vector.broadcast %cst_34 : f32 to vector<4x686xf32>
    %175 = arith.maximumf %173, %174 : vector<4x686xf32>
    %176 = vector.broadcast %147 : vector<1x686xf32> to vector<4x686xf32>
    %177 = arith.mulf %175, %176 : vector<4x686xf32>
    %c0_35 = arith.constant 0 : index
    %c0_36 = arith.constant 0 : index
    %c0_37 = arith.constant 0 : index
    %178 = vector.load %arg6[%c0_35, %c0_36, %c0_37] : memref<9x1x4xf32, #tpu.memory_space<vmem>>, vector<9x1x4xf32>
    %cst_38 = arith.constant 0.000000e+00 : f32
    %179 = vector.broadcast %cst_38 : f32 to vector<1x648xf32>
    %180 = vector.extract_strided_slice %177 {offsets = [0, 0], sizes = [4, 648], strides = [1, 1]} : vector<4x686xf32> to vector<4x648xf32>
    %181 = vector.extract_strided_slice %178 {offsets = [0, 0, 0], sizes = [1, 1, 4], strides = [1, 1, 1]} : vector<9x1x4xf32> to vector<1x1x4xf32>
    %182 = vector.shape_cast %181 : vector<1x1x4xf32> to vector<1x4xf32>
    %183 = vector.extract_strided_slice %182 {offsets = [0, 0], sizes = [1, 1], strides = [1, 1]} : vector<1x4xf32> to vector<1x1xf32>
    %184 = vector.extract_strided_slice %180 {offsets = [0, 0], sizes = [1, 648], strides = [1, 1]} : vector<4x648xf32> to vector<1x648xf32>
    %185 = vector.broadcast %183 : vector<1x1xf32> to vector<1x648xf32>
    %186 = arith.mulf %185, %184 : vector<1x648xf32>
    %187 = vector.extract_strided_slice %182 {offsets = [0, 1], sizes = [1, 1], strides = [1, 1]} : vector<1x4xf32> to vector<1x1xf32>
    %188 = vector.extract_strided_slice %180 {offsets = [1, 0], sizes = [1, 648], strides = [1, 1]} : vector<4x648xf32> to vector<1x648xf32>
    %189 = vector.broadcast %187 : vector<1x1xf32> to vector<1x648xf32>
    %190 = arith.mulf %189, %188 : vector<1x648xf32>
    %191 = arith.addf %186, %190 : vector<1x648xf32>
    %192 = vector.extract_strided_slice %182 {offsets = [0, 2], sizes = [1, 1], strides = [1, 1]} : vector<1x4xf32> to vector<1x1xf32>
    %193 = vector.extract_strided_slice %180 {offsets = [2, 0], sizes = [1, 648], strides = [1, 1]} : vector<4x648xf32> to vector<1x648xf32>
    %194 = vector.broadcast %192 : vector<1x1xf32> to vector<1x648xf32>
    %195 = arith.mulf %194, %193 : vector<1x648xf32>
    %196 = arith.addf %191, %195 : vector<1x648xf32>
    %197 = vector.extract_strided_slice %182 {offsets = [0, 3], sizes = [1, 1], strides = [1, 1]} : vector<1x4xf32> to vector<1x1xf32>
    %198 = vector.extract_strided_slice %180 {offsets = [3, 0], sizes = [1, 648], strides = [1, 1]} : vector<4x648xf32> to vector<1x648xf32>
    %199 = vector.broadcast %197 : vector<1x1xf32> to vector<1x648xf32>
    %200 = arith.mulf %199, %198 : vector<1x648xf32>
    %201 = arith.addf %196, %200 : vector<1x648xf32>
    %202 = arith.addf %179, %201 : vector<1x648xf32>
    %203 = vector.extract_strided_slice %177 {offsets = [0, 1], sizes = [4, 648], strides = [1, 1]} : vector<4x686xf32> to vector<4x648xf32>
    %204 = vector.extract_strided_slice %178 {offsets = [1, 0, 0], sizes = [1, 1, 4], strides = [1, 1, 1]} : vector<9x1x4xf32> to vector<1x1x4xf32>
    %205 = vector.shape_cast %204 : vector<1x1x4xf32> to vector<1x4xf32>
    %206 = vector.extract_strided_slice %205 {offsets = [0, 0], sizes = [1, 1], strides = [1, 1]} : vector<1x4xf32> to vector<1x1xf32>
    %207 = vector.extract_strided_slice %203 {offsets = [0, 0], sizes = [1, 648], strides = [1, 1]} : vector<4x648xf32> to vector<1x648xf32>
    %208 = vector.broadcast %206 : vector<1x1xf32> to vector<1x648xf32>
    %209 = arith.mulf %208, %207 : vector<1x648xf32>
    %210 = vector.extract_strided_slice %205 {offsets = [0, 1], sizes = [1, 1], strides = [1, 1]} : vector<1x4xf32> to vector<1x1xf32>
    %211 = vector.extract_strided_slice %203 {offsets = [1, 0], sizes = [1, 648], strides = [1, 1]} : vector<4x648xf32> to vector<1x648xf32>
    %212 = vector.broadcast %210 : vector<1x1xf32> to vector<1x648xf32>
    %213 = arith.mulf %212, %211 : vector<1x648xf32>
    %214 = arith.addf %209, %213 : vector<1x648xf32>
    %215 = vector.extract_strided_slice %205 {offsets = [0, 2], sizes = [1, 1], strides = [1, 1]} : vector<1x4xf32> to vector<1x1xf32>
    %216 = vector.extract_strided_slice %203 {offsets = [2, 0], sizes = [1, 648], strides = [1, 1]} : vector<4x648xf32> to vector<1x648xf32>
    %217 = vector.broadcast %215 : vector<1x1xf32> to vector<1x648xf32>
    %218 = arith.mulf %217, %216 : vector<1x648xf32>
    %219 = arith.addf %214, %218 : vector<1x648xf32>
    %220 = vector.extract_strided_slice %205 {offsets = [0, 3], sizes = [1, 1], strides = [1, 1]} : vector<1x4xf32> to vector<1x1xf32>
    %221 = vector.extract_strided_slice %203 {offsets = [3, 0], sizes = [1, 648], strides = [1, 1]} : vector<4x648xf32> to vector<1x648xf32>
    %222 = vector.broadcast %220 : vector<1x1xf32> to vector<1x648xf32>
    %223 = arith.mulf %222, %221 : vector<1x648xf32>
    %224 = arith.addf %219, %223 : vector<1x648xf32>
    %225 = arith.addf %202, %224 : vector<1x648xf32>
    %226 = vector.extract_strided_slice %177 {offsets = [0, 2], sizes = [4, 648], strides = [1, 1]} : vector<4x686xf32> to vector<4x648xf32>
    %227 = vector.extract_strided_slice %178 {offsets = [2, 0, 0], sizes = [1, 1, 4], strides = [1, 1, 1]} : vector<9x1x4xf32> to vector<1x1x4xf32>
    %228 = vector.shape_cast %227 : vector<1x1x4xf32> to vector<1x4xf32>
    %229 = vector.extract_strided_slice %228 {offsets = [0, 0], sizes = [1, 1], strides = [1, 1]} : vector<1x4xf32> to vector<1x1xf32>
    %230 = vector.extract_strided_slice %226 {offsets = [0, 0], sizes = [1, 648], strides = [1, 1]} : vector<4x648xf32> to vector<1x648xf32>
    %231 = vector.broadcast %229 : vector<1x1xf32> to vector<1x648xf32>
    %232 = arith.mulf %231, %230 : vector<1x648xf32>
    %233 = vector.extract_strided_slice %228 {offsets = [0, 1], sizes = [1, 1], strides = [1, 1]} : vector<1x4xf32> to vector<1x1xf32>
    %234 = vector.extract_strided_slice %226 {offsets = [1, 0], sizes = [1, 648], strides = [1, 1]} : vector<4x648xf32> to vector<1x648xf32>
    %235 = vector.broadcast %233 : vector<1x1xf32> to vector<1x648xf32>
    %236 = arith.mulf %235, %234 : vector<1x648xf32>
    %237 = arith.addf %232, %236 : vector<1x648xf32>
    %238 = vector.extract_strided_slice %228 {offsets = [0, 2], sizes = [1, 1], strides = [1, 1]} : vector<1x4xf32> to vector<1x1xf32>
    %239 = vector.extract_strided_slice %226 {offsets = [2, 0], sizes = [1, 648], strides = [1, 1]} : vector<4x648xf32> to vector<1x648xf32>
    %240 = vector.broadcast %238 : vector<1x1xf32> to vector<1x648xf32>
    %241 = arith.mulf %240, %239 : vector<1x648xf32>
    %242 = arith.addf %237, %241 : vector<1x648xf32>
    %243 = vector.extract_strided_slice %228 {offsets = [0, 3], sizes = [1, 1], strides = [1, 1]} : vector<1x4xf32> to vector<1x1xf32>
    %244 = vector.extract_strided_slice %226 {offsets = [3, 0], sizes = [1, 648], strides = [1, 1]} : vector<4x648xf32> to vector<1x648xf32>
    %245 = vector.broadcast %243 : vector<1x1xf32> to vector<1x648xf32>
    %246 = arith.mulf %245, %244 : vector<1x648xf32>
    %247 = arith.addf %242, %246 : vector<1x648xf32>
    %248 = arith.addf %225, %247 : vector<1x648xf32>
    %249 = vector.extract_strided_slice %177 {offsets = [0, 18], sizes = [4, 648], strides = [1, 1]} : vector<4x686xf32> to vector<4x648xf32>
    %250 = vector.extract_strided_slice %178 {offsets = [3, 0, 0], sizes = [1, 1, 4], strides = [1, 1, 1]} : vector<9x1x4xf32> to vector<1x1x4xf32>
    %251 = vector.shape_cast %250 : vector<1x1x4xf32> to vector<1x4xf32>
    %252 = vector.extract_strided_slice %251 {offsets = [0, 0], sizes = [1, 1], strides = [1, 1]} : vector<1x4xf32> to vector<1x1xf32>
    %253 = vector.extract_strided_slice %249 {offsets = [0, 0], sizes = [1, 648], strides = [1, 1]} : vector<4x648xf32> to vector<1x648xf32>
    %254 = vector.broadcast %252 : vector<1x1xf32> to vector<1x648xf32>
    %255 = arith.mulf %254, %253 : vector<1x648xf32>
    %256 = vector.extract_strided_slice %251 {offsets = [0, 1], sizes = [1, 1], strides = [1, 1]} : vector<1x4xf32> to vector<1x1xf32>
    %257 = vector.extract_strided_slice %249 {offsets = [1, 0], sizes = [1, 648], strides = [1, 1]} : vector<4x648xf32> to vector<1x648xf32>
    %258 = vector.broadcast %256 : vector<1x1xf32> to vector<1x648xf32>
    %259 = arith.mulf %258, %257 : vector<1x648xf32>
    %260 = arith.addf %255, %259 : vector<1x648xf32>
    %261 = vector.extract_strided_slice %251 {offsets = [0, 2], sizes = [1, 1], strides = [1, 1]} : vector<1x4xf32> to vector<1x1xf32>
    %262 = vector.extract_strided_slice %249 {offsets = [2, 0], sizes = [1, 648], strides = [1, 1]} : vector<4x648xf32> to vector<1x648xf32>
    %263 = vector.broadcast %261 : vector<1x1xf32> to vector<1x648xf32>
    %264 = arith.mulf %263, %262 : vector<1x648xf32>
    %265 = arith.addf %260, %264 : vector<1x648xf32>
    %266 = vector.extract_strided_slice %251 {offsets = [0, 3], sizes = [1, 1], strides = [1, 1]} : vector<1x4xf32> to vector<1x1xf32>
    %267 = vector.extract_strided_slice %249 {offsets = [3, 0], sizes = [1, 648], strides = [1, 1]} : vector<4x648xf32> to vector<1x648xf32>
    %268 = vector.broadcast %266 : vector<1x1xf32> to vector<1x648xf32>
    %269 = arith.mulf %268, %267 : vector<1x648xf32>
    %270 = arith.addf %265, %269 : vector<1x648xf32>
    %271 = arith.addf %248, %270 : vector<1x648xf32>
    %272 = vector.extract_strided_slice %177 {offsets = [0, 19], sizes = [4, 648], strides = [1, 1]} : vector<4x686xf32> to vector<4x648xf32>
    %273 = vector.extract_strided_slice %178 {offsets = [4, 0, 0], sizes = [1, 1, 4], strides = [1, 1, 1]} : vector<9x1x4xf32> to vector<1x1x4xf32>
    %274 = vector.shape_cast %273 : vector<1x1x4xf32> to vector<1x4xf32>
    %275 = vector.extract_strided_slice %274 {offsets = [0, 0], sizes = [1, 1], strides = [1, 1]} : vector<1x4xf32> to vector<1x1xf32>
    %276 = vector.extract_strided_slice %272 {offsets = [0, 0], sizes = [1, 648], strides = [1, 1]} : vector<4x648xf32> to vector<1x648xf32>
    %277 = vector.broadcast %275 : vector<1x1xf32> to vector<1x648xf32>
    %278 = arith.mulf %277, %276 : vector<1x648xf32>
    %279 = vector.extract_strided_slice %274 {offsets = [0, 1], sizes = [1, 1], strides = [1, 1]} : vector<1x4xf32> to vector<1x1xf32>
    %280 = vector.extract_strided_slice %272 {offsets = [1, 0], sizes = [1, 648], strides = [1, 1]} : vector<4x648xf32> to vector<1x648xf32>
    %281 = vector.broadcast %279 : vector<1x1xf32> to vector<1x648xf32>
    %282 = arith.mulf %281, %280 : vector<1x648xf32>
    %283 = arith.addf %278, %282 : vector<1x648xf32>
    %284 = vector.extract_strided_slice %274 {offsets = [0, 2], sizes = [1, 1], strides = [1, 1]} : vector<1x4xf32> to vector<1x1xf32>
    %285 = vector.extract_strided_slice %272 {offsets = [2, 0], sizes = [1, 648], strides = [1, 1]} : vector<4x648xf32> to vector<1x648xf32>
    %286 = vector.broadcast %284 : vector<1x1xf32> to vector<1x648xf32>
    %287 = arith.mulf %286, %285 : vector<1x648xf32>
    %288 = arith.addf %283, %287 : vector<1x648xf32>
    %289 = vector.extract_strided_slice %274 {offsets = [0, 3], sizes = [1, 1], strides = [1, 1]} : vector<1x4xf32> to vector<1x1xf32>
    %290 = vector.extract_strided_slice %272 {offsets = [3, 0], sizes = [1, 648], strides = [1, 1]} : vector<4x648xf32> to vector<1x648xf32>
    %291 = vector.broadcast %289 : vector<1x1xf32> to vector<1x648xf32>
    %292 = arith.mulf %291, %290 : vector<1x648xf32>
    %293 = arith.addf %288, %292 : vector<1x648xf32>
    %294 = arith.addf %271, %293 : vector<1x648xf32>
    %295 = vector.extract_strided_slice %177 {offsets = [0, 20], sizes = [4, 648], strides = [1, 1]} : vector<4x686xf32> to vector<4x648xf32>
    %296 = vector.extract_strided_slice %178 {offsets = [5, 0, 0], sizes = [1, 1, 4], strides = [1, 1, 1]} : vector<9x1x4xf32> to vector<1x1x4xf32>
    %297 = vector.shape_cast %296 : vector<1x1x4xf32> to vector<1x4xf32>
    %298 = vector.extract_strided_slice %297 {offsets = [0, 0], sizes = [1, 1], strides = [1, 1]} : vector<1x4xf32> to vector<1x1xf32>
    %299 = vector.extract_strided_slice %295 {offsets = [0, 0], sizes = [1, 648], strides = [1, 1]} : vector<4x648xf32> to vector<1x648xf32>
    %300 = vector.broadcast %298 : vector<1x1xf32> to vector<1x648xf32>
    %301 = arith.mulf %300, %299 : vector<1x648xf32>
    %302 = vector.extract_strided_slice %297 {offsets = [0, 1], sizes = [1, 1], strides = [1, 1]} : vector<1x4xf32> to vector<1x1xf32>
    %303 = vector.extract_strided_slice %295 {offsets = [1, 0], sizes = [1, 648], strides = [1, 1]} : vector<4x648xf32> to vector<1x648xf32>
    %304 = vector.broadcast %302 : vector<1x1xf32> to vector<1x648xf32>
    %305 = arith.mulf %304, %303 : vector<1x648xf32>
    %306 = arith.addf %301, %305 : vector<1x648xf32>
    %307 = vector.extract_strided_slice %297 {offsets = [0, 2], sizes = [1, 1], strides = [1, 1]} : vector<1x4xf32> to vector<1x1xf32>
    %308 = vector.extract_strided_slice %295 {offsets = [2, 0], sizes = [1, 648], strides = [1, 1]} : vector<4x648xf32> to vector<1x648xf32>
    %309 = vector.broadcast %307 : vector<1x1xf32> to vector<1x648xf32>
    %310 = arith.mulf %309, %308 : vector<1x648xf32>
    %311 = arith.addf %306, %310 : vector<1x648xf32>
    %312 = vector.extract_strided_slice %297 {offsets = [0, 3], sizes = [1, 1], strides = [1, 1]} : vector<1x4xf32> to vector<1x1xf32>
    %313 = vector.extract_strided_slice %295 {offsets = [3, 0], sizes = [1, 648], strides = [1, 1]} : vector<4x648xf32> to vector<1x648xf32>
    %314 = vector.broadcast %312 : vector<1x1xf32> to vector<1x648xf32>
    %315 = arith.mulf %314, %313 : vector<1x648xf32>
    %316 = arith.addf %311, %315 : vector<1x648xf32>
    %317 = arith.addf %294, %316 : vector<1x648xf32>
    %318 = vector.extract_strided_slice %177 {offsets = [0, 36], sizes = [4, 648], strides = [1, 1]} : vector<4x686xf32> to vector<4x648xf32>
    %319 = vector.extract_strided_slice %178 {offsets = [6, 0, 0], sizes = [1, 1, 4], strides = [1, 1, 1]} : vector<9x1x4xf32> to vector<1x1x4xf32>
    %320 = vector.shape_cast %319 : vector<1x1x4xf32> to vector<1x4xf32>
    %321 = vector.extract_strided_slice %320 {offsets = [0, 0], sizes = [1, 1], strides = [1, 1]} : vector<1x4xf32> to vector<1x1xf32>
    %322 = vector.extract_strided_slice %318 {offsets = [0, 0], sizes = [1, 648], strides = [1, 1]} : vector<4x648xf32> to vector<1x648xf32>
    %323 = vector.broadcast %321 : vector<1x1xf32> to vector<1x648xf32>
    %324 = arith.mulf %323, %322 : vector<1x648xf32>
    %325 = vector.extract_strided_slice %320 {offsets = [0, 1], sizes = [1, 1], strides = [1, 1]} : vector<1x4xf32> to vector<1x1xf32>
    %326 = vector.extract_strided_slice %318 {offsets = [1, 0], sizes = [1, 648], strides = [1, 1]} : vector<4x648xf32> to vector<1x648xf32>
    %327 = vector.broadcast %325 : vector<1x1xf32> to vector<1x648xf32>
    %328 = arith.mulf %327, %326 : vector<1x648xf32>
    %329 = arith.addf %324, %328 : vector<1x648xf32>
    %330 = vector.extract_strided_slice %320 {offsets = [0, 2], sizes = [1, 1], strides = [1, 1]} : vector<1x4xf32> to vector<1x1xf32>
    %331 = vector.extract_strided_slice %318 {offsets = [2, 0], sizes = [1, 648], strides = [1, 1]} : vector<4x648xf32> to vector<1x648xf32>
    %332 = vector.broadcast %330 : vector<1x1xf32> to vector<1x648xf32>
    %333 = arith.mulf %332, %331 : vector<1x648xf32>
    %334 = arith.addf %329, %333 : vector<1x648xf32>
    %335 = vector.extract_strided_slice %320 {offsets = [0, 3], sizes = [1, 1], strides = [1, 1]} : vector<1x4xf32> to vector<1x1xf32>
    %336 = vector.extract_strided_slice %318 {offsets = [3, 0], sizes = [1, 648], strides = [1, 1]} : vector<4x648xf32> to vector<1x648xf32>
    %337 = vector.broadcast %335 : vector<1x1xf32> to vector<1x648xf32>
    %338 = arith.mulf %337, %336 : vector<1x648xf32>
    %339 = arith.addf %334, %338 : vector<1x648xf32>
    %340 = arith.addf %317, %339 : vector<1x648xf32>
    %341 = vector.extract_strided_slice %177 {offsets = [0, 37], sizes = [4, 648], strides = [1, 1]} : vector<4x686xf32> to vector<4x648xf32>
    %342 = vector.extract_strided_slice %178 {offsets = [7, 0, 0], sizes = [1, 1, 4], strides = [1, 1, 1]} : vector<9x1x4xf32> to vector<1x1x4xf32>
    %343 = vector.shape_cast %342 : vector<1x1x4xf32> to vector<1x4xf32>
    %344 = vector.extract_strided_slice %343 {offsets = [0, 0], sizes = [1, 1], strides = [1, 1]} : vector<1x4xf32> to vector<1x1xf32>
    %345 = vector.extract_strided_slice %341 {offsets = [0, 0], sizes = [1, 648], strides = [1, 1]} : vector<4x648xf32> to vector<1x648xf32>
    %346 = vector.broadcast %344 : vector<1x1xf32> to vector<1x648xf32>
    %347 = arith.mulf %346, %345 : vector<1x648xf32>
    %348 = vector.extract_strided_slice %343 {offsets = [0, 1], sizes = [1, 1], strides = [1, 1]} : vector<1x4xf32> to vector<1x1xf32>
    %349 = vector.extract_strided_slice %341 {offsets = [1, 0], sizes = [1, 648], strides = [1, 1]} : vector<4x648xf32> to vector<1x648xf32>
    %350 = vector.broadcast %348 : vector<1x1xf32> to vector<1x648xf32>
    %351 = arith.mulf %350, %349 : vector<1x648xf32>
    %352 = arith.addf %347, %351 : vector<1x648xf32>
    %353 = vector.extract_strided_slice %343 {offsets = [0, 2], sizes = [1, 1], strides = [1, 1]} : vector<1x4xf32> to vector<1x1xf32>
    %354 = vector.extract_strided_slice %341 {offsets = [2, 0], sizes = [1, 648], strides = [1, 1]} : vector<4x648xf32> to vector<1x648xf32>
    %355 = vector.broadcast %353 : vector<1x1xf32> to vector<1x648xf32>
    %356 = arith.mulf %355, %354 : vector<1x648xf32>
    %357 = arith.addf %352, %356 : vector<1x648xf32>
    %358 = vector.extract_strided_slice %343 {offsets = [0, 3], sizes = [1, 1], strides = [1, 1]} : vector<1x4xf32> to vector<1x1xf32>
    %359 = vector.extract_strided_slice %341 {offsets = [3, 0], sizes = [1, 648], strides = [1, 1]} : vector<4x648xf32> to vector<1x648xf32>
    %360 = vector.broadcast %358 : vector<1x1xf32> to vector<1x648xf32>
    %361 = arith.mulf %360, %359 : vector<1x648xf32>
    %362 = arith.addf %357, %361 : vector<1x648xf32>
    %363 = arith.addf %340, %362 : vector<1x648xf32>
    %364 = vector.extract_strided_slice %177 {offsets = [0, 38], sizes = [4, 648], strides = [1, 1]} : vector<4x686xf32> to vector<4x648xf32>
    %365 = vector.extract_strided_slice %178 {offsets = [8, 0, 0], sizes = [1, 1, 4], strides = [1, 1, 1]} : vector<9x1x4xf32> to vector<1x1x4xf32>
    %366 = vector.shape_cast %365 : vector<1x1x4xf32> to vector<1x4xf32>
    %367 = vector.extract_strided_slice %366 {offsets = [0, 0], sizes = [1, 1], strides = [1, 1]} : vector<1x4xf32> to vector<1x1xf32>
    %368 = vector.extract_strided_slice %364 {offsets = [0, 0], sizes = [1, 648], strides = [1, 1]} : vector<4x648xf32> to vector<1x648xf32>
    %369 = vector.broadcast %367 : vector<1x1xf32> to vector<1x648xf32>
    %370 = arith.mulf %369, %368 : vector<1x648xf32>
    %371 = vector.extract_strided_slice %366 {offsets = [0, 1], sizes = [1, 1], strides = [1, 1]} : vector<1x4xf32> to vector<1x1xf32>
    %372 = vector.extract_strided_slice %364 {offsets = [1, 0], sizes = [1, 648], strides = [1, 1]} : vector<4x648xf32> to vector<1x648xf32>
    %373 = vector.broadcast %371 : vector<1x1xf32> to vector<1x648xf32>
    %374 = arith.mulf %373, %372 : vector<1x648xf32>
    %375 = arith.addf %370, %374 : vector<1x648xf32>
    %376 = vector.extract_strided_slice %366 {offsets = [0, 2], sizes = [1, 1], strides = [1, 1]} : vector<1x4xf32> to vector<1x1xf32>
    %377 = vector.extract_strided_slice %364 {offsets = [2, 0], sizes = [1, 648], strides = [1, 1]} : vector<4x648xf32> to vector<1x648xf32>
    %378 = vector.broadcast %376 : vector<1x1xf32> to vector<1x648xf32>
    %379 = arith.mulf %378, %377 : vector<1x648xf32>
    %380 = arith.addf %375, %379 : vector<1x648xf32>
    %381 = vector.extract_strided_slice %366 {offsets = [0, 3], sizes = [1, 1], strides = [1, 1]} : vector<1x4xf32> to vector<1x1xf32>
    %382 = vector.extract_strided_slice %364 {offsets = [3, 0], sizes = [1, 648], strides = [1, 1]} : vector<4x648xf32> to vector<1x648xf32>
    %383 = vector.broadcast %381 : vector<1x1xf32> to vector<1x648xf32>
    %384 = arith.mulf %383, %382 : vector<1x648xf32>
    %385 = arith.addf %380, %384 : vector<1x648xf32>
    %386 = arith.addf %363, %385 : vector<1x648xf32>
    %387 = vector.extract_strided_slice %386 {offsets = [0, 0], sizes = [1, 324], strides = [1, 1]} : vector<1x648xf32> to vector<1x324xf32>
    %388 = vector.extract_strided_slice %386 {offsets = [0, 324], sizes = [1, 324], strides = [1, 1]} : vector<1x648xf32> to vector<1x324xf32>
    %389 = tpu.concatenate %387, %388 in 0 : vector<1x324xf32>, vector<1x324xf32> -> vector<2x324xf32>
    %c0_39 = arith.constant 0 : index
    %c0_40 = arith.constant 0 : index
    %390 = vector.load %arg7[%c0_39, %c0_40] : memref<324x16xf32, #tpu.memory_space<vmem>>, vector<324x16xf32>
    %cst_41 = arith.constant dense<0.000000e+00> : vector<2x16xf32>
    %391 = tpu.matmul %389, %390, %cst_41 {dimension_numbers = #tpu.dot_dimension_numbers<[1], [0], [0], [1], [0, 0, 1, 1], [], []>} : vector<2x324xf32>, vector<324x16xf32>, vector<2x16xf32> -> vector<2x16xf32>
    %c0_42 = arith.constant 0 : index
    %c0_43 = arith.constant 0 : index
    %392 = vector.load %arg8[%c0_42, %c0_43] : memref<1x16xf32, #tpu.memory_space<vmem>>, vector<1x16xf32>
    %393 = vector.broadcast %392 : vector<1x16xf32> to vector<2x16xf32>
    %394 = arith.addf %391, %393 : vector<2x16xf32>
    %c0_44 = arith.constant 0 : index
    %c0_45 = arith.constant 0 : index
    %395 = vector.load %arg9[%c0_44, %c0_45] : memref<2x16xf32, #tpu.memory_space<vmem>>, vector<2x16xf32>
    tpu.vector_store %arg9[%c0_44, %c0_45], %394 {strides = array<i32>} : memref<2x16xf32, #tpu.memory_space<vmem>>, vector<2x16xf32>,
    return
  }
}

</mosaic_0001>

<llo_original>
// kernel: eig_conv_net_forward.1
$region0: #{eig_conv_net_forward.1}
  #allocation0 [shape = 'u32[]', space=smem, size = 0x4, offset = 0x4, fixed_abs, tag = 'smem constant byte address 0x4 - core index']
  #allocation1 [shape = 'u32[72,128]{1,0:T(1,128)}', space=vmem, size = 0x9000, scoped, tag = 'internal scratch']
  %s0 = inlined_call_operand.vmem [shape: f32[1,762], index: 0, kind: input, shape index: {}]
  %s1 = inlined_call_operand.vmem [shape: f32[1,762], index: 1, kind: input, shape index: {}]
  %s2 = inlined_call_operand.vmem [shape: f32[9,4,1], index: 2, kind: input, shape index: {}]
  %s3 = inlined_call_operand.vmem [shape: f32[4,2], index: 3, kind: input, shape index: {}]
  %s4 = inlined_call_operand.vmem [shape: f32[9,4,4], index: 4, kind: input, shape index: {}]
  %s5 = inlined_call_operand.vmem [shape: f32[4,2], index: 5, kind: input, shape index: {}]
  %s6 = inlined_call_operand.vmem [shape: f32[9,1,4], index: 6, kind: input, shape index: {}]
  %s7 = inlined_call_operand.vmem [shape: f32[324,16], index: 7, kind: input, shape index: {}]
  %s8 = inlined_call_operand.vmem [shape: f32[1,16], index: 8, kind: input, shape index: {}]
  %s9 = inlined_call_operand.hbm [shape: f32[2,16], index: 9, kind: output, shape index: {}]
  %s10 = sld [smem:[#allocation0]]
  $region46: #{eig_conv_net_forward.1} parent=0
    _
  %s12 = ssub.s32 1, %s10
  %s13 = scalar_select 0, %s12, %s10
  $region1: #{eig_conv_net_forward.1} parent=0
    #allocation2 [shape = 'u8[1024]{0}', space=vmem, size = 0x400, scoped, tag = 'output window, operand 0, single buffered']
    #allocation3 [shape = 's32[1]{0}', space=sflag, size = 0x4, scoped, tag = 'scoped memory for eig_conv_net_forward.1']
    %14 = vsyncpa [#allocation3], 0
    // Predicated region
    $region2: #{eig_conv_net_forward.1} parent=1 // pred_check
      _
    $region3: #{eig_conv_net_forward.1} parent=1 // pred_check_branch
      %16 = sbr.rel (0) target = $region5
    $region4: #{eig_conv_net_forward.1} parent=1 // pred_region
      _
    $region5: #{eig_conv_net_forward.1} parent=1 // pred_fallthru
      _
    // Predicated region
    $region6: #{eig_conv_net_forward.1} parent=1 // pred_check
      _
    $region7: #{eig_conv_net_forward.1} parent=1 // pred_check_branch
      %18 = sbr.rel (0) target = $region9
    $region8: #{eig_conv_net_forward.1} parent=1 // pred_region
      _
    $region9: #{eig_conv_net_forward.1} parent=1 // pred_fallthru
      _
    // Predicated region
    $region10: #{eig_conv_net_forward.1} parent=1 // pred_check
      _
    $region11: #{eig_conv_net_forward.1} parent=1 // pred_check_branch
      %20 = sbr.rel (0) target = $region13
    $region12: #{eig_conv_net_forward.1} parent=1 // pred_region
      _
    $region13: #{eig_conv_net_forward.1} parent=1 // pred_fallthru
      _
    // Predicated region
    $region14: #{eig_conv_net_forward.1} parent=1 // pred_check
      _
    $region15: #{eig_conv_net_forward.1} parent=1 // pred_check_branch
      %22 = sbr.rel (0) target = $region17
    $region16: #{eig_conv_net_forward.1} parent=1 // pred_region
      _
    $region17: #{eig_conv_net_forward.1} parent=1 // pred_fallthru
      _
    // Predicated region
    $region18: #{eig_conv_net_forward.1} parent=1 // pred_check
      _
    $region19: #{eig_conv_net_forward.1} parent=1 // pred_check_branch
      %24 = sbr.rel (0) target = $region21
    $region20: #{eig_conv_net_forward.1} parent=1 // pred_region
      _
    $region21: #{eig_conv_net_forward.1} parent=1 // pred_fallthru
      _
    // Predicated region
    $region22: #{eig_conv_net_forward.1} parent=1 // pred_check
      _
    $region23: #{eig_conv_net_forward.1} parent=1 // pred_check_branch
      %26 = sbr.rel (0) target = $region25
    $region24: #{eig_conv_net_forward.1} parent=1 // pred_region
      _
    $region25: #{eig_conv_net_forward.1} parent=1 // pred_fallthru
      _
    // Predicated region
    $region26: #{eig_conv_net_forward.1} parent=1 // pred_check
      _
    $region27: #{eig_conv_net_forward.1} parent=1 // pred_check_branch
      %28 = sbr.rel (0) target = $region29
    $region28: #{eig_conv_net_forward.1} parent=1 // pred_region
      _
    $region29: #{eig_conv_net_forward.1} parent=1 // pred_fallthru
      _
    // Predicated region
    $region30: #{eig_conv_net_forward.1} parent=1 // pred_check
      _
    $region31: #{eig_conv_net_forward.1} parent=1 // pred_check_branch
      %30 = sbr.rel (0) target = $region33
    $region32: #{eig_conv_net_forward.1} parent=1 // pred_region
      _
    $region33: #{eig_conv_net_forward.1} parent=1 // pred_fallthru
      _
    // Predicated region
    $region34: #{eig_conv_net_forward.1} parent=1 // pred_check
      _
    $region35: #{eig_conv_net_forward.1} parent=1 // pred_check_branch
      %32 = sbr.rel (0) target = $region37
    $region36: #{eig_conv_net_forward.1} parent=1 // pred_region
      _
    $region37: #{eig_conv_net_forward.1} parent=1 // pred_fallthru
      _
    %v33 = vld [vmem:[%s0] sm:$0x3f]
    %v34 = vld [vmem:[%s1] sm:$0x3f]
    %v35 = vld [vmem:[%s2] sm:$0xf]
    %v36 = vld [vmem:[%s2 + $0x4] sm:$0xf]
    %v37 = vld [vmem:[%s2 + $0x8] sm:$0xf]
    %v38 = vld [vmem:[%s2 + $0xc] sm:$0xf]
    %v39 = vld [vmem:[%s2 + $0x10] sm:$0xf]
    %v40 = vld [vmem:[%s2 + $0x14] sm:$0xf]
    %v41 = vld [vmem:[%s2 + $0x18] sm:$0xf]
    %v42 = vld [vmem:[%s2 + $0x1c] sm:$0xf]
    %v43 = vld [vmem:[%s2 + $0x20] sm:$0xf]
    %v44 = vld [vmem:[%s3] sm:$0xf]
    %46 = vset.pattern.permute.xlu0 0
    %47 = vperm.xlu0 %46, %v35
    %v48 = vpop.permute.xlu0 %47
    %v51 = vperm.slane %v33, 0
    %v52 = vperm.slane %v33, 1
    %v53 = vperm.slane %v33, 2
    %v54 = vperm.slane %v33, 3
    %v55 = vperm.slane %v33, 4
    %v56 = vperm.slane %v33, 5
    %v63 = vmul.f32 %v48, %v51
    %v64 = vmul.f32 %v48, %v52
    %v65 = vmul.f32 %v48, %v53
    %v66 = vmul.f32 %v48, %v54
    %v67 = vmul.f32 %v48, %v55
    %v68 = vmul.f32 %v48, %v56
    %v69 = vadd.f32 %v63, 0.0
    %v70 = vadd.f32 %v64, 0.0
    %v71 = vadd.f32 %v65, 0.0
    %v72 = vadd.f32 %v66, 0.0
    %v73 = vadd.f32 %v67, 0.0
    %v74 = vadd.f32 %v68, 0.0
    %76 = vset.pattern.permute.xlu0 0
    %77 = vperm.xlu0 %76, %v36
    %v78 = vpop.permute.xlu0 %77
    %v80 = vmul.f32 %v78, %v51
    %v81 = vmul.f32 %v78, %v52
    %v82 = vmul.f32 %v78, %v53
    %v83 = vmul.f32 %v78, %v54
    %v84 = vmul.f32 %v78, %v55
    %v85 = vmul.f32 %v78, %v56
    %92 = vrot.lane.b32.xlu0 %v80, 127
    %v93 = vpop.permute.xlu0 %92
    %94 = vrot.lane.b32.xlu0 %v81, 127
    %v95 = vpop.permute.xlu0 %94
    %96 = vrot.lane.b32.xlu0 %v82, 127
    %v97 = vpop.permute.xlu0 %96
    %98 = vrot.lane.b32.xlu0 %v83, 127
    %v99 = vpop.permute.xlu0 %98
    %100 = vrot.lane.b32.xlu0 %v84, 127
    %v101 = vpop.permute.xlu0 %100
    %102 = vrot.lane.b32.xlu0 %v85, 127
    %v103 = vpop.permute.xlu0 %102
    %vm104 = vcmask 1039360
    %v105 = vsel %vm104, %v93, %v95
    %v106 = vsel %vm104, %v95, %v97
    %v107 = vsel %vm104, %v97, %v99
    %v108 = vsel %vm104, %v99, %v101
    %v109 = vsel %vm104, %v101, %v103
    %v116 = vadd.f32 %v69, %v105
    %v117 = vadd.f32 %v70, %v106
    %v118 = vadd.f32 %v71, %v107
    %v119 = vadd.f32 %v72, %v108
    %v120 = vadd.f32 %v73, %v109
    %v121 = vadd.f32 %v74, %v103
    %123 = vset.pattern.permute.xlu0 0
    %124 = vperm.xlu0 %123, %v37
    %v125 = vpop.permute.xlu0 %124
    %v127 = vmul.f32 %v125, %v51
    %v128 = vmul.f32 %v125, %v52
    %v129 = vmul.f32 %v125, %v53
    %v130 = vmul.f32 %v125, %v54
    %v131 = vmul.f32 %v125, %v55
    %v132 = vmul.f32 %v125, %v56
    %139 = vrot.lane.b32.xlu0 %v127, 126
    %v140 = vpop.permute.xlu0 %139
    %141 = vrot.lane.b32.xlu0 %v128, 126
    %v142 = vpop.permute.xlu0 %141
    %143 = vrot.lane.b32.xlu0 %v129, 126
    %v144 = vpop.permute.xlu0 %143
    %145 = vrot.lane.b32.xlu0 %v130, 126
    %v146 = vpop.permute.xlu0 %145
    %147 = vrot.lane.b32.xlu0 %v131, 126
    %v148 = vpop.permute.xlu0 %147
    %149 = vrot.lane.b32.xlu0 %v132, 126
    %v150 = vpop.permute.xlu0 %149
    %vm151 = vcmask 1031168
    %v152 = vsel %vm151, %v140, %v142
    %v153 = vsel %vm151, %v142, %v144
    %v154 = vsel %vm151, %v144, %v146
    %v155 = vsel %vm151, %v146, %v148
    %v156 = vsel %vm151, %v148, %v150
    %v163 = vadd.f32 %v116, %v152
    %v164 = vadd.f32 %v117, %v153
    %v165 = vadd.f32 %v118, %v154
    %v166 = vadd.f32 %v119, %v155
    %v167 = vadd.f32 %v120, %v156
    %v168 = vadd.f32 %v121, %v150
    %170 = vset.pattern.permute.xlu0 0
    %171 = vperm.xlu0 %170, %v38
    %v172 = vpop.permute.xlu0 %171
    %v174 = vmul.f32 %v172, %v51
    %v175 = vmul.f32 %v172, %v52
    %v176 = vmul.f32 %v172, %v53
    %v177 = vmul.f32 %v172, %v54
    %v178 = vmul.f32 %v172, %v55
    %v179 = vmul.f32 %v172, %v56
    %186 = vrot.lane.b32.xlu0 %v174, 110
    %v187 = vpop.permute.xlu0 %186
    %188 = vrot.lane.b32.xlu0 %v175, 110
    %v189 = vpop.permute.xlu0 %188
    %190 = vrot.lane.b32.xlu0 %v176, 110
    %v191 = vpop.permute.xlu0 %190
    %192 = vrot.lane.b32.xlu0 %v177, 110
    %v193 = vpop.permute.xlu0 %192
    %194 = vrot.lane.b32.xlu0 %v178, 110
    %v195 = vpop.permute.xlu0 %194
    %196 = vrot.lane.b32.xlu0 %v179, 110
    %v197 = vpop.permute.xlu0 %196
    %vm198 = vcmask 900096
    %v199 = vsel %vm198, %v187, %v189
    %v200 = vsel %vm198, %v189, %v191
    %v201 = vsel %vm198, %v191, %v193
    %v202 = vsel %vm198, %v193, %v195
    %v203 = vsel %vm198, %v195, %v197
    %v210 = vadd.f32 %v163, %v199
    %v211 = vadd.f32 %v164, %v200
    %v212 = vadd.f32 %v165, %v201
    %v213 = vadd.f32 %v166, %v202
    %v214 = vadd.f32 %v167, %v203
    %v215 = vadd.f32 %v168, %v197
    %217 = vset.pattern.permute.xlu0 0
    %218 = vperm.xlu0 %217, %v39
    %v219 = vpop.permute.xlu0 %218
    %v221 = vmul.f32 %v219, %v51
    %v222 = vmul.f32 %v219, %v52
    %v223 = vmul.f32 %v219, %v53
    %v224 = vmul.f32 %v219, %v54
    %v225 = vmul.f32 %v219, %v55
    %v226 = vmul.f32 %v219, %v56
    %233 = vrot.lane.b32.xlu0 %v221, 109
    %v234 = vpop.permute.xlu0 %233
    %235 = vrot.lane.b32.xlu0 %v222, 109
    %v236 = vpop.permute.xlu0 %235
    %237 = vrot.lane.b32.xlu0 %v223, 109
    %v238 = vpop.permute.xlu0 %237
    %239 = vrot.lane.b32.xlu0 %v224, 109
    %v240 = vpop.permute.xlu0 %239
    %241 = vrot.lane.b32.xlu0 %v225, 109
    %v242 = vpop.permute.xlu0 %241
    %243 = vrot.lane.b32.xlu0 %v226, 109
    %v244 = vpop.permute.xlu0 %243
    %vm245 = vcmask 891904
    %v246 = vsel %vm245, %v234, %v236
    %v247 = vsel %vm245, %v236, %v238
    %v248 = vsel %vm245, %v238, %v240
    %v249 = vsel %vm245, %v240, %v242
    %v250 = vsel %vm245, %v242, %v244
    %v257 = vadd.f32 %v210, %v246
    %v258 = vadd.f32 %v211, %v247
    %v259 = vadd.f32 %v212, %v248
    %v260 = vadd.f32 %v213, %v249
    %v261 = vadd.f32 %v214, %v250
    %v262 = vadd.f32 %v215, %v244
    %264 = vset.pattern.permute.xlu0 0
    %265 = vperm.xlu0 %264, %v40
    %v266 = vpop.permute.xlu0 %265
    %v268 = vmul.f32 %v266, %v51
    %v269 = vmul.f32 %v266, %v52
    %v270 = vmul.f32 %v266, %v53
    %v271 = vmul.f32 %v266, %v54
    %v272 = vmul.f32 %v266, %v55
    %v273 = vmul.f32 %v266, %v56
    %280 = vrot.lane.b32.xlu0 %v268, 108
    %v281 = vpop.permute.xlu0 %280
    %282 = vrot.lane.b32.xlu0 %v269, 108
    %v283 = vpop.permute.xlu0 %282
    %284 = vrot.lane.b32.xlu0 %v270, 108
    %v285 = vpop.permute.xlu0 %284
    %286 = vrot.lane.b32.xlu0 %v271, 108
    %v287 = vpop.permute.xlu0 %286
    %288 = vrot.lane.b32.xlu0 %v272, 108
    %v289 = vpop.permute.xlu0 %288
    %290 = vrot.lane.b32.xlu0 %v273, 108
    %v291 = vpop.permute.xlu0 %290
    %vm292 = vcmask 883712
    %v293 = vsel %vm292, %v281, %v283
    %v294 = vsel %vm292, %v283, %v285
    %v295 = vsel %vm292, %v285, %v287
    %v296 = vsel %vm292, %v287, %v289
    %v297 = vsel %vm292, %v289, %v291
    %v304 = vadd.f32 %v257, %v293
    %v305 = vadd.f32 %v258, %v294
    %v306 = vadd.f32 %v259, %v295
    %v307 = vadd.f32 %v260, %v296
    %v308 = vadd.f32 %v261, %v297
    %v309 = vadd.f32 %v262, %v291
    %311 = vset.pattern.permute.xlu0 0
    %312 = vperm.xlu0 %311, %v41
    %v313 = vpop.permute.xlu0 %312
    %v315 = vmul.f32 %v313, %v51
    %v316 = vmul.f32 %v313, %v52
    %v317 = vmul.f32 %v313, %v53
    %v318 = vmul.f32 %v313, %v54
    %v319 = vmul.f32 %v313, %v55
    %v320 = vmul.f32 %v313, %v56
    %327 = vrot.lane.b32.xlu0 %v315, 92
    %v328 = vpop.permute.xlu0 %327
    %329 = vrot.lane.b32.xlu0 %v316, 92
    %v330 = vpop.permute.xlu0 %329
    %331 = vrot.lane.b32.xlu0 %v317, 92
    %v332 = vpop.permute.xlu0 %331
    %333 = vrot.lane.b32.xlu0 %v318, 92
    %v334 = vpop.permute.xlu0 %333
    %335 = vrot.lane.b32.xlu0 %v319, 92
    %v336 = vpop.permute.xlu0 %335
    %337 = vrot.lane.b32.xlu0 %v320, 92
    %v338 = vpop.permute.xlu0 %337
    %vm339 = vcmask 752640
    %v340 = vsel %vm339, %v328, %v330
    %v341 = vsel %vm339, %v330, %v332
    %v342 = vsel %vm339, %v332, %v334
    %v343 = vsel %vm339, %v334, %v336
    %v344 = vsel %vm339, %v336, %v338
    %v351 = vadd.f32 %v304, %v340
    %v352 = vadd.f32 %v305, %v341
    %v353 = vadd.f32 %v306, %v342
    %v354 = vadd.f32 %v307, %v343
    %v355 = vadd.f32 %v308, %v344
    %v356 = vadd.f32 %v309, %v338
    %358 = vset.pattern.permute.xlu0 0
    %359 = vperm.xlu0 %358, %v42
    %v360 = vpop.permute.xlu0 %359
    %v362 = vmul.f32 %v360, %v51
    %v363 = vmul.f32 %v360, %v52
    %v364 = vmul.f32 %v360, %v53
    %v365 = vmul.f32 %v360, %v54
    %v366 = vmul.f32 %v360, %v55
    %v367 = vmul.f32 %v360, %v56
    %374 = vrot.lane.b32.xlu0 %v362, 91
    %v375 = vpop.permute.xlu0 %374
    %376 = vrot.lane.b32.xlu0 %v363, 91
    %v377 = vpop.permute.xlu0 %376
    %378 = vrot.lane.b32.xlu0 %v364, 91
    %v379 = vpop.permute.xlu0 %378
    %380 = vrot.lane.b32.xlu0 %v365, 91
    %v381 = vpop.permute.xlu0 %380
    %382 = vrot.lane.b32.xlu0 %v366, 91
    %v383 = vpop.permute.xlu0 %382
    %384 = vrot.lane.b32.xlu0 %v367, 91
    %v385 = vpop.permute.xlu0 %384
    %vm386 = vcmask 744448
    %v387 = vsel %vm386, %v375, %v377
    %v388 = vsel %vm386, %v377, %v379
    %v389 = vsel %vm386, %v379, %v381
    %v390 = vsel %vm386, %v381, %v383
    %v391 = vsel %vm386, %v383, %v385
    %v398 = vadd.f32 %v351, %v387
    %v399 = vadd.f32 %v352, %v388
    %v400 = vadd.f32 %v353, %v389
    %v401 = vadd.f32 %v354, %v390
    %v402 = vadd.f32 %v355, %v391
    %v403 = vadd.f32 %v356, %v385
    %405 = vset.pattern.permute.xlu0 0
    %406 = vperm.xlu0 %405, %v43
    %v407 = vpop.permute.xlu0 %406
    %v409 = vmul.f32 %v407, %v51
    %v410 = vmul.f32 %v407, %v52
    %v411 = vmul.f32 %v407, %v53
    %v412 = vmul.f32 %v407, %v54
    %v413 = vmul.f32 %v407, %v55
    %v414 = vmul.f32 %v407, %v56
    %421 = vrot.lane.b32.xlu0 %v409, 90
    %v422 = vpop.permute.xlu0 %421
    %423 = vrot.lane.b32.xlu0 %v410, 90
    %v424 = vpop.permute.xlu0 %423
    %425 = vrot.lane.b32.xlu0 %v411, 90
    %v426 = vpop.permute.xlu0 %425
    %427 = vrot.lane.b32.xlu0 %v412, 90
    %v428 = vpop.permute.xlu0 %427
    %429 = vrot.lane.b32.xlu0 %v413, 90
    %v430 = vpop.permute.xlu0 %429
    %431 = vrot.lane.b32.xlu0 %v414, 90
    %v432 = vpop.permute.xlu0 %431
    %vm433 = vcmask 736256
    %v434 = vsel %vm433, %v422, %v424
    %v435 = vsel %vm433, %v424, %v426
    %v436 = vsel %vm433, %v426, %v428
    %v437 = vsel %vm433, %v428, %v430
    %v438 = vsel %vm433, %v430, %v432
    %v445 = vadd.f32 %v398, %v434
    %v446 = vadd.f32 %v399, %v435
    %v447 = vadd.f32 %v400, %v436
    %v448 = vadd.f32 %v401, %v437
    %v449 = vadd.f32 %v402, %v438
    %v450 = vadd.f32 %v403, %v432
    %v452 = vperm.slane %v34, 0
    %v453 = vperm.slane %v34, 1
    %v454 = vperm.slane %v34, 2
    %v455 = vperm.slane %v34, 3
    %v456 = vperm.slane %v34, 4
    %v457 = vperm.slane %v34, 5
    %458 = vrot.lane.b32.xlu0 %v452, 109
    %v459 = vpop.permute.xlu0 %458
    %460 = vrot.lane.b32.xlu0 %v453, 109
    %v461 = vpop.permute.xlu0 %460
    %462 = vrot.lane.b32.xlu0 %v454, 109
    %v463 = vpop.permute.xlu0 %462
    %464 = vrot.lane.b32.xlu0 %v455, 109
    %v465 = vpop.permute.xlu0 %464
    %466 = vrot.lane.b32.xlu0 %v456, 109
    %v467 = vpop.permute.xlu0 %466
    %468 = vrot.lane.b32.xlu0 %v457, 109
    %v469 = vpop.permute.xlu0 %468
    %v470 = vsel %vm245, %v459, %v461
    %v471 = vsel %vm245, %v461, %v463
    %v472 = vsel %vm245, %v463, %v465
    %v473 = vsel %vm245, %v465, %v467
    %v474 = vsel %vm245, %v467, %v469
    %v481 = vmul.f32 %v445, %v470
    %v482 = vmul.f32 %v446, %v471
    %v483 = vmul.f32 %v447, %v472
    %v484 = vmul.f32 %v448, %v473
    %v485 = vmul.f32 %v449, %v474
    %v486 = vmul.f32 %v450, %v469
    %vm487 = vcmask 1043456
    %v488 = vsel %vm487, %v481, 0.0
    %v489 = vsel %vm487, %v482, 0.0
    %v490 = vadd.f32 %v488, %v489
    %v491 = vsel %vm487, %v483, 0.0
    %v492 = vadd.f32 %v490, %v491
    %v493 = vsel %vm487, %v484, 0.0
    %v494 = vadd.f32 %v492, %v493
    %v495 = vsel %vm487, %v485, 0.0
    %v496 = vadd.f32 %v494, %v495
    %vm497 = vcmask 683008
    %v498 = vsel %vm497, %v486, 0.0
    %v499 = vadd.f32 %v496, %v498
    %500 = vadd.xlane.f32.xlu0 %v499
    %v501 = vpop.xlane.xlu0 %500
    %v502 = vmul.f32 %v481, %v481
    %v503 = vmul.f32 %v482, %v482
    %v504 = vmul.f32 %v483, %v483
    %v505 = vmul.f32 %v484, %v484
    %v506 = vmul.f32 %v485, %v485
    %v507 = vmul.f32 %v486, %v486
    %v508 = vsel %vm487, %v502, 0.0
    %v509 = vsel %vm487, %v503, 0.0
    %v510 = vadd.f32 %v508, %v509
    %v511 = vsel %vm487, %v504, 0.0
    %v512 = vadd.f32 %v510, %v511
    %v513 = vsel %vm487, %v505, 0.0
    %v514 = vadd.f32 %v512, %v513
    %v515 = vsel %vm487, %v506, 0.0
    %v516 = vadd.f32 %v514, %v515
    %v517 = vsel %vm497, %v507, 0.0
    %v518 = vadd.f32 %v516, %v517
    %519 = vadd.xlane.f32.xlu0 %v518
    %v520 = vpop.xlane.xlu0 %519
    %v521 = vmul.f32 %v501, 0.001953125
    %v522 = vmul.f32 %v520, 0.001953125
    %v523 = vmul.f32 %v521, %v521
    %v524 = vsub.f32 %v522, %v523
    %v525 = vsub.f32 %v445, %v521
    %v526 = vsub.f32 %v446, %v521
    %v527 = vsub.f32 %v447, %v521
    %v528 = vsub.f32 %v448, %v521
    %v529 = vsub.f32 %v449, %v521
    %v530 = vsub.f32 %v450, %v521
    %v531 = vadd.f32 %v524, 1e-05
    %v532 = vrsqrt.pop %v531
    %v533 = vmul.f32 %v532, %v531
    %v534 = vmul.f32 %v533, %v532
    %v535 = vmul.f32 0.5, %v534
    %v536 = vsub.f32 1.5, %v535
    %v537 = vmul.f32 %v532, %v536
    %vm538 = vweird.f32 %v531
    %vm539 = vweird.f32 %v532
    %vm540 = vmor %vm538, %vm539
    %v541 = vsel %vm540, %v532, %v537
    %v542 = vmul.f32 %v525, %v541
    %v543 = vmul.f32 %v526, %v541
    %v544 = vmul.f32 %v527, %v541
    %v545 = vmul.f32 %v528, %v541
    %v546 = vmul.f32 %v529, %v541
    %v547 = vmul.f32 %v530, %v541
    %549 = vset.pattern.permute.xlu0 0
    %550 = vperm.xlu0 %549, %v44
    %v551 = vpop.permute.xlu0 %550
    %v553 = vmul.f32 %v542, %v551
    %v554 = vmul.f32 %v543, %v551
    %v555 = vmul.f32 %v544, %v551
    %v556 = vmul.f32 %v545, %v551
    %v557 = vmul.f32 %v546, %v551
    %v558 = vmul.f32 %v547, %v551
    %559 = vset.pattern.permute.xlu0 1
    %560 = vperm.xlu0 %559, %v44
    %v561 = vpop.permute.xlu0 %560
    %v563 = vadd.f32 %v553, %v561
    %v564 = vadd.f32 %v554, %v561
    %v565 = vadd.f32 %v555, %v561
    %v566 = vadd.f32 %v556, %v561
    %v567 = vadd.f32 %v557, %v561
    %v568 = vadd.f32 %v558, %v561
    %v569 = vmax.f32 %v563, 0.0
    %v570 = vmax.f32 %v564, 0.0
    %v571 = vmax.f32 %v565, 0.0
    %v572 = vmax.f32 %v566, 0.0
    %v573 = vmax.f32 %v567, 0.0
    %v574 = vmax.f32 %v568, 0.0
    %v575 = vmul.f32 %v569, %v470
    %v576 = vmul.f32 %v570, %v471
    %v577 = vmul.f32 %v571, %v472
    %v578 = vmul.f32 %v572, %v473
    %v579 = vmul.f32 %v573, %v474
    %v580 = vmul.f32 %v574, %v469
    %v581 = vld [vmem:[%s4] sm:$0xf]
    %v582 = vld [vmem:[%s4 + $0x4] sm:$0xf]
    %v583 = vld [vmem:[%s4 + $0x8] sm:$0xf]
    %v584 = vld [vmem:[%s4 + $0xc] sm:$0xf]
    %v585 = vld [vmem:[%s4 + $0x10] sm:$0xf]
    %v586 = vld [vmem:[%s4 + $0x14] sm:$0xf]
    %v587 = vld [vmem:[%s4 + $0x18] sm:$0xf]
    %v588 = vld [vmem:[%s4 + $0x1c] sm:$0xf]
    %v589 = vld [vmem:[%s4 + $0x20] sm:$0xf]
    %v590 = vld [vmem:[%s5] sm:$0xf]
    %597 = vrot.lane.b32.xlu0 %v575, 127
    %v598 = vpop.permute.xlu0 %597
    %599 = vrot.lane.b32.xlu0 %v576, 127
    %v600 = vpop.permute.xlu0 %599
    %601 = vrot.lane.b32.xlu0 %v577, 127
    %v602 = vpop.permute.xlu0 %601
    %603 = vrot.lane.b32.xlu0 %v578, 127
    %v604 = vpop.permute.xlu0 %603
    %605 = vrot.lane.b32.xlu0 %v579, 127
    %v606 = vpop.permute.xlu0 %605
    %607 = vrot.lane.b32.xlu0 %v580, 127
    %v608 = vpop.permute.xlu0 %607
    %v609 = vsel %vm104, %v598, %v600
    %v610 = vsel %vm104, %v600, %v602
    %v611 = vsel %vm104, %v602, %v604
    %v612 = vsel %vm104, %v604, %v606
    %v613 = vsel %vm104, %v606, %v608
    %vm614 = vcmask 31744
    %v616 = vsel %vm614, %v582, 0
    %v618 = vsel %vm487, %v609, 0
    %v620 = vsel %vm487, %v610, 0
    %v622 = vsel %vm487, %v611, 0
    %v624 = vsel %vm487, %v612, 0
    %v626 = vsel %vm487, %v613, 0
    %v628 = vsel %vm487, %v608, 0
    %630 = vmatpush.msra.mxu0 0.0
    %631 = vmatpush.msra.mxu0 0.0
    %632 = vmatpush.msra.mxu0 0.0
    %633 = vmatpush.msra.mxu0 0.0
    %634 = vmatpush.msra.mxu0 0.0
    %635 = vmatpush.msra.mxu0 0.0
    %636 = vmatpush.msra.mxu0 0.0
    %637 = vmatpush.msra.mxu0 0.0
    %638 = vmatpush.msra.mxu0 0.0
    %639 = vmatpush.msra.mxu0 0.0
    %640 = vmatpush.msra.mxu0 0.0
    %641 = vmatpush.msra.mxu0 0.0
    %642 = vmatpush.msra.mxu0 0.0
    %643 = vmatpush.msra.mxu0 0.0
    %644 = vmatpush.msra.mxu0 0.0
    %645 = vmatpush.msra.mxu0 %v618
    %646 = vmatmul.f32.gmra.mxu0 %v616
    %v647 = vpop.f32.mrf.mxu0
    %v648 = vadd.f32 0.0, %v647
    %649 = vdwg.mxu0
    %650 = vmatpush.msra.mxu0 0.0
    %651 = vmatpush.msra.mxu0 0.0
    %652 = vmatpush.msra.mxu0 0.0
    %653 = vmatpush.msra.mxu0 0.0
    %654 = vmatpush.msra.mxu0 0.0
    %655 = vmatpush.msra.mxu0 0.0
    %656 = vmatpush.msra.mxu0 0.0
    %657 = vmatpush.msra.mxu0 0.0
    %658 = vmatpush.msra.mxu0 0.0
    %659 = vmatpush.msra.mxu0 0.0
    %660 = vmatpush.msra.mxu0 0.0
    %661 = vmatpush.msra.mxu0 0.0
    %662 = vmatpush.msra.mxu0 0.0
    %663 = vmatpush.msra.mxu0 0.0
    %664 = vmatpush.msra.mxu0 0.0
    %665 = vmatpush.msra.mxu0 %v620
    %666 = vmatmul.f32.gmra.mxu0 %v616
    %v667 = vpop.f32.mrf.mxu0
    %v668 = vadd.f32 0.0, %v667
    %669 = vdwg.mxu0
    %670 = vmatpush.msra.mxu0 0.0
    %671 = vmatpush.msra.mxu0 0.0
    %672 = vmatpush.msra.mxu0 0.0
    %673 = vmatpush.msra.mxu0 0.0
    %674 = vmatpush.msra.mxu0 0.0
    %675 = vmatpush.msra.mxu0 0.0
    %676 = vmatpush.msra.mxu0 0.0
    %677 = vmatpush.msra.mxu0 0.0
    %678 = vmatpush.msra.mxu0 0.0
    %679 = vmatpush.msra.mxu0 0.0
    %680 = vmatpush.msra.mxu0 0.0
    %681 = vmatpush.msra.mxu0 0.0
    %682 = vmatpush.msra.mxu0 0.0
    %683 = vmatpush.msra.mxu0 0.0
    %684 = vmatpush.msra.mxu0 0.0
    %685 = vmatpush.msra.mxu0 %v622
    %686 = vmatmul.f32.gmra.mxu0 %v616
    %v687 = vpop.f32.mrf.mxu0
    %v688 = vadd.f32 0.0, %v687
    %689 = vdwg.mxu0
    %690 = vmatpush.msra.mxu0 0.0
    %691 = vmatpush.msra.mxu0 0.0
    %692 = vmatpush.msra.mxu0 0.0
    %693 = vmatpush.msra.mxu0 0.0
    %694 = vmatpush.msra.mxu0 0.0
    %695 = vmatpush.msra.mxu0 0.0
    %696 = vmatpush.msra.mxu0 0.0
    %697 = vmatpush.msra.mxu0 0.0
    %698 = vmatpush.msra.mxu0 0.0
    %699 = vmatpush.msra.mxu0 0.0
    %700 = vmatpush.msra.mxu0 0.0
    %701 = vmatpush.msra.mxu0 0.0
    %702 = vmatpush.msra.mxu0 0.0
    %703 = vmatpush.msra.mxu0 0.0
    %704 = vmatpush.msra.mxu0 0.0
    %705 = vmatpush.msra.mxu0 %v624
    %706 = vmatmul.f32.gmra.mxu0 %v616
    %v707 = vpop.f32.mrf.mxu0
    %v708 = vadd.f32 0.0, %v707
    %709 = vdwg.mxu0
    %710 = vmatpush.msra.mxu0 0.0
    %711 = vmatpush.msra.mxu0 0.0
    %712 = vmatpush.msra.mxu0 0.0
    %713 = vmatpush.msra.mxu0 0.0
    %714 = vmatpush.msra.mxu0 0.0
    %715 = vmatpush.msra.mxu0 0.0
    %716 = vmatpush.msra.mxu0 0.0
    %717 = vmatpush.msra.mxu0 0.0
    %718 = vmatpush.msra.mxu0 0.0
    %719 = vmatpush.msra.mxu0 0.0
    %720 = vmatpush.msra.mxu0 0.0
    %721 = vmatpush.msra.mxu0 0.0
    %722 = vmatpush.msra.mxu0 0.0
    %723 = vmatpush.msra.mxu0 0.0
    %724 = vmatpush.msra.mxu0 0.0
    %725 = vmatpush.msra.mxu0 %v626
    %726 = vmatmul.f32.gmra.mxu0 %v616
    %v727 = vpop.f32.mrf.mxu0
    %v728 = vadd.f32 0.0, %v727
    %729 = vdwg.mxu0
    %730 = vmatpush.msra.mxu0 0.0
    %731 = vmatpush.msra.mxu0 0.0
    %732 = vmatpush.msra.mxu0 0.0
    %733 = vmatpush.msra.mxu0 0.0
    %734 = vmatpush.msra.mxu0 0.0
    %735 = vmatpush.msra.mxu0 0.0
    %736 = vmatpush.msra.mxu0 0.0
    %737 = vmatpush.msra.mxu0 0.0
    %738 = vmatpush.msra.mxu0 0.0
    %739 = vmatpush.msra.mxu0 0.0
    %740 = vmatpush.msra.mxu0 0.0
    %741 = vmatpush.msra.mxu0 0.0
    %742 = vmatpush.msra.mxu0 0.0
    %743 = vmatpush.msra.mxu0 0.0
    %744 = vmatpush.msra.mxu0 0.0
    %745 = vmatpush.msra.mxu0 %v628
    %746 = vmatmul.f32.gmra.mxu0 %v616
    %v747 = vpop.f32.mrf.mxu0
    %v748 = vadd.f32 0.0, %v747
    %749 = vdwg.mxu0
    %v751 = vsel %vm614, %v581, 0
    %v753 = vsel %vm487, %v575, 0
    %v755 = vsel %vm487, %v576, 0
    %v757 = vsel %vm487, %v577, 0
    %v759 = vsel %vm487, %v578, 0
    %v761 = vsel %vm487, %v579, 0
    %v763 = vsel %vm487, %v580, 0
    %765 = vmatpush.msra.mxu0 0.0
    %766 = vmatpush.msra.mxu0 0.0
    %767 = vmatpush.msra.mxu0 0.0
    %768 = vmatpush.msra.mxu0 0.0
    %769 = vmatpush.msra.mxu0 0.0
    %770 = vmatpush.msra.mxu0 0.0
    %771 = vmatpush.msra.mxu0 0.0
    %772 = vmatpush.msra.mxu0 0.0
    %773 = vmatpush.msra.mxu0 0.0
    %774 = vmatpush.msra.mxu0 0.0
    %775 = vmatpush.msra.mxu0 0.0
    %776 = vmatpush.msra.mxu0 0.0
    %777 = vmatpush.msra.mxu0 0.0
    %778 = vmatpush.msra.mxu0 0.0
    %779 = vmatpush.msra.mxu0 0.0
    %780 = vmatpush.msra.mxu0 %v753
    %781 = vmatmul.f32.gmra.mxu0 %v751
    %v782 = vpop.f32.mrf.mxu0
    %v783 = vadd.f32 %v648, %v782
    %784 = vdwg.mxu0
    %785 = vmatpush.msra.mxu0 0.0
    %786 = vmatpush.msra.mxu0 0.0
    %787 = vmatpush.msra.mxu0 0.0
    %788 = vmatpush.msra.mxu0 0.0
    %789 = vmatpush.msra.mxu0 0.0
    %790 = vmatpush.msra.mxu0 0.0
    %791 = vmatpush.msra.mxu0 0.0
    %792 = vmatpush.msra.mxu0 0.0
    %793 = vmatpush.msra.mxu0 0.0
    %794 = vmatpush.msra.mxu0 0.0
    %795 = vmatpush.msra.mxu0 0.0
    %796 = vmatpush.msra.mxu0 0.0
    %797 = vmatpush.msra.mxu0 0.0
    %798 = vmatpush.msra.mxu0 0.0
    %799 = vmatpush.msra.mxu0 0.0
    %800 = vmatpush.msra.mxu0 %v755
    %801 = vmatmul.f32.gmra.mxu0 %v751
    %v802 = vpop.f32.mrf.mxu0
    %v803 = vadd.f32 %v668, %v802
    %804 = vdwg.mxu0
    %805 = vmatpush.msra.mxu0 0.0
    %806 = vmatpush.msra.mxu0 0.0
    %807 = vmatpush.msra.mxu0 0.0
    %808 = vmatpush.msra.mxu0 0.0
    %809 = vmatpush.msra.mxu0 0.0
    %810 = vmatpush.msra.mxu0 0.0
    %811 = vmatpush.msra.mxu0 0.0
    %812 = vmatpush.msra.mxu0 0.0
    %813 = vmatpush.msra.mxu0 0.0
    %814 = vmatpush.msra.mxu0 0.0
    %815 = vmatpush.msra.mxu0 0.0
    %816 = vmatpush.msra.mxu0 0.0
    %817 = vmatpush.msra.mxu0 0.0
    %818 = vmatpush.msra.mxu0 0.0
    %819 = vmatpush.msra.mxu0 0.0
    %820 = vmatpush.msra.mxu0 %v757
    %821 = vmatmul.f32.gmra.mxu0 %v751
    %v822 = vpop.f32.mrf.mxu0
    %v823 = vadd.f32 %v688, %v822
    %824 = vdwg.mxu0
    %825 = vmatpush.msra.mxu0 0.0
    %826 = vmatpush.msra.mxu0 0.0
    %827 = vmatpush.msra.mxu0 0.0
    %828 = vmatpush.msra.mxu0 0.0
    %829 = vmatpush.msra.mxu0 0.0
    %830 = vmatpush.msra.mxu0 0.0
    %831 = vmatpush.msra.mxu0 0.0
    %832 = vmatpush.msra.mxu0 0.0
    %833 = vmatpush.msra.mxu0 0.0
    %834 = vmatpush.msra.mxu0 0.0
    %835 = vmatpush.msra.mxu0 0.0
    %836 = vmatpush.msra.mxu0 0.0
    %837 = vmatpush.msra.mxu0 0.0
    %838 = vmatpush.msra.mxu0 0.0
    %839 = vmatpush.msra.mxu0 0.0
    %840 = vmatpush.msra.mxu0 %v759
    %841 = vmatmul.f32.gmra.mxu0 %v751
    %v842 = vpop.f32.mrf.mxu0
    %v843 = vadd.f32 %v708, %v842
    %844 = vdwg.mxu0
    %845 = vmatpush.msra.mxu0 0.0
    %846 = vmatpush.msra.mxu0 0.0
    %847 = vmatpush.msra.mxu0 0.0
    %848 = vmatpush.msra.mxu0 0.0
    %849 = vmatpush.msra.mxu0 0.0
    %850 = vmatpush.msra.mxu0 0.0
    %851 = vmatpush.msra.mxu0 0.0
    %852 = vmatpush.msra.mxu0 0.0
    %853 = vmatpush.msra.mxu0 0.0
    %854 = vmatpush.msra.mxu0 0.0
    %855 = vmatpush.msra.mxu0 0.0
    %856 = vmatpush.msra.mxu0 0.0
    %857 = vmatpush.msra.mxu0 0.0
    %858 = vmatpush.msra.mxu0 0.0
    %859 = vmatpush.msra.mxu0 0.0
    %860 = vmatpush.msra.mxu0 %v761
    %861 = vmatmul.f32.gmra.mxu0 %v751
    %v862 = vpop.f32.mrf.mxu0
    %v863 = vadd.f32 %v728, %v862
    %864 = vdwg.mxu0
    %865 = vmatpush.msra.mxu0 0.0
    %866 = vmatpush.msra.mxu0 0.0
    %867 = vmatpush.msra.mxu0 0.0
    %868 = vmatpush.msra.mxu0 0.0
    %869 = vmatpush.msra.mxu0 0.0
    %870 = vmatpush.msra.mxu0 0.0
    %871 = vmatpush.msra.mxu0 0.0
    %872 = vmatpush.msra.mxu0 0.0
    %873 = vmatpush.msra.mxu0 0.0
    %874 = vmatpush.msra.mxu0 0.0
    %875 = vmatpush.msra.mxu0 0.0
    %876 = vmatpush.msra.mxu0 0.0
    %877 = vmatpush.msra.mxu0 0.0
    %878 = vmatpush.msra.mxu0 0.0
    %879 = vmatpush.msra.mxu0 0.0
    %880 = vmatpush.msra.mxu0 %v763
    %881 = vmatmul.f32.gmra.mxu0 %v751
    %v882 = vpop.f32.mrf.mxu0
    %v883 = vadd.f32 %v748, %v882
    %884 = vdwg.mxu0
    %885 = vrot.lane.b32.xlu0 %v575, 126
    %v886 = vpop.permute.xlu0 %885
    %887 = vrot.lane.b32.xlu0 %v576, 126
    %v888 = vpop.permute.xlu0 %887
    %889 = vrot.lane.b32.xlu0 %v577, 126
    %v890 = vpop.permute.xlu0 %889
    %891 = vrot.lane.b32.xlu0 %v578, 126
    %v892 = vpop.permute.xlu0 %891
    %893 = vrot.lane.b32.xlu0 %v579, 126
    %v894 = vpop.permute.xlu0 %893
    %895 = vrot.lane.b32.xlu0 %v580, 126
    %v896 = vpop.permute.xlu0 %895
    %v897 = vsel %vm151, %v886, %v888
    %v898 = vsel %vm151, %v888, %v890
    %v899 = vsel %vm151, %v890, %v892
    %v900 = vsel %vm151, %v892, %v894
    %v901 = vsel %vm151, %v894, %v896
    %v903 = vsel %vm614, %v583, 0
    %v905 = vsel %vm487, %v897, 0
    %v907 = vsel %vm487, %v898, 0
    %v909 = vsel %vm487, %v899, 0
    %v911 = vsel %vm487, %v900, 0
    %v913 = vsel %vm487, %v901, 0
    %v915 = vsel %vm487, %v896, 0
    %917 = vmatpush.msra.mxu0 0.0
    %918 = vmatpush.msra.mxu0 0.0
    %919 = vmatpush.msra.mxu0 0.0
    %920 = vmatpush.msra.mxu0 0.0
    %921 = vmatpush.msra.mxu0 0.0
    %922 = vmatpush.msra.mxu0 0.0
    %923 = vmatpush.msra.mxu0 0.0
    %924 = vmatpush.msra.mxu0 0.0
    %925 = vmatpush.msra.mxu0 0.0
    %926 = vmatpush.msra.mxu0 0.0
    %927 = vmatpush.msra.mxu0 0.0
    %928 = vmatpush.msra.mxu0 0.0
    %929 = vmatpush.msra.mxu0 0.0
    %930 = vmatpush.msra.mxu0 0.0
    %931 = vmatpush.msra.mxu0 0.0
    %932 = vmatpush.msra.mxu0 %v905
    %933 = vmatmul.f32.gmra.mxu0 %v903
    %v934 = vpop.f32.mrf.mxu0
    %v935 = vadd.f32 0.0, %v934
    %936 = vdwg.mxu0
    %937 = vmatpush.msra.mxu0 0.0
    %938 = vmatpush.msra.mxu0 0.0
    %939 = vmatpush.msra.mxu0 0.0
    %940 = vmatpush.msra.mxu0 0.0
    %941 = vmatpush.msra.mxu0 0.0
    %942 = vmatpush.msra.mxu0 0.0
    %943 = vmatpush.msra.mxu0 0.0
    %944 = vmatpush.msra.mxu0 0.0
    %945 = vmatpush.msra.mxu0 0.0
    %946 = vmatpush.msra.mxu0 0.0
    %947 = vmatpush.msra.mxu0 0.0
    %948 = vmatpush.msra.mxu0 0.0
    %949 = vmatpush.msra.mxu0 0.0
    %950 = vmatpush.msra.mxu0 0.0
    %951 = vmatpush.msra.mxu0 0.0
    %952 = vmatpush.msra.mxu0 %v907
    %953 = vmatmul.f32.gmra.mxu0 %v903
    %v954 = vpop.f32.mrf.mxu0
    %v955 = vadd.f32 0.0, %v954
    %956 = vdwg.mxu0
    %957 = vmatpush.msra.mxu0 0.0
    %958 = vmatpush.msra.mxu0 0.0
    %959 = vmatpush.msra.mxu0 0.0
    %960 = vmatpush.msra.mxu0 0.0
    %961 = vmatpush.msra.mxu0 0.0
    %962 = vmatpush.msra.mxu0 0.0
    %963 = vmatpush.msra.mxu0 0.0
    %964 = vmatpush.msra.mxu0 0.0
    %965 = vmatpush.msra.mxu0 0.0
    %966 = vmatpush.msra.mxu0 0.0
    %967 = vmatpush.msra.mxu0 0.0
    %968 = vmatpush.msra.mxu0 0.0
    %969 = vmatpush.msra.mxu0 0.0
    %970 = vmatpush.msra.mxu0 0.0
    %971 = vmatpush.msra.mxu0 0.0
    %972 = vmatpush.msra.mxu0 %v909
    %973 = vmatmul.f32.gmra.mxu0 %v903
    %v974 = vpop.f32.mrf.mxu0
    %v975 = vadd.f32 0.0, %v974
    %976 = vdwg.mxu0
    %977 = vmatpush.msra.mxu0 0.0
    %978 = vmatpush.msra.mxu0 0.0
    %979 = vmatpush.msra.mxu0 0.0
    %980 = vmatpush.msra.mxu0 0.0
    %981 = vmatpush.msra.mxu0 0.0
    %982 = vmatpush.msra.mxu0 0.0
    %983 = vmatpush.msra.mxu0 0.0
    %984 = vmatpush.msra.mxu0 0.0
    %985 = vmatpush.msra.mxu0 0.0
    %986 = vmatpush.msra.mxu0 0.0
    %987 = vmatpush.msra.mxu0 0.0
    %988 = vmatpush.msra.mxu0 0.0
    %989 = vmatpush.msra.mxu0 0.0
    %990 = vmatpush.msra.mxu0 0.0
    %991 = vmatpush.msra.mxu0 0.0
    %992 = vmatpush.msra.mxu0 %v911
    %993 = vmatmul.f32.gmra.mxu0 %v903
    %v994 = vpop.f32.mrf.mxu0
    %v995 = vadd.f32 0.0, %v994
    %996 = vdwg.mxu0
    %997 = vmatpush.msra.mxu0 0.0
    %998 = vmatpush.msra.mxu0 0.0
    %999 = vmatpush.msra.mxu0 0.0
    %1000 = vmatpush.msra.mxu0 0.0
    %1001 = vmatpush.msra.mxu0 0.0
    %1002 = vmatpush.msra.mxu0 0.0
    %1003 = vmatpush.msra.mxu0 0.0
    %1004 = vmatpush.msra.mxu0 0.0
    %1005 = vmatpush.msra.mxu0 0.0
    %1006 = vmatpush.msra.mxu0 0.0
    %1007 = vmatpush.msra.mxu0 0.0
    %1008 = vmatpush.msra.mxu0 0.0
    %1009 = vmatpush.msra.mxu0 0.0
    %1010 = vmatpush.msra.mxu0 0.0
    %1011 = vmatpush.msra.mxu0 0.0
    %1012 = vmatpush.msra.mxu0 %v913
    %1013 = vmatmul.f32.gmra.mxu0 %v903
    %v1014 = vpop.f32.mrf.mxu0
    %v1015 = vadd.f32 0.0, %v1014
    %1016 = vdwg.mxu0
    %1017 = vmatpush.msra.mxu0 0.0
    %1018 = vmatpush.msra.mxu0 0.0
    %1019 = vmatpush.msra.mxu0 0.0
    %1020 = vmatpush.msra.mxu0 0.0
    %1021 = vmatpush.msra.mxu0 0.0
    %1022 = vmatpush.msra.mxu0 0.0
    %1023 = vmatpush.msra.mxu0 0.0
    %1024 = vmatpush.msra.mxu0 0.0
    %1025 = vmatpush.msra.mxu0 0.0
    %1026 = vmatpush.msra.mxu0 0.0
    %1027 = vmatpush.msra.mxu0 0.0
    %1028 = vmatpush.msra.mxu0 0.0
    %1029 = vmatpush.msra.mxu0 0.0
    %1030 = vmatpush.msra.mxu0 0.0
    %1031 = vmatpush.msra.mxu0 0.0
    %1032 = vmatpush.msra.mxu0 %v915
    %1033 = vmatmul.f32.gmra.mxu0 %v903
    %v1034 = vpop.f32.mrf.mxu0
    %v1035 = vadd.f32 0.0, %v1034
    %1036 = vdwg.mxu0
    %v1037 = vadd.f32 %v783, %v935
    %v1038 = vadd.f32 %v803, %v955
    %v1039 = vadd.f32 %v823, %v975
    %v1040 = vadd.f32 %v843, %v995
    %v1041 = vadd.f32 %v863, %v1015
    %v1042 = vadd.f32 %v883, %v1035
    %1043 = vrot.lane.b32.xlu0 %v575, 110
    %v1044 = vpop.permute.xlu0 %1043
    %1045 = vrot.lane.b32.xlu0 %v576, 110
    %v1046 = vpop.permute.xlu0 %1045
    %1047 = vrot.lane.b32.xlu0 %v577, 110
    %v1048 = vpop.permute.xlu0 %1047
    %1049 = vrot.lane.b32.xlu0 %v578, 110
    %v1050 = vpop.permute.xlu0 %1049
    %1051 = vrot.lane.b32.xlu0 %v579, 110
    %v1052 = vpop.permute.xlu0 %1051
    %1053 = vrot.lane.b32.xlu0 %v580, 110
    %v1054 = vpop.permute.xlu0 %1053
    %v1055 = vsel %vm198, %v1044, %v1046
    %v1056 = vsel %vm198, %v1046, %v1048
    %v1057 = vsel %vm198, %v1048, %v1050
    %v1058 = vsel %vm198, %v1050, %v1052
    %v1059 = vsel %vm198, %v1052, %v1054
    %v1061 = vsel %vm614, %v584, 0
    %v1063 = vsel %vm487, %v1055, 0
    %v1065 = vsel %vm487, %v1056, 0
    %v1067 = vsel %vm487, %v1057, 0
    %v1069 = vsel %vm487, %v1058, 0
    %v1071 = vsel %vm487, %v1059, 0
    %v1073 = vsel %vm487, %v1054, 0
    %1075 = vmatpush.msra.mxu0 0.0
    %1076 = vmatpush.msra.mxu0 0.0
    %1077 = vmatpush.msra.mxu0 0.0
    %1078 = vmatpush.msra.mxu0 0.0
    %1079 = vmatpush.msra.mxu0 0.0
    %1080 = vmatpush.msra.mxu0 0.0
    %1081 = vmatpush.msra.mxu0 0.0
    %1082 = vmatpush.msra.mxu0 0.0
    %1083 = vmatpush.msra.mxu0 0.0
    %1084 = vmatpush.msra.mxu0 0.0
    %1085 = vmatpush.msra.mxu0 0.0
    %1086 = vmatpush.msra.mxu0 0.0
    %1087 = vmatpush.msra.mxu0 0.0
    %1088 = vmatpush.msra.mxu0 0.0
    %1089 = vmatpush.msra.mxu0 0.0
    %1090 = vmatpush.msra.mxu0 %v1063
    %1091 = vmatmul.f32.gmra.mxu0 %v1061
    %v1092 = vpop.f32.mrf.mxu0
    %v1093 = vadd.f32 0.0, %v1092
    %1094 = vdwg.mxu0
    %1095 = vmatpush.msra.mxu0 0.0
    %1096 = vmatpush.msra.mxu0 0.0
    %1097 = vmatpush.msra.mxu0 0.0
    %1098 = vmatpush.msra.mxu0 0.0
    %1099 = vmatpush.msra.mxu0 0.0
    %1100 = vmatpush.msra.mxu0 0.0
    %1101 = vmatpush.msra.mxu0 0.0
    %1102 = vmatpush.msra.mxu0 0.0
    %1103 = vmatpush.msra.mxu0 0.0
    %1104 = vmatpush.msra.mxu0 0.0
    %1105 = vmatpush.msra.mxu0 0.0
    %1106 = vmatpush.msra.mxu0 0.0
    %1107 = vmatpush.msra.mxu0 0.0
    %1108 = vmatpush.msra.mxu0 0.0
    %1109 = vmatpush.msra.mxu0 0.0
    %1110 = vmatpush.msra.mxu0 %v1065
    %1111 = vmatmul.f32.gmra.mxu0 %v1061
    %v1112 = vpop.f32.mrf.mxu0
    %v1113 = vadd.f32 0.0, %v1112
    %1114 = vdwg.mxu0
    %1115 = vmatpush.msra.mxu0 0.0
    %1116 = vmatpush.msra.mxu0 0.0
    %1117 = vmatpush.msra.mxu0 0.0
    %1118 = vmatpush.msra.mxu0 0.0
    %1119 = vmatpush.msra.mxu0 0.0
    %1120 = vmatpush.msra.mxu0 0.0
    %1121 = vmatpush.msra.mxu0 0.0
    %1122 = vmatpush.msra.mxu0 0.0
    %1123 = vmatpush.msra.mxu0 0.0
    %1124 = vmatpush.msra.mxu0 0.0
    %1125 = vmatpush.msra.mxu0 0.0
    %1126 = vmatpush.msra.mxu0 0.0
    %1127 = vmatpush.msra.mxu0 0.0
    %1128 = vmatpush.msra.mxu0 0.0
    %1129 = vmatpush.msra.mxu0 0.0
    %1130 = vmatpush.msra.mxu0 %v1067
    %1131 = vmatmul.f32.gmra.mxu0 %v1061
    %v1132 = vpop.f32.mrf.mxu0
    %v1133 = vadd.f32 0.0, %v1132
    %1134 = vdwg.mxu0
    %1135 = vmatpush.msra.mxu0 0.0
    %1136 = vmatpush.msra.mxu0 0.0
    %1137 = vmatpush.msra.mxu0 0.0
    %1138 = vmatpush.msra.mxu0 0.0
    %1139 = vmatpush.msra.mxu0 0.0
    %1140 = vmatpush.msra.mxu0 0.0
    %1141 = vmatpush.msra.mxu0 0.0
    %1142 = vmatpush.msra.mxu0 0.0
    %1143 = vmatpush.msra.mxu0 0.0
    %1144 = vmatpush.msra.mxu0 0.0
    %1145 = vmatpush.msra.mxu0 0.0
    %1146 = vmatpush.msra.mxu0 0.0
    %1147 = vmatpush.msra.mxu0 0.0
    %1148 = vmatpush.msra.mxu0 0.0
    %1149 = vmatpush.msra.mxu0 0.0
    %1150 = vmatpush.msra.mxu0 %v1069
    %1151 = vmatmul.f32.gmra.mxu0 %v1061
    %v1152 = vpop.f32.mrf.mxu0
    %v1153 = vadd.f32 0.0, %v1152
    %1154 = vdwg.mxu0
    %1155 = vmatpush.msra.mxu0 0.0
    %1156 = vmatpush.msra.mxu0 0.0
    %1157 = vmatpush.msra.mxu0 0.0
    %1158 = vmatpush.msra.mxu0 0.0
    %1159 = vmatpush.msra.mxu0 0.0
    %1160 = vmatpush.msra.mxu0 0.0
    %1161 = vmatpush.msra.mxu0 0.0
    %1162 = vmatpush.msra.mxu0 0.0
    %1163 = vmatpush.msra.mxu0 0.0
    %1164 = vmatpush.msra.mxu0 0.0
    %1165 = vmatpush.msra.mxu0 0.0
    %1166 = vmatpush.msra.mxu0 0.0
    %1167 = vmatpush.msra.mxu0 0.0
    %1168 = vmatpush.msra.mxu0 0.0
    %1169 = vmatpush.msra.mxu0 0.0
    %1170 = vmatpush.msra.mxu0 %v1071
    %1171 = vmatmul.f32.gmra.mxu0 %v1061
    %v1172 = vpop.f32.mrf.mxu0
    %v1173 = vadd.f32 0.0, %v1172
    %1174 = vdwg.mxu0
    %1175 = vmatpush.msra.mxu0 0.0
    %1176 = vmatpush.msra.mxu0 0.0
    %1177 = vmatpush.msra.mxu0 0.0
    %1178 = vmatpush.msra.mxu0 0.0
    %1179 = vmatpush.msra.mxu0 0.0
    %1180 = vmatpush.msra.mxu0 0.0
    %1181 = vmatpush.msra.mxu0 0.0
    %1182 = vmatpush.msra.mxu0 0.0
    %1183 = vmatpush.msra.mxu0 0.0
    %1184 = vmatpush.msra.mxu0 0.0
    %1185 = vmatpush.msra.mxu0 0.0
    %1186 = vmatpush.msra.mxu0 0.0
    %1187 = vmatpush.msra.mxu0 0.0
    %1188 = vmatpush.msra.mxu0 0.0
    %1189 = vmatpush.msra.mxu0 0.0
    %1190 = vmatpush.msra.mxu0 %v1073
    %1191 = vmatmul.f32.gmra.mxu0 %v1061
    %v1192 = vpop.f32.mrf.mxu0
    %v1193 = vadd.f32 0.0, %v1192
    %1194 = vdwg.mxu0
    %v1195 = vadd.f32 %v1037, %v1093
    %v1196 = vadd.f32 %v1038, %v1113
    %v1197 = vadd.f32 %v1039, %v1133
    %v1198 = vadd.f32 %v1040, %v1153
    %v1199 = vadd.f32 %v1041, %v1173
    %v1200 = vadd.f32 %v1042, %v1193
    %1201 = vrot.lane.b32.xlu0 %v575, 109
    %v1202 = vpop.permute.xlu0 %1201
    %1203 = vrot.lane.b32.xlu0 %v576, 109
    %v1204 = vpop.permute.xlu0 %1203
    %1205 = vrot.lane.b32.xlu0 %v577, 109
    %v1206 = vpop.permute.xlu0 %1205
    %1207 = vrot.lane.b32.xlu0 %v578, 109
    %v1208 = vpop.permute.xlu0 %1207
    %1209 = vrot.lane.b32.xlu0 %v579, 109
    %v1210 = vpop.permute.xlu0 %1209
    %1211 = vrot.lane.b32.xlu0 %v580, 109
    %v1212 = vpop.permute.xlu0 %1211
    %v1213 = vsel %vm245, %v1202, %v1204
    %v1214 = vsel %vm245, %v1204, %v1206
    %v1215 = vsel %vm245, %v1206, %v1208
    %v1216 = vsel %vm245, %v1208, %v1210
    %v1217 = vsel %vm245, %v1210, %v1212
    %v1219 = vsel %vm614, %v585, 0
    %v1221 = vsel %vm487, %v1213, 0
    %v1223 = vsel %vm487, %v1214, 0
    %v1225 = vsel %vm487, %v1215, 0
    %v1227 = vsel %vm487, %v1216, 0
    %v1229 = vsel %vm487, %v1217, 0
    %v1231 = vsel %vm487, %v1212, 0
    %1233 = vmatpush.msra.mxu0 0.0
    %1234 = vmatpush.msra.mxu0 0.0
    %1235 = vmatpush.msra.mxu0 0.0
    %1236 = vmatpush.msra.mxu0 0.0
    %1237 = vmatpush.msra.mxu0 0.0
    %1238 = vmatpush.msra.mxu0 0.0
    %1239 = vmatpush.msra.mxu0 0.0
    %1240 = vmatpush.msra.mxu0 0.0
    %1241 = vmatpush.msra.mxu0 0.0
    %1242 = vmatpush.msra.mxu0 0.0
    %1243 = vmatpush.msra.mxu0 0.0
    %1244 = vmatpush.msra.mxu0 0.0
    %1245 = vmatpush.msra.mxu0 0.0
    %1246 = vmatpush.msra.mxu0 0.0
    %1247 = vmatpush.msra.mxu0 0.0
    %1248 = vmatpush.msra.mxu0 %v1221
    %1249 = vmatmul.f32.gmra.mxu0 %v1219
    %v1250 = vpop.f32.mrf.mxu0
    %v1251 = vadd.f32 0.0, %v1250
    %1252 = vdwg.mxu0
    %1253 = vmatpush.msra.mxu0 0.0
    %1254 = vmatpush.msra.mxu0 0.0
    %1255 = vmatpush.msra.mxu0 0.0
    %1256 = vmatpush.msra.mxu0 0.0
    %1257 = vmatpush.msra.mxu0 0.0
    %1258 = vmatpush.msra.mxu0 0.0
    %1259 = vmatpush.msra.mxu0 0.0
    %1260 = vmatpush.msra.mxu0 0.0
    %1261 = vmatpush.msra.mxu0 0.0
    %1262 = vmatpush.msra.mxu0 0.0
    %1263 = vmatpush.msra.mxu0 0.0
    %1264 = vmatpush.msra.mxu0 0.0
    %1265 = vmatpush.msra.mxu0 0.0
    %1266 = vmatpush.msra.mxu0 0.0
    %1267 = vmatpush.msra.mxu0 0.0
    %1268 = vmatpush.msra.mxu0 %v1223
    %1269 = vmatmul.f32.gmra.mxu0 %v1219
    %v1270 = vpop.f32.mrf.mxu0
    %v1271 = vadd.f32 0.0, %v1270
    %1272 = vdwg.mxu0
    %1273 = vmatpush.msra.mxu0 0.0
    %1274 = vmatpush.msra.mxu0 0.0
    %1275 = vmatpush.msra.mxu0 0.0
    %1276 = vmatpush.msra.mxu0 0.0
    %1277 = vmatpush.msra.mxu0 0.0
    %1278 = vmatpush.msra.mxu0 0.0
    %1279 = vmatpush.msra.mxu0 0.0
    %1280 = vmatpush.msra.mxu0 0.0
    %1281 = vmatpush.msra.mxu0 0.0
    %1282 = vmatpush.msra.mxu0 0.0
    %1283 = vmatpush.msra.mxu0 0.0
    %1284 = vmatpush.msra.mxu0 0.0
    %1285 = vmatpush.msra.mxu0 0.0
    %1286 = vmatpush.msra.mxu0 0.0
    %1287 = vmatpush.msra.mxu0 0.0
    %1288 = vmatpush.msra.mxu0 %v1225
    %1289 = vmatmul.f32.gmra.mxu0 %v1219
    %v1290 = vpop.f32.mrf.mxu0
    %v1291 = vadd.f32 0.0, %v1290
    %1292 = vdwg.mxu0
    %1293 = vmatpush.msra.mxu0 0.0
    %1294 = vmatpush.msra.mxu0 0.0
    %1295 = vmatpush.msra.mxu0 0.0
    %1296 = vmatpush.msra.mxu0 0.0
    %1297 = vmatpush.msra.mxu0 0.0
    %1298 = vmatpush.msra.mxu0 0.0
    %1299 = vmatpush.msra.mxu0 0.0
    %1300 = vmatpush.msra.mxu0 0.0
    %1301 = vmatpush.msra.mxu0 0.0
    %1302 = vmatpush.msra.mxu0 0.0
    %1303 = vmatpush.msra.mxu0 0.0
    %1304 = vmatpush.msra.mxu0 0.0
    %1305 = vmatpush.msra.mxu0 0.0
    %1306 = vmatpush.msra.mxu0 0.0
    %1307 = vmatpush.msra.mxu0 0.0
    %1308 = vmatpush.msra.mxu0 %v1227
    %1309 = vmatmul.f32.gmra.mxu0 %v1219
    %v1310 = vpop.f32.mrf.mxu0
    %v1311 = vadd.f32 0.0, %v1310
    %1312 = vdwg.mxu0
    %1313 = vmatpush.msra.mxu0 0.0
    %1314 = vmatpush.msra.mxu0 0.0
    %1315 = vmatpush.msra.mxu0 0.0
    %1316 = vmatpush.msra.mxu0 0.0
    %1317 = vmatpush.msra.mxu0 0.0
    %1318 = vmatpush.msra.mxu0 0.0
    %1319 = vmatpush.msra.mxu0 0.0
    %1320 = vmatpush.msra.mxu0 0.0
    %1321 = vmatpush.msra.mxu0 0.0
    %1322 = vmatpush.msra.mxu0 0.0
    %1323 = vmatpush.msra.mxu0 0.0
    %1324 = vmatpush.msra.mxu0 0.0
    %1325 = vmatpush.msra.mxu0 0.0
    %1326 = vmatpush.msra.mxu0 0.0
    %1327 = vmatpush.msra.mxu0 0.0
    %1328 = vmatpush.msra.mxu0 %v1229
    %1329 = vmatmul.f32.gmra.mxu0 %v1219
    %v1330 = vpop.f32.mrf.mxu0
    %v1331 = vadd.f32 0.0, %v1330
    %1332 = vdwg.mxu0
    %1333 = vmatpush.msra.mxu0 0.0
    %1334 = vmatpush.msra.mxu0 0.0
    %1335 = vmatpush.msra.mxu0 0.0
    %1336 = vmatpush.msra.mxu0 0.0
    %1337 = vmatpush.msra.mxu0 0.0
    %1338 = vmatpush.msra.mxu0 0.0
    %1339 = vmatpush.msra.mxu0 0.0
    %1340 = vmatpush.msra.mxu0 0.0
    %1341 = vmatpush.msra.mxu0 0.0
    %1342 = vmatpush.msra.mxu0 0.0
    %1343 = vmatpush.msra.mxu0 0.0
    %1344 = vmatpush.msra.mxu0 0.0
    %1345 = vmatpush.msra.mxu0 0.0
    %1346 = vmatpush.msra.mxu0 0.0
    %1347 = vmatpush.msra.mxu0 0.0
    %1348 = vmatpush.msra.mxu0 %v1231
    %1349 = vmatmul.f32.gmra.mxu0 %v1219
    %v1350 = vpop.f32.mrf.mxu0
    %v1351 = vadd.f32 0.0, %v1350
    %1352 = vdwg.mxu0
    %v1353 = vadd.f32 %v1195, %v1251
    %v1354 = vadd.f32 %v1196, %v1271
    %v1355 = vadd.f32 %v1197, %v1291
    %v1356 = vadd.f32 %v1198, %v1311
    %v1357 = vadd.f32 %v1199, %v1331
    %v1358 = vadd.f32 %v1200, %v1351
    %1359 = vrot.lane.b32.xlu0 %v575, 108
    %v1360 = vpop.permute.xlu0 %1359
    %1361 = vrot.lane.b32.xlu0 %v576, 108
    %v1362 = vpop.permute.xlu0 %1361
    %1363 = vrot.lane.b32.xlu0 %v577, 108
    %v1364 = vpop.permute.xlu0 %1363
    %1365 = vrot.lane.b32.xlu0 %v578, 108
    %v1366 = vpop.permute.xlu0 %1365
    %1367 = vrot.lane.b32.xlu0 %v579, 108
    %v1368 = vpop.permute.xlu0 %1367
    %1369 = vrot.lane.b32.xlu0 %v580, 108
    %v1370 = vpop.permute.xlu0 %1369
    %v1371 = vsel %vm292, %v1360, %v1362
    %v1372 = vsel %vm292, %v1362, %v1364
    %v1373 = vsel %vm292, %v1364, %v1366
    %v1374 = vsel %vm292, %v1366, %v1368
    %v1375 = vsel %vm292, %v1368, %v1370
    %v1377 = vsel %vm614, %v586, 0
    %v1379 = vsel %vm487, %v1371, 0
    %v1381 = vsel %vm487, %v1372, 0
    %v1383 = vsel %vm487, %v1373, 0
    %v1385 = vsel %vm487, %v1374, 0
    %v1387 = vsel %vm487, %v1375, 0
    %v1389 = vsel %vm487, %v1370, 0
    %1391 = vmatpush.msra.mxu0 0.0
    %1392 = vmatpush.msra.mxu0 0.0
    %1393 = vmatpush.msra.mxu0 0.0
    %1394 = vmatpush.msra.mxu0 0.0
    %1395 = vmatpush.msra.mxu0 0.0
    %1396 = vmatpush.msra.mxu0 0.0
    %1397 = vmatpush.msra.mxu0 0.0
    %1398 = vmatpush.msra.mxu0 0.0
    %1399 = vmatpush.msra.mxu0 0.0
    %1400 = vmatpush.msra.mxu0 0.0
    %1401 = vmatpush.msra.mxu0 0.0
    %1402 = vmatpush.msra.mxu0 0.0
    %1403 = vmatpush.msra.mxu0 0.0
    %1404 = vmatpush.msra.mxu0 0.0
    %1405 = vmatpush.msra.mxu0 0.0
    %1406 = vmatpush.msra.mxu0 %v1379
    %1407 = vmatmul.f32.gmra.mxu0 %v1377
    %v1408 = vpop.f32.mrf.mxu0
    %v1409 = vadd.f32 0.0, %v1408
    %1410 = vdwg.mxu0
    %1411 = vmatpush.msra.mxu0 0.0
    %1412 = vmatpush.msra.mxu0 0.0
    %1413 = vmatpush.msra.mxu0 0.0
    %1414 = vmatpush.msra.mxu0 0.0
    %1415 = vmatpush.msra.mxu0 0.0
    %1416 = vmatpush.msra.mxu0 0.0
    %1417 = vmatpush.msra.mxu0 0.0
    %1418 = vmatpush.msra.mxu0 0.0
    %1419 = vmatpush.msra.mxu0 0.0
    %1420 = vmatpush.msra.mxu0 0.0
    %1421 = vmatpush.msra.mxu0 0.0
    %1422 = vmatpush.msra.mxu0 0.0
    %1423 = vmatpush.msra.mxu0 0.0
    %1424 = vmatpush.msra.mxu0 0.0
    %1425 = vmatpush.msra.mxu0 0.0
    %1426 = vmatpush.msra.mxu0 %v1381
    %1427 = vmatmul.f32.gmra.mxu0 %v1377
    %v1428 = vpop.f32.mrf.mxu0
    %v1429 = vadd.f32 0.0, %v1428
    %1430 = vdwg.mxu0
    %1431 = vmatpush.msra.mxu0 0.0
    %1432 = vmatpush.msra.mxu0 0.0
    %1433 = vmatpush.msra.mxu0 0.0
    %1434 = vmatpush.msra.mxu0 0.0
    %1435 = vmatpush.msra.mxu0 0.0
    %1436 = vmatpush.msra.mxu0 0.0
    %1437 = vmatpush.msra.mxu0 0.0
    %1438 = vmatpush.msra.mxu0 0.0
    %1439 = vmatpush.msra.mxu0 0.0
    %1440 = vmatpush.msra.mxu0 0.0
    %1441 = vmatpush.msra.mxu0 0.0
    %1442 = vmatpush.msra.mxu0 0.0
    %1443 = vmatpush.msra.mxu0 0.0
    %1444 = vmatpush.msra.mxu0 0.0
    %1445 = vmatpush.msra.mxu0 0.0
    %1446 = vmatpush.msra.mxu0 %v1383
    %1447 = vmatmul.f32.gmra.mxu0 %v1377
    %v1448 = vpop.f32.mrf.mxu0
    %v1449 = vadd.f32 0.0, %v1448
    %1450 = vdwg.mxu0
    %1451 = vmatpush.msra.mxu0 0.0
    %1452 = vmatpush.msra.mxu0 0.0
    %1453 = vmatpush.msra.mxu0 0.0
    %1454 = vmatpush.msra.mxu0 0.0
    %1455 = vmatpush.msra.mxu0 0.0
    %1456 = vmatpush.msra.mxu0 0.0
    %1457 = vmatpush.msra.mxu0 0.0
    %1458 = vmatpush.msra.mxu0 0.0
    %1459 = vmatpush.msra.mxu0 0.0
    %1460 = vmatpush.msra.mxu0 0.0
    %1461 = vmatpush.msra.mxu0 0.0
    %1462 = vmatpush.msra.mxu0 0.0
    %1463 = vmatpush.msra.mxu0 0.0
    %1464 = vmatpush.msra.mxu0 0.0
    %1465 = vmatpush.msra.mxu0 0.0
    %1466 = vmatpush.msra.mxu0 %v1385
    %1467 = vmatmul.f32.gmra.mxu0 %v1377
    %v1468 = vpop.f32.mrf.mxu0
    %v1469 = vadd.f32 0.0, %v1468
    %1470 = vdwg.mxu0
    %1471 = vmatpush.msra.mxu0 0.0
    %1472 = vmatpush.msra.mxu0 0.0
    %1473 = vmatpush.msra.mxu0 0.0
    %1474 = vmatpush.msra.mxu0 0.0
    %1475 = vmatpush.msra.mxu0 0.0
    %1476 = vmatpush.msra.mxu0 0.0
    %1477 = vmatpush.msra.mxu0 0.0
    %1478 = vmatpush.msra.mxu0 0.0
    %1479 = vmatpush.msra.mxu0 0.0
    %1480 = vmatpush.msra.mxu0 0.0
    %1481 = vmatpush.msra.mxu0 0.0
    %1482 = vmatpush.msra.mxu0 0.0
    %1483 = vmatpush.msra.mxu0 0.0
    %1484 = vmatpush.msra.mxu0 0.0
    %1485 = vmatpush.msra.mxu0 0.0
    %1486 = vmatpush.msra.mxu0 %v1387
    %1487 = vmatmul.f32.gmra.mxu0 %v1377
    %v1488 = vpop.f32.mrf.mxu0
    %v1489 = vadd.f32 0.0, %v1488
    %1490 = vdwg.mxu0
    %1491 = vmatpush.msra.mxu0 0.0
    %1492 = vmatpush.msra.mxu0 0.0
    %1493 = vmatpush.msra.mxu0 0.0
    %1494 = vmatpush.msra.mxu0 0.0
    %1495 = vmatpush.msra.mxu0 0.0
    %1496 = vmatpush.msra.mxu0 0.0
    %1497 = vmatpush.msra.mxu0 0.0
    %1498 = vmatpush.msra.mxu0 0.0
    %1499 = vmatpush.msra.mxu0 0.0
    %1500 = vmatpush.msra.mxu0 0.0
    %1501 = vmatpush.msra.mxu0 0.0
    %1502 = vmatpush.msra.mxu0 0.0
    %1503 = vmatpush.msra.mxu0 0.0
    %1504 = vmatpush.msra.mxu0 0.0
    %1505 = vmatpush.msra.mxu0 0.0
    %1506 = vmatpush.msra.mxu0 %v1389
    %1507 = vmatmul.f32.gmra.mxu0 %v1377
    %v1508 = vpop.f32.mrf.mxu0
    %v1509 = vadd.f32 0.0, %v1508
    %1510 = vdwg.mxu0
    %v1511 = vadd.f32 %v1353, %v1409
    %v1512 = vadd.f32 %v1354, %v1429
    %v1513 = vadd.f32 %v1355, %v1449
    %v1514 = vadd.f32 %v1356, %v1469
    %v1515 = vadd.f32 %v1357, %v1489
    %v1516 = vadd.f32 %v1358, %v1509
    %1517 = vrot.lane.b32.xlu0 %v575, 92
    %v1518 = vpop.permute.xlu0 %1517
    %1519 = vrot.lane.b32.xlu0 %v576, 92
    %v1520 = vpop.permute.xlu0 %1519
    %1521 = vrot.lane.b32.xlu0 %v577, 92
    %v1522 = vpop.permute.xlu0 %1521
    %1523 = vrot.lane.b32.xlu0 %v578, 92
    %v1524 = vpop.permute.xlu0 %1523
    %1525 = vrot.lane.b32.xlu0 %v579, 92
    %v1526 = vpop.permute.xlu0 %1525
    %1527 = vrot.lane.b32.xlu0 %v580, 92
    %v1528 = vpop.permute.xlu0 %1527
    %v1529 = vsel %vm339, %v1518, %v1520
    %v1530 = vsel %vm339, %v1520, %v1522
    %v1531 = vsel %vm339, %v1522, %v1524
    %v1532 = vsel %vm339, %v1524, %v1526
    %v1533 = vsel %vm339, %v1526, %v1528
    %v1535 = vsel %vm614, %v587, 0
    %v1537 = vsel %vm487, %v1529, 0
    %v1539 = vsel %vm487, %v1530, 0
    %v1541 = vsel %vm487, %v1531, 0
    %v1543 = vsel %vm487, %v1532, 0
    %v1545 = vsel %vm487, %v1533, 0
    %v1547 = vsel %vm487, %v1528, 0
    %1549 = vmatpush.msra.mxu0 0.0
    %1550 = vmatpush.msra.mxu0 0.0
    %1551 = vmatpush.msra.mxu0 0.0
    %1552 = vmatpush.msra.mxu0 0.0
    %1553 = vmatpush.msra.mxu0 0.0
    %1554 = vmatpush.msra.mxu0 0.0
    %1555 = vmatpush.msra.mxu0 0.0
    %1556 = vmatpush.msra.mxu0 0.0
    %1557 = vmatpush.msra.mxu0 0.0
    %1558 = vmatpush.msra.mxu0 0.0
    %1559 = vmatpush.msra.mxu0 0.0
    %1560 = vmatpush.msra.mxu0 0.0
    %1561 = vmatpush.msra.mxu0 0.0
    %1562 = vmatpush.msra.mxu0 0.0
    %1563 = vmatpush.msra.mxu0 0.0
    %1564 = vmatpush.msra.mxu0 %v1537
    %1565 = vmatmul.f32.gmra.mxu0 %v1535
    %v1566 = vpop.f32.mrf.mxu0
    %v1567 = vadd.f32 0.0, %v1566
    %1568 = vdwg.mxu0
    %1569 = vmatpush.msra.mxu0 0.0
    %1570 = vmatpush.msra.mxu0 0.0
    %1571 = vmatpush.msra.mxu0 0.0
    %1572 = vmatpush.msra.mxu0 0.0
    %1573 = vmatpush.msra.mxu0 0.0
    %1574 = vmatpush.msra.mxu0 0.0
    %1575 = vmatpush.msra.mxu0 0.0
    %1576 = vmatpush.msra.mxu0 0.0
    %1577 = vmatpush.msra.mxu0 0.0
    %1578 = vmatpush.msra.mxu0 0.0
    %1579 = vmatpush.msra.mxu0 0.0
    %1580 = vmatpush.msra.mxu0 0.0
    %1581 = vmatpush.msra.mxu0 0.0
    %1582 = vmatpush.msra.mxu0 0.0
    %1583 = vmatpush.msra.mxu0 0.0
    %1584 = vmatpush.msra.mxu0 %v1539
    %1585 = vmatmul.f32.gmra.mxu0 %v1535
    %v1586 = vpop.f32.mrf.mxu0
    %v1587 = vadd.f32 0.0, %v1586
    %1588 = vdwg.mxu0
    %1589 = vmatpush.msra.mxu0 0.0
    %1590 = vmatpush.msra.mxu0 0.0
    %1591 = vmatpush.msra.mxu0 0.0
    %1592 = vmatpush.msra.mxu0 0.0
    %1593 = vmatpush.msra.mxu0 0.0
    %1594 = vmatpush.msra.mxu0 0.0
    %1595 = vmatpush.msra.mxu0 0.0
    %1596 = vmatpush.msra.mxu0 0.0
    %1597 = vmatpush.msra.mxu0 0.0
    %1598 = vmatpush.msra.mxu0 0.0
    %1599 = vmatpush.msra.mxu0 0.0
    %1600 = vmatpush.msra.mxu0 0.0
    %1601 = vmatpush.msra.mxu0 0.0
    %1602 = vmatpush.msra.mxu0 0.0
    %1603 = vmatpush.msra.mxu0 0.0
    %1604 = vmatpush.msra.mxu0 %v1541
    %1605 = vmatmul.f32.gmra.mxu0 %v1535
    %v1606 = vpop.f32.mrf.mxu0
    %v1607 = vadd.f32 0.0, %v1606
    %1608 = vdwg.mxu0
    %1609 = vmatpush.msra.mxu0 0.0
    %1610 = vmatpush.msra.mxu0 0.0
    %1611 = vmatpush.msra.mxu0 0.0
    %1612 = vmatpush.msra.mxu0 0.0
    %1613 = vmatpush.msra.mxu0 0.0
    %1614 = vmatpush.msra.mxu0 0.0
    %1615 = vmatpush.msra.mxu0 0.0
    %1616 = vmatpush.msra.mxu0 0.0
    %1617 = vmatpush.msra.mxu0 0.0
    %1618 = vmatpush.msra.mxu0 0.0
    %1619 = vmatpush.msra.mxu0 0.0
    %1620 = vmatpush.msra.mxu0 0.0
    %1621 = vmatpush.msra.mxu0 0.0
    %1622 = vmatpush.msra.mxu0 0.0
    %1623 = vmatpush.msra.mxu0 0.0
    %1624 = vmatpush.msra.mxu0 %v1543
    %1625 = vmatmul.f32.gmra.mxu0 %v1535
    %v1626 = vpop.f32.mrf.mxu0
    %v1627 = vadd.f32 0.0, %v1626
    %1628 = vdwg.mxu0
    %1629 = vmatpush.msra.mxu0 0.0
    %1630 = vmatpush.msra.mxu0 0.0
    %1631 = vmatpush.msra.mxu0 0.0
    %1632 = vmatpush.msra.mxu0 0.0
    %1633 = vmatpush.msra.mxu0 0.0
    %1634 = vmatpush.msra.mxu0 0.0
    %1635 = vmatpush.msra.mxu0 0.0
    %1636 = vmatpush.msra.mxu0 0.0
    %1637 = vmatpush.msra.mxu0 0.0
    %1638 = vmatpush.msra.mxu0 0.0
    %1639 = vmatpush.msra.mxu0 0.0
    %1640 = vmatpush.msra.mxu0 0.0
    %1641 = vmatpush.msra.mxu0 0.0
    %1642 = vmatpush.msra.mxu0 0.0
    %1643 = vmatpush.msra.mxu0 0.0
    %1644 = vmatpush.msra.mxu0 %v1545
    %1645 = vmatmul.f32.gmra.mxu0 %v1535
    %v1646 = vpop.f32.mrf.mxu0
    %v1647 = vadd.f32 0.0, %v1646
    %1648 = vdwg.mxu0
    %1649 = vmatpush.msra.mxu0 0.0
    %1650 = vmatpush.msra.mxu0 0.0
    %1651 = vmatpush.msra.mxu0 0.0
    %1652 = vmatpush.msra.mxu0 0.0
    %1653 = vmatpush.msra.mxu0 0.0
    %1654 = vmatpush.msra.mxu0 0.0
    %1655 = vmatpush.msra.mxu0 0.0
    %1656 = vmatpush.msra.mxu0 0.0
    %1657 = vmatpush.msra.mxu0 0.0
    %1658 = vmatpush.msra.mxu0 0.0
    %1659 = vmatpush.msra.mxu0 0.0
    %1660 = vmatpush.msra.mxu0 0.0
    %1661 = vmatpush.msra.mxu0 0.0
    %1662 = vmatpush.msra.mxu0 0.0
    %1663 = vmatpush.msra.mxu0 0.0
    %1664 = vmatpush.msra.mxu0 %v1547
    %1665 = vmatmul.f32.gmra.mxu0 %v1535
    %v1666 = vpop.f32.mrf.mxu0
    %v1667 = vadd.f32 0.0, %v1666
    %1668 = vdwg.mxu0
    %v1669 = vadd.f32 %v1511, %v1567
    %v1670 = vadd.f32 %v1512, %v1587
    %v1671 = vadd.f32 %v1513, %v1607
    %v1672 = vadd.f32 %v1514, %v1627
    %v1673 = vadd.f32 %v1515, %v1647
    %v1674 = vadd.f32 %v1516, %v1667
    %1675 = vrot.lane.b32.xlu0 %v575, 91
    %v1676 = vpop.permute.xlu0 %1675
    %1677 = vrot.lane.b32.xlu0 %v576, 91
    %v1678 = vpop.permute.xlu0 %1677
    %1679 = vrot.lane.b32.xlu0 %v577, 91
    %v1680 = vpop.permute.xlu0 %1679
    %1681 = vrot.lane.b32.xlu0 %v578, 91
    %v1682 = vpop.permute.xlu0 %1681
    %1683 = vrot.lane.b32.xlu0 %v579, 91
    %v1684 = vpop.permute.xlu0 %1683
    %1685 = vrot.lane.b32.xlu0 %v580, 91
    %v1686 = vpop.permute.xlu0 %1685
    %v1687 = vsel %vm386, %v1676, %v1678
    %v1688 = vsel %vm386, %v1678, %v1680
    %v1689 = vsel %vm386, %v1680, %v1682
    %v1690 = vsel %vm386, %v1682, %v1684
    %v1691 = vsel %vm386, %v1684, %v1686
    %v1693 = vsel %vm614, %v588, 0
    %v1695 = vsel %vm487, %v1687, 0
    %v1697 = vsel %vm487, %v1688, 0
    %v1699 = vsel %vm487, %v1689, 0
    %v1701 = vsel %vm487, %v1690, 0
    %v1703 = vsel %vm487, %v1691, 0
    %v1705 = vsel %vm487, %v1686, 0
    %1707 = vmatpush.msra.mxu0 0.0
    %1708 = vmatpush.msra.mxu0 0.0
    %1709 = vmatpush.msra.mxu0 0.0
    %1710 = vmatpush.msra.mxu0 0.0
    %1711 = vmatpush.msra.mxu0 0.0
    %1712 = vmatpush.msra.mxu0 0.0
    %1713 = vmatpush.msra.mxu0 0.0
    %1714 = vmatpush.msra.mxu0 0.0
    %1715 = vmatpush.msra.mxu0 0.0
    %1716 = vmatpush.msra.mxu0 0.0
    %1717 = vmatpush.msra.mxu0 0.0
    %1718 = vmatpush.msra.mxu0 0.0
    %1719 = vmatpush.msra.mxu0 0.0
    %1720 = vmatpush.msra.mxu0 0.0
    %1721 = vmatpush.msra.mxu0 0.0
    %1722 = vmatpush.msra.mxu0 %v1695
    %1723 = vmatmul.f32.gmra.mxu0 %v1693
    %v1724 = vpop.f32.mrf.mxu0
    %v1725 = vadd.f32 0.0, %v1724
    %1726 = vdwg.mxu0
    %1727 = vmatpush.msra.mxu0 0.0
    %1728 = vmatpush.msra.mxu0 0.0
    %1729 = vmatpush.msra.mxu0 0.0
    %1730 = vmatpush.msra.mxu0 0.0
    %1731 = vmatpush.msra.mxu0 0.0
    %1732 = vmatpush.msra.mxu0 0.0
    %1733 = vmatpush.msra.mxu0 0.0
    %1734 = vmatpush.msra.mxu0 0.0
    %1735 = vmatpush.msra.mxu0 0.0
    %1736 = vmatpush.msra.mxu0 0.0
    %1737 = vmatpush.msra.mxu0 0.0
    %1738 = vmatpush.msra.mxu0 0.0
    %1739 = vmatpush.msra.mxu0 0.0
    %1740 = vmatpush.msra.mxu0 0.0
    %1741 = vmatpush.msra.mxu0 0.0
    %1742 = vmatpush.msra.mxu0 %v1697
    %1743 = vmatmul.f32.gmra.mxu0 %v1693
    %v1744 = vpop.f32.mrf.mxu0
    %v1745 = vadd.f32 0.0, %v1744
    %1746 = vdwg.mxu0
    %1747 = vmatpush.msra.mxu0 0.0
    %1748 = vmatpush.msra.mxu0 0.0
    %1749 = vmatpush.msra.mxu0 0.0
    %1750 = vmatpush.msra.mxu0 0.0
    %1751 = vmatpush.msra.mxu0 0.0
    %1752 = vmatpush.msra.mxu0 0.0
    %1753 = vmatpush.msra.mxu0 0.0
    %1754 = vmatpush.msra.mxu0 0.0
    %1755 = vmatpush.msra.mxu0 0.0
    %1756 = vmatpush.msra.mxu0 0.0
    %1757 = vmatpush.msra.mxu0 0.0
    %1758 = vmatpush.msra.mxu0 0.0
    %1759 = vmatpush.msra.mxu0 0.0
    %1760 = vmatpush.msra.mxu0 0.0
    %1761 = vmatpush.msra.mxu0 0.0
    %1762 = vmatpush.msra.mxu0 %v1699
    %1763 = vmatmul.f32.gmra.mxu0 %v1693
    %v1764 = vpop.f32.mrf.mxu0
    %v1765 = vadd.f32 0.0, %v1764
    %1766 = vdwg.mxu0
    %1767 = vmatpush.msra.mxu0 0.0
    %1768 = vmatpush.msra.mxu0 0.0
    %1769 = vmatpush.msra.mxu0 0.0
    %1770 = vmatpush.msra.mxu0 0.0
    %1771 = vmatpush.msra.mxu0 0.0
    %1772 = vmatpush.msra.mxu0 0.0
    %1773 = vmatpush.msra.mxu0 0.0
    %1774 = vmatpush.msra.mxu0 0.0
    %1775 = vmatpush.msra.mxu0 0.0
    %1776 = vmatpush.msra.mxu0 0.0
    %1777 = vmatpush.msra.mxu0 0.0
    %1778 = vmatpush.msra.mxu0 0.0
    %1779 = vmatpush.msra.mxu0 0.0
    %1780 = vmatpush.msra.mxu0 0.0
    %1781 = vmatpush.msra.mxu0 0.0
    %1782 = vmatpush.msra.mxu0 %v1701
    %1783 = vmatmul.f32.gmra.mxu0 %v1693
    %v1784 = vpop.f32.mrf.mxu0
    %v1785 = vadd.f32 0.0, %v1784
    %1786 = vdwg.mxu0
    %1787 = vmatpush.msra.mxu0 0.0
    %1788 = vmatpush.msra.mxu0 0.0
    %1789 = vmatpush.msra.mxu0 0.0
    %1790 = vmatpush.msra.mxu0 0.0
    %1791 = vmatpush.msra.mxu0 0.0
    %1792 = vmatpush.msra.mxu0 0.0
    %1793 = vmatpush.msra.mxu0 0.0
    %1794 = vmatpush.msra.mxu0 0.0
    %1795 = vmatpush.msra.mxu0 0.0
    %1796 = vmatpush.msra.mxu0 0.0
    %1797 = vmatpush.msra.mxu0 0.0
    %1798 = vmatpush.msra.mxu0 0.0
    %1799 = vmatpush.msra.mxu0 0.0
    %1800 = vmatpush.msra.mxu0 0.0
    %1801 = vmatpush.msra.mxu0 0.0
    %1802 = vmatpush.msra.mxu0 %v1703
    %1803 = vmatmul.f32.gmra.mxu0 %v1693
    %v1804 = vpop.f32.mrf.mxu0
    %v1805 = vadd.f32 0.0, %v1804
    %1806 = vdwg.mxu0
    %1807 = vmatpush.msra.mxu0 0.0
    %1808 = vmatpush.msra.mxu0 0.0
    %1809 = vmatpush.msra.mxu0 0.0
    %1810 = vmatpush.msra.mxu0 0.0
    %1811 = vmatpush.msra.mxu0 0.0
    %1812 = vmatpush.msra.mxu0 0.0
    %1813 = vmatpush.msra.mxu0 0.0
    %1814 = vmatpush.msra.mxu0 0.0
    %1815 = vmatpush.msra.mxu0 0.0
    %1816 = vmatpush.msra.mxu0 0.0
    %1817 = vmatpush.msra.mxu0 0.0
    %1818 = vmatpush.msra.mxu0 0.0
    %1819 = vmatpush.msra.mxu0 0.0
    %1820 = vmatpush.msra.mxu0 0.0
    %1821 = vmatpush.msra.mxu0 0.0
    %1822 = vmatpush.msra.mxu0 %v1705
    %1823 = vmatmul.f32.gmra.mxu0 %v1693
    %v1824 = vpop.f32.mrf.mxu0
    %v1825 = vadd.f32 0.0, %v1824
    %1826 = vdwg.mxu0
    %v1827 = vadd.f32 %v1669, %v1725
    %v1828 = vadd.f32 %v1670, %v1745
    %v1829 = vadd.f32 %v1671, %v1765
    %v1830 = vadd.f32 %v1672, %v1785
    %v1831 = vadd.f32 %v1673, %v1805
    %v1832 = vadd.f32 %v1674, %v1825
    %1833 = vrot.lane.b32.xlu0 %v575, 90
    %v1834 = vpop.permute.xlu0 %1833
    %1835 = vrot.lane.b32.xlu0 %v576, 90
    %v1836 = vpop.permute.xlu0 %1835
    %1837 = vrot.lane.b32.xlu0 %v577, 90
    %v1838 = vpop.permute.xlu0 %1837
    %1839 = vrot.lane.b32.xlu0 %v578, 90
    %v1840 = vpop.permute.xlu0 %1839
    %1841 = vrot.lane.b32.xlu0 %v579, 90
    %v1842 = vpop.permute.xlu0 %1841
    %1843 = vrot.lane.b32.xlu0 %v580, 90
    %v1844 = vpop.permute.xlu0 %1843
    %v1845 = vsel %vm433, %v1834, %v1836
    %v1846 = vsel %vm433, %v1836, %v1838
    %v1847 = vsel %vm433, %v1838, %v1840
    %v1848 = vsel %vm433, %v1840, %v1842
    %v1849 = vsel %vm433, %v1842, %v1844
    %v1851 = vsel %vm614, %v589, 0
    %v1853 = vsel %vm487, %v1845, 0
    %v1855 = vsel %vm487, %v1846, 0
    %v1857 = vsel %vm487, %v1847, 0
    %v1859 = vsel %vm487, %v1848, 0
    %v1861 = vsel %vm487, %v1849, 0
    %v1863 = vsel %vm487, %v1844, 0
    %1865 = vmatpush.msra.mxu0 0.0
    %1866 = vmatpush.msra.mxu0 0.0
    %1867 = vmatpush.msra.mxu0 0.0
    %1868 = vmatpush.msra.mxu0 0.0
    %1869 = vmatpush.msra.mxu0 0.0
    %1870 = vmatpush.msra.mxu0 0.0
    %1871 = vmatpush.msra.mxu0 0.0
    %1872 = vmatpush.msra.mxu0 0.0
    %1873 = vmatpush.msra.mxu0 0.0
    %1874 = vmatpush.msra.mxu0 0.0
    %1875 = vmatpush.msra.mxu0 0.0
    %1876 = vmatpush.msra.mxu0 0.0
    %1877 = vmatpush.msra.mxu0 0.0
    %1878 = vmatpush.msra.mxu0 0.0
    %1879 = vmatpush.msra.mxu0 0.0
    %1880 = vmatpush.msra.mxu0 %v1853
    %1881 = vmatmul.f32.gmra.mxu0 %v1851
    %v1882 = vpop.f32.mrf.mxu0
    %v1883 = vadd.f32 0.0, %v1882
    %1884 = vdwg.mxu0
    %1885 = vmatpush.msra.mxu0 0.0
    %1886 = vmatpush.msra.mxu0 0.0
    %1887 = vmatpush.msra.mxu0 0.0
    %1888 = vmatpush.msra.mxu0 0.0
    %1889 = vmatpush.msra.mxu0 0.0
    %1890 = vmatpush.msra.mxu0 0.0
    %1891 = vmatpush.msra.mxu0 0.0
    %1892 = vmatpush.msra.mxu0 0.0
    %1893 = vmatpush.msra.mxu0 0.0
    %1894 = vmatpush.msra.mxu0 0.0
    %1895 = vmatpush.msra.mxu0 0.0
    %1896 = vmatpush.msra.mxu0 0.0
    %1897 = vmatpush.msra.mxu0 0.0
    %1898 = vmatpush.msra.mxu0 0.0
    %1899 = vmatpush.msra.mxu0 0.0
    %1900 = vmatpush.msra.mxu0 %v1855
    %1901 = vmatmul.f32.gmra.mxu0 %v1851
    %v1902 = vpop.f32.mrf.mxu0
    %v1903 = vadd.f32 0.0, %v1902
    %1904 = vdwg.mxu0
    %1905 = vmatpush.msra.mxu0 0.0
    %1906 = vmatpush.msra.mxu0 0.0
    %1907 = vmatpush.msra.mxu0 0.0
    %1908 = vmatpush.msra.mxu0 0.0
    %1909 = vmatpush.msra.mxu0 0.0
    %1910 = vmatpush.msra.mxu0 0.0
    %1911 = vmatpush.msra.mxu0 0.0
    %1912 = vmatpush.msra.mxu0 0.0
    %1913 = vmatpush.msra.mxu0 0.0
    %1914 = vmatpush.msra.mxu0 0.0
    %1915 = vmatpush.msra.mxu0 0.0
    %1916 = vmatpush.msra.mxu0 0.0
    %1917 = vmatpush.msra.mxu0 0.0
    %1918 = vmatpush.msra.mxu0 0.0
    %1919 = vmatpush.msra.mxu0 0.0
    %1920 = vmatpush.msra.mxu0 %v1857
    %1921 = vmatmul.f32.gmra.mxu0 %v1851
    %v1922 = vpop.f32.mrf.mxu0
    %v1923 = vadd.f32 0.0, %v1922
    %1924 = vdwg.mxu0
    %1925 = vmatpush.msra.mxu0 0.0
    %1926 = vmatpush.msra.mxu0 0.0
    %1927 = vmatpush.msra.mxu0 0.0
    %1928 = vmatpush.msra.mxu0 0.0
    %1929 = vmatpush.msra.mxu0 0.0
    %1930 = vmatpush.msra.mxu0 0.0
    %1931 = vmatpush.msra.mxu0 0.0
    %1932 = vmatpush.msra.mxu0 0.0
    %1933 = vmatpush.msra.mxu0 0.0
    %1934 = vmatpush.msra.mxu0 0.0
    %1935 = vmatpush.msra.mxu0 0.0
    %1936 = vmatpush.msra.mxu0 0.0
    %1937 = vmatpush.msra.mxu0 0.0
    %1938 = vmatpush.msra.mxu0 0.0
    %1939 = vmatpush.msra.mxu0 0.0
    %1940 = vmatpush.msra.mxu0 %v1859
    %1941 = vmatmul.f32.gmra.mxu0 %v1851
    %v1942 = vpop.f32.mrf.mxu0
    %v1943 = vadd.f32 0.0, %v1942
    %1944 = vdwg.mxu0
    %1945 = vmatpush.msra.mxu0 0.0
    %1946 = vmatpush.msra.mxu0 0.0
    %1947 = vmatpush.msra.mxu0 0.0
    %1948 = vmatpush.msra.mxu0 0.0
    %1949 = vmatpush.msra.mxu0 0.0
    %1950 = vmatpush.msra.mxu0 0.0
    %1951 = vmatpush.msra.mxu0 0.0
    %1952 = vmatpush.msra.mxu0 0.0
    %1953 = vmatpush.msra.mxu0 0.0
    %1954 = vmatpush.msra.mxu0 0.0
    %1955 = vmatpush.msra.mxu0 0.0
    %1956 = vmatpush.msra.mxu0 0.0
    %1957 = vmatpush.msra.mxu0 0.0
    %1958 = vmatpush.msra.mxu0 0.0
    %1959 = vmatpush.msra.mxu0 0.0
    %1960 = vmatpush.msra.mxu0 %v1861
    %1961 = vmatmul.f32.gmra.mxu0 %v1851
    %v1962 = vpop.f32.mrf.mxu0
    %v1963 = vadd.f32 0.0, %v1962
    %1964 = vdwg.mxu0
    %1965 = vmatpush.msra.mxu0 0.0
    %1966 = vmatpush.msra.mxu0 0.0
    %1967 = vmatpush.msra.mxu0 0.0
    %1968 = vmatpush.msra.mxu0 0.0
    %1969 = vmatpush.msra.mxu0 0.0
    %1970 = vmatpush.msra.mxu0 0.0
    %1971 = vmatpush.msra.mxu0 0.0
    %1972 = vmatpush.msra.mxu0 0.0
    %1973 = vmatpush.msra.mxu0 0.0
    %1974 = vmatpush.msra.mxu0 0.0
    %1975 = vmatpush.msra.mxu0 0.0
    %1976 = vmatpush.msra.mxu0 0.0
    %1977 = vmatpush.msra.mxu0 0.0
    %1978 = vmatpush.msra.mxu0 0.0
    %1979 = vmatpush.msra.mxu0 0.0
    %1980 = vmatpush.msra.mxu0 %v1863
    %1981 = vmatmul.f32.gmra.mxu0 %v1851
    %v1982 = vpop.f32.mrf.mxu0
    %v1983 = vadd.f32 0.0, %v1982
    %1984 = vdwg.mxu0
    %v1985 = vadd.f32 %v1827, %v1883
    %v1986 = vadd.f32 %v1828, %v1903
    %v1987 = vadd.f32 %v1829, %v1923
    %v1988 = vadd.f32 %v1830, %v1943
    %v1989 = vadd.f32 %v1831, %v1963
    %v1990 = vadd.f32 %v1832, %v1983
    %1991 = vrot.lane.b32.xlu0 %v452, 90
    %v1992 = vpop.permute.xlu0 %1991
    %1993 = vrot.lane.b32.xlu0 %v453, 90
    %v1994 = vpop.permute.xlu0 %1993
    %1995 = vrot.lane.b32.xlu0 %v454, 90
    %v1996 = vpop.permute.xlu0 %1995
    %1997 = vrot.lane.b32.xlu0 %v455, 90
    %v1998 = vpop.permute.xlu0 %1997
    %1999 = vrot.lane.b32.xlu0 %v456, 90
    %v2000 = vpop.permute.xlu0 %1999
    %2001 = vrot.lane.b32.xlu0 %v457, 90
    %v2002 = vpop.permute.xlu0 %2001
    %v2003 = vsel %vm433, %v1992, %v1994
    %v2004 = vsel %vm433, %v1994, %v1996
    %v2005 = vsel %vm433, %v1996, %v1998
    %v2006 = vsel %vm433, %v1998, %v2000
    %v2007 = vsel %vm433, %v2000, %v2002
    %v2014 = vmul.f32 %v1985, %v2003
    %v2015 = vmul.f32 %v1986, %v2004
    %v2016 = vmul.f32 %v1987, %v2005
    %v2017 = vmul.f32 %v1988, %v2006
    %v2018 = vmul.f32 %v1989, %v2007
    %v2019 = vmul.f32 %v1990, %v2002
    %v2020 = vsel %vm487, %v2014, 0.0
    %v2021 = vsel %vm487, %v2015, 0.0
    %v2022 = vadd.f32 %v2020, %v2021
    %v2023 = vsel %vm487, %v2016, 0.0
    %v2024 = vadd.f32 %v2022, %v2023
    %v2025 = vsel %vm487, %v2017, 0.0
    %v2026 = vadd.f32 %v2024, %v2025
    %v2027 = vsel %vm487, %v2018, 0.0
    %v2028 = vadd.f32 %v2026, %v2027
    %vm2029 = vcmask 371712
    %v2030 = vsel %vm2029, %v2019, 0.0
    %v2031 = vadd.f32 %v2028, %v2030
    %2032 = vadd.xlane.f32.xlu0 %v2031
    %v2033 = vpop.xlane.xlu0 %2032
    %v2034 = vmul.f32 %v2014, %v2014
    %v2035 = vmul.f32 %v2015, %v2015
    %v2036 = vmul.f32 %v2016, %v2016
    %v2037 = vmul.f32 %v2017, %v2017
    %v2038 = vmul.f32 %v2018, %v2018
    %v2039 = vmul.f32 %v2019, %v2019
    %v2040 = vsel %vm487, %v2034, 0.0
    %v2041 = vsel %vm487, %v2035, 0.0
    %v2042 = vadd.f32 %v2040, %v2041
    %v2043 = vsel %vm487, %v2036, 0.0
    %v2044 = vadd.f32 %v2042, %v2043
    %v2045 = vsel %vm487, %v2037, 0.0
    %v2046 = vadd.f32 %v2044, %v2045
    %v2047 = vsel %vm487, %v2038, 0.0
    %v2048 = vadd.f32 %v2046, %v2047
    %v2049 = vsel %vm2029, %v2039, 0.0
    %v2050 = vadd.f32 %v2048, %v2049
    %2051 = vadd.xlane.f32.xlu0 %v2050
    %v2052 = vpop.xlane.xlu0 %2051
    %v2053 = vmul.f32 %v2033, 0.001953125
    %v2054 = vmul.f32 %v2052, 0.001953125
    %v2055 = vmul.f32 %v2053, %v2053
    %v2056 = vsub.f32 %v2054, %v2055
    %v2057 = vsub.f32 %v1985, %v2053
    %v2058 = vsub.f32 %v1986, %v2053
    %v2059 = vsub.f32 %v1987, %v2053
    %v2060 = vsub.f32 %v1988, %v2053
    %v2061 = vsub.f32 %v1989, %v2053
    %v2062 = vsub.f32 %v1990, %v2053
    %v2063 = vadd.f32 %v2056, 1e-05
    %v2064 = vrsqrt.pop %v2063
    %v2065 = vmul.f32 %v2064, %v2063
    %v2066 = vmul.f32 %v2065, %v2064
    %v2067 = vmul.f32 0.5, %v2066
    %v2068 = vsub.f32 1.5, %v2067
    %v2069 = vmul.f32 %v2064, %v2068
    %vm2070 = vweird.f32 %v2063
    %vm2071 = vweird.f32 %v2064
    %vm2072 = vmor %vm2070, %vm2071
    %v2073 = vsel %vm2072, %v2064, %v2069
    %v2074 = vmul.f32 %v2057, %v2073
    %v2075 = vmul.f32 %v2058, %v2073
    %v2076 = vmul.f32 %v2059, %v2073
    %v2077 = vmul.f32 %v2060, %v2073
    %v2078 = vmul.f32 %v2061, %v2073
    %v2079 = vmul.f32 %v2062, %v2073
    %2081 = vset.pattern.permute.xlu0 0
    %2082 = vperm.xlu0 %2081, %v590
    %v2083 = vpop.permute.xlu0 %2082
    %v2085 = vmul.f32 %v2074, %v2083
    %v2086 = vmul.f32 %v2075, %v2083
    %v2087 = vmul.f32 %v2076, %v2083
    %v2088 = vmul.f32 %v2077, %v2083
    %v2089 = vmul.f32 %v2078, %v2083
    %v2090 = vmul.f32 %v2079, %v2083
    %2091 = vset.pattern.permute.xlu0 1
    %2092 = vperm.xlu0 %2091, %v590
    %v2093 = vpop.permute.xlu0 %2092
    %v2095 = vadd.f32 %v2085, %v2093
    %v2096 = vadd.f32 %v2086, %v2093
    %v2097 = vadd.f32 %v2087, %v2093
    %v2098 = vadd.f32 %v2088, %v2093
    %v2099 = vadd.f32 %v2089, %v2093
    %v2100 = vadd.f32 %v2090, %v2093
    %v2101 = vmax.f32 %v2095, 0.0
    %v2102 = vmax.f32 %v2096, 0.0
    %v2103 = vmax.f32 %v2097, 0.0
    %v2104 = vmax.f32 %v2098, 0.0
    %v2105 = vmax.f32 %v2099, 0.0
    %v2106 = vmax.f32 %v2100, 0.0
    %v2107 = vmul.f32 %v2101, %v2003
    %v2108 = vmul.f32 %v2102, %v2004
    %v2109 = vmul.f32 %v2103, %v2005
    %v2110 = vmul.f32 %v2104, %v2006
    %v2111 = vmul.f32 %v2105, %v2007
    %v2112 = vmul.f32 %v2106, %v2002
    %v2113 = vld [vmem:[%s6] sm:$0x1]
    %v2114 = vld [vmem:[%s6 + $0x1] sm:$0x1]
    %v2115 = vld [vmem:[%s6 + $0x2] sm:$0x1]
    %v2116 = vld [vmem:[%s6 + $0x3] sm:$0x1]
    %v2117 = vld [vmem:[%s6 + $0x4] sm:$0x1]
    %v2118 = vld [vmem:[%s6 + $0x5] sm:$0x1]
    %v2119 = vld [vmem:[%s6 + $0x6] sm:$0x1]
    %v2120 = vld [vmem:[%s6 + $0x7] sm:$0x1]
    %v2121 = vld [vmem:[%s6 + $0x8] sm:$0x1]
    %2123 = vset.pattern.permute.xlu0 0
    %2124 = vperm.xlu0 %2123, %v2113
    %v2125 = vpop.permute.xlu0 %2124
    %v2127 = vperm.slane %v2125, 0
    %v2128 = vmul.f32 %v2127, %v2107
    %v2129 = vmul.f32 %v2127, %v2108
    %v2130 = vmul.f32 %v2127, %v2109
    %v2131 = vmul.f32 %v2127, %v2110
    %v2132 = vmul.f32 %v2127, %v2111
    %v2133 = vmul.f32 %v2127, %v2112
    %2134 = vset.pattern.permute.xlu0 1
    %2135 = vperm.xlu0 %2134, %v2113
    %v2136 = vpop.permute.xlu0 %2135
    %v2138 = vperm.slane %v2136, 0
    %v2139 = vmul.f32 %v2138, %v2107
    %v2140 = vmul.f32 %v2138, %v2108
    %v2141 = vmul.f32 %v2138, %v2109
    %v2142 = vmul.f32 %v2138, %v2110
    %v2143 = vmul.f32 %v2138, %v2111
    %v2144 = vmul.f32 %v2138, %v2112
    %v2151 = vrot.slane %v2139, 1
    %v2152 = vrot.slane %v2140, 1
    %v2153 = vrot.slane %v2141, 1
    %v2154 = vrot.slane %v2142, 1
    %v2155 = vrot.slane %v2143, 1
    %v2156 = vrot.slane %v2144, 1
    %v2163 = vadd.f32 %v2128, %v2151
    %v2164 = vadd.f32 %v2129, %v2152
    %v2165 = vadd.f32 %v2130, %v2153
    %v2166 = vadd.f32 %v2131, %v2154
    %v2167 = vadd.f32 %v2132, %v2155
    %v2168 = vadd.f32 %v2133, %v2156
    %2169 = vset.pattern.permute.xlu0 2
    %2170 = vperm.xlu0 %2169, %v2113
    %v2171 = vpop.permute.xlu0 %2170
    %v2173 = vperm.slane %v2171, 0
    %v2174 = vmul.f32 %v2173, %v2107
    %v2175 = vmul.f32 %v2173, %v2108
    %v2176 = vmul.f32 %v2173, %v2109
    %v2177 = vmul.f32 %v2173, %v2110
    %v2178 = vmul.f32 %v2173, %v2111
    %v2179 = vmul.f32 %v2173, %v2112
    %v2186 = vrot.slane %v2174, 2
    %v2187 = vrot.slane %v2175, 2
    %v2188 = vrot.slane %v2176, 2
    %v2189 = vrot.slane %v2177, 2
    %v2190 = vrot.slane %v2178, 2
    %v2191 = vrot.slane %v2179, 2
    %v2198 = vadd.f32 %v2163, %v2186
    %v2199 = vadd.f32 %v2164, %v2187
    %v2200 = vadd.f32 %v2165, %v2188
    %v2201 = vadd.f32 %v2166, %v2189
    %v2202 = vadd.f32 %v2167, %v2190
    %v2203 = vadd.f32 %v2168, %v2191
    %2204 = vset.pattern.permute.xlu0 3
    %2205 = vperm.xlu0 %2204, %v2113
    %v2206 = vpop.permute.xlu0 %2205
    %v2208 = vperm.slane %v2206, 0
    %v2209 = vmul.f32 %v2208, %v2107
    %v2210 = vmul.f32 %v2208, %v2108
    %v2211 = vmul.f32 %v2208, %v2109
    %v2212 = vmul.f32 %v2208, %v2110
    %v2213 = vmul.f32 %v2208, %v2111
    %v2214 = vmul.f32 %v2208, %v2112
    %v2221 = vrot.slane %v2209, 3
    %v2222 = vrot.slane %v2210, 3
    %v2223 = vrot.slane %v2211, 3
    %v2224 = vrot.slane %v2212, 3
    %v2225 = vrot.slane %v2213, 3
    %v2226 = vrot.slane %v2214, 3
    %v2233 = vadd.f32 %v2198, %v2221
    %v2234 = vadd.f32 %v2199, %v2222
    %v2235 = vadd.f32 %v2200, %v2223
    %v2236 = vadd.f32 %v2201, %v2224
    %v2237 = vadd.f32 %v2202, %v2225
    %v2238 = vadd.f32 %v2203, %v2226
    %v2239 = vadd.f32 %v2233, 0.0
    %v2240 = vadd.f32 %v2234, 0.0
    %v2241 = vadd.f32 %v2235, 0.0
    %v2242 = vadd.f32 %v2236, 0.0
    %v2243 = vadd.f32 %v2237, 0.0
    %v2244 = vadd.f32 %v2238, 0.0
    %2246 = vset.pattern.permute.xlu0 0
    %2247 = vperm.xlu0 %2246, %v2114
    %v2248 = vpop.permute.xlu0 %2247
    %v2250 = vperm.slane %v2248, 0
    %v2251 = vmul.f32 %v2250, %v2107
    %v2252 = vmul.f32 %v2250, %v2108
    %v2253 = vmul.f32 %v2250, %v2109
    %v2254 = vmul.f32 %v2250, %v2110
    %v2255 = vmul.f32 %v2250, %v2111
    %v2256 = vmul.f32 %v2250, %v2112
    %2257 = vset.pattern.permute.xlu0 1
    %2258 = vperm.xlu0 %2257, %v2114
    %v2259 = vpop.permute.xlu0 %2258
    %v2261 = vperm.slane %v2259, 0
    %v2262 = vmul.f32 %v2261, %v2107
    %v2263 = vmul.f32 %v2261, %v2108
    %v2264 = vmul.f32 %v2261, %v2109
    %v2265 = vmul.f32 %v2261, %v2110
    %v2266 = vmul.f32 %v2261, %v2111
    %v2267 = vmul.f32 %v2261, %v2112
    %v2274 = vrot.slane %v2262, 1
    %v2275 = vrot.slane %v2263, 1
    %v2276 = vrot.slane %v2264, 1
    %v2277 = vrot.slane %v2265, 1
    %v2278 = vrot.slane %v2266, 1
    %v2279 = vrot.slane %v2267, 1
    %v2286 = vadd.f32 %v2251, %v2274
    %v2287 = vadd.f32 %v2252, %v2275
    %v2288 = vadd.f32 %v2253, %v2276
    %v2289 = vadd.f32 %v2254, %v2277
    %v2290 = vadd.f32 %v2255, %v2278
    %v2291 = vadd.f32 %v2256, %v2279
    %2292 = vset.pattern.permute.xlu0 2
    %2293 = vperm.xlu0 %2292, %v2114
    %v2294 = vpop.permute.xlu0 %2293
    %v2296 = vperm.slane %v2294, 0
    %v2297 = vmul.f32 %v2296, %v2107
    %v2298 = vmul.f32 %v2296, %v2108
    %v2299 = vmul.f32 %v2296, %v2109
    %v2300 = vmul.f32 %v2296, %v2110
    %v2301 = vmul.f32 %v2296, %v2111
    %v2302 = vmul.f32 %v2296, %v2112
    %v2309 = vrot.slane %v2297, 2
    %v2310 = vrot.slane %v2298, 2
    %v2311 = vrot.slane %v2299, 2
    %v2312 = vrot.slane %v2300, 2
    %v2313 = vrot.slane %v2301, 2
    %v2314 = vrot.slane %v2302, 2
    %v2321 = vadd.f32 %v2286, %v2309
    %v2322 = vadd.f32 %v2287, %v2310
    %v2323 = vadd.f32 %v2288, %v2311
    %v2324 = vadd.f32 %v2289, %v2312
    %v2325 = vadd.f32 %v2290, %v2313
    %v2326 = vadd.f32 %v2291, %v2314
    %2327 = vset.pattern.permute.xlu0 3
    %2328 = vperm.xlu0 %2327, %v2114
    %v2329 = vpop.permute.xlu0 %2328
    %v2331 = vperm.slane %v2329, 0
    %v2332 = vmul.f32 %v2331, %v2107
    %v2333 = vmul.f32 %v2331, %v2108
    %v2334 = vmul.f32 %v2331, %v2109
    %v2335 = vmul.f32 %v2331, %v2110
    %v2336 = vmul.f32 %v2331, %v2111
    %v2337 = vmul.f32 %v2331, %v2112
    %v2344 = vrot.slane %v2332, 3
    %v2345 = vrot.slane %v2333, 3
    %v2346 = vrot.slane %v2334, 3
    %v2347 = vrot.slane %v2335, 3
    %v2348 = vrot.slane %v2336, 3
    %v2349 = vrot.slane %v2337, 3
    %v2356 = vadd.f32 %v2321, %v2344
    %v2357 = vadd.f32 %v2322, %v2345
    %v2358 = vadd.f32 %v2323, %v2346
    %v2359 = vadd.f32 %v2324, %v2347
    %v2360 = vadd.f32 %v2325, %v2348
    %v2361 = vadd.f32 %v2326, %v2349
    %2368 = vrot.lane.b32.xlu0 %v2356, 127
    %v2369 = vpop.permute.xlu0 %2368
    %2370 = vrot.lane.b32.xlu0 %v2357, 127
    %v2371 = vpop.permute.xlu0 %2370
    %2372 = vrot.lane.b32.xlu0 %v2358, 127
    %v2373 = vpop.permute.xlu0 %2372
    %2374 = vrot.lane.b32.xlu0 %v2359, 127
    %v2375 = vpop.permute.xlu0 %2374
    %2376 = vrot.lane.b32.xlu0 %v2360, 127
    %v2377 = vpop.permute.xlu0 %2376
    %2378 = vrot.lane.b32.xlu0 %v2361, 127
    %v2379 = vpop.permute.xlu0 %2378
    %v2380 = vsel %vm104, %v2369, %v2371
    %v2381 = vsel %vm104, %v2371, %v2373
    %v2382 = vsel %vm104, %v2373, %v2375
    %v2383 = vsel %vm104, %v2375, %v2377
    %v2384 = vsel %vm104, %v2377, %v2379
    %v2391 = vadd.f32 %v2239, %v2380
    %v2392 = vadd.f32 %v2240, %v2381
    %v2393 = vadd.f32 %v2241, %v2382
    %v2394 = vadd.f32 %v2242, %v2383
    %v2395 = vadd.f32 %v2243, %v2384
    %v2396 = vadd.f32 %v2244, %v2379
    %2398 = vset.pattern.permute.xlu0 0
    %2399 = vperm.xlu0 %2398, %v2115
    %v2400 = vpop.permute.xlu0 %2399
    %v2402 = vperm.slane %v2400, 0
    %v2403 = vmul.f32 %v2402, %v2107
    %v2404 = vmul.f32 %v2402, %v2108
    %v2405 = vmul.f32 %v2402, %v2109
    %v2406 = vmul.f32 %v2402, %v2110
    %v2407 = vmul.f32 %v2402, %v2111
    %v2408 = vmul.f32 %v2402, %v2112
    %2409 = vset.pattern.permute.xlu0 1
    %2410 = vperm.xlu0 %2409, %v2115
    %v2411 = vpop.permute.xlu0 %2410
    %v2413 = vperm.slane %v2411, 0
    %v2414 = vmul.f32 %v2413, %v2107
    %v2415 = vmul.f32 %v2413, %v2108
    %v2416 = vmul.f32 %v2413, %v2109
    %v2417 = vmul.f32 %v2413, %v2110
    %v2418 = vmul.f32 %v2413, %v2111
    %v2419 = vmul.f32 %v2413, %v2112
    %v2426 = vrot.slane %v2414, 1
    %v2427 = vrot.slane %v2415, 1
    %v2428 = vrot.slane %v2416, 1
    %v2429 = vrot.slane %v2417, 1
    %v2430 = vrot.slane %v2418, 1
    %v2431 = vrot.slane %v2419, 1
    %v2438 = vadd.f32 %v2403, %v2426
    %v2439 = vadd.f32 %v2404, %v2427
    %v2440 = vadd.f32 %v2405, %v2428
    %v2441 = vadd.f32 %v2406, %v2429
    %v2442 = vadd.f32 %v2407, %v2430
    %v2443 = vadd.f32 %v2408, %v2431
    %2444 = vset.pattern.permute.xlu0 2
    %2445 = vperm.xlu0 %2444, %v2115
    %v2446 = vpop.permute.xlu0 %2445
    %v2448 = vperm.slane %v2446, 0
    %v2449 = vmul.f32 %v2448, %v2107
    %v2450 = vmul.f32 %v2448, %v2108
    %v2451 = vmul.f32 %v2448, %v2109
    %v2452 = vmul.f32 %v2448, %v2110
    %v2453 = vmul.f32 %v2448, %v2111
    %v2454 = vmul.f32 %v2448, %v2112
    %v2461 = vrot.slane %v2449, 2
    %v2462 = vrot.slane %v2450, 2
    %v2463 = vrot.slane %v2451, 2
    %v2464 = vrot.slane %v2452, 2
    %v2465 = vrot.slane %v2453, 2
    %v2466 = vrot.slane %v2454, 2
    %v2473 = vadd.f32 %v2438, %v2461
    %v2474 = vadd.f32 %v2439, %v2462
    %v2475 = vadd.f32 %v2440, %v2463
    %v2476 = vadd.f32 %v2441, %v2464
    %v2477 = vadd.f32 %v2442, %v2465
    %v2478 = vadd.f32 %v2443, %v2466
    %2479 = vset.pattern.permute.xlu0 3
    %2480 = vperm.xlu0 %2479, %v2115
    %v2481 = vpop.permute.xlu0 %2480
    %v2483 = vperm.slane %v2481, 0
    %v2484 = vmul.f32 %v2483, %v2107
    %v2485 = vmul.f32 %v2483, %v2108
    %v2486 = vmul.f32 %v2483, %v2109
    %v2487 = vmul.f32 %v2483, %v2110
    %v2488 = vmul.f32 %v2483, %v2111
    %v2489 = vmul.f32 %v2483, %v2112
    %v2496 = vrot.slane %v2484, 3
    %v2497 = vrot.slane %v2485, 3
    %v2498 = vrot.slane %v2486, 3
    %v2499 = vrot.slane %v2487, 3
    %v2500 = vrot.slane %v2488, 3
    %v2501 = vrot.slane %v2489, 3
    %v2508 = vadd.f32 %v2473, %v2496
    %v2509 = vadd.f32 %v2474, %v2497
    %v2510 = vadd.f32 %v2475, %v2498
    %v2511 = vadd.f32 %v2476, %v2499
    %v2512 = vadd.f32 %v2477, %v2500
    %v2513 = vadd.f32 %v2478, %v2501
    %2520 = vrot.lane.b32.xlu0 %v2508, 126
    %v2521 = vpop.permute.xlu0 %2520
    %2522 = vrot.lane.b32.xlu0 %v2509, 126
    %v2523 = vpop.permute.xlu0 %2522
    %2524 = vrot.lane.b32.xlu0 %v2510, 126
    %v2525 = vpop.permute.xlu0 %2524
    %2526 = vrot.lane.b32.xlu0 %v2511, 126
    %v2527 = vpop.permute.xlu0 %2526
    %2528 = vrot.lane.b32.xlu0 %v2512, 126
    %v2529 = vpop.permute.xlu0 %2528
    %2530 = vrot.lane.b32.xlu0 %v2513, 126
    %v2531 = vpop.permute.xlu0 %2530
    %v2532 = vsel %vm151, %v2521, %v2523
    %v2533 = vsel %vm151, %v2523, %v2525
    %v2534 = vsel %vm151, %v2525, %v2527
    %v2535 = vsel %vm151, %v2527, %v2529
    %v2536 = vsel %vm151, %v2529, %v2531
    %v2543 = vadd.f32 %v2391, %v2532
    %v2544 = vadd.f32 %v2392, %v2533
    %v2545 = vadd.f32 %v2393, %v2534
    %v2546 = vadd.f32 %v2394, %v2535
    %v2547 = vadd.f32 %v2395, %v2536
    %v2548 = vadd.f32 %v2396, %v2531
    %2550 = vset.pattern.permute.xlu0 0
    %2551 = vperm.xlu0 %2550, %v2116
    %v2552 = vpop.permute.xlu0 %2551
    %v2554 = vperm.slane %v2552, 0
    %v2555 = vmul.f32 %v2554, %v2107
    %v2556 = vmul.f32 %v2554, %v2108
    %v2557 = vmul.f32 %v2554, %v2109
    %v2558 = vmul.f32 %v2554, %v2110
    %v2559 = vmul.f32 %v2554, %v2111
    %v2560 = vmul.f32 %v2554, %v2112
    %2561 = vset.pattern.permute.xlu0 1
    %2562 = vperm.xlu0 %2561, %v2116
    %v2563 = vpop.permute.xlu0 %2562
    %v2565 = vperm.slane %v2563, 0
    %v2566 = vmul.f32 %v2565, %v2107
    %v2567 = vmul.f32 %v2565, %v2108
    %v2568 = vmul.f32 %v2565, %v2109
    %v2569 = vmul.f32 %v2565, %v2110
    %v2570 = vmul.f32 %v2565, %v2111
    %v2571 = vmul.f32 %v2565, %v2112
    %v2578 = vrot.slane %v2566, 1
    %v2579 = vrot.slane %v2567, 1
    %v2580 = vrot.slane %v2568, 1
    %v2581 = vrot.slane %v2569, 1
    %v2582 = vrot.slane %v2570, 1
    %v2583 = vrot.slane %v2571, 1
    %v2590 = vadd.f32 %v2555, %v2578
    %v2591 = vadd.f32 %v2556, %v2579
    %v2592 = vadd.f32 %v2557, %v2580
    %v2593 = vadd.f32 %v2558, %v2581
    %v2594 = vadd.f32 %v2559, %v2582
    %v2595 = vadd.f32 %v2560, %v2583
    %2596 = vset.pattern.permute.xlu0 2
    %2597 = vperm.xlu0 %2596, %v2116
    %v2598 = vpop.permute.xlu0 %2597
    %v2600 = vperm.slane %v2598, 0
    %v2601 = vmul.f32 %v2600, %v2107
    %v2602 = vmul.f32 %v2600, %v2108
    %v2603 = vmul.f32 %v2600, %v2109
    %v2604 = vmul.f32 %v2600, %v2110
    %v2605 = vmul.f32 %v2600, %v2111
    %v2606 = vmul.f32 %v2600, %v2112
    %v2613 = vrot.slane %v2601, 2
    %v2614 = vrot.slane %v2602, 2
    %v2615 = vrot.slane %v2603, 2
    %v2616 = vrot.slane %v2604, 2
    %v2617 = vrot.slane %v2605, 2
    %v2618 = vrot.slane %v2606, 2
    %v2625 = vadd.f32 %v2590, %v2613
    %v2626 = vadd.f32 %v2591, %v2614
    %v2627 = vadd.f32 %v2592, %v2615
    %v2628 = vadd.f32 %v2593, %v2616
    %v2629 = vadd.f32 %v2594, %v2617
    %v2630 = vadd.f32 %v2595, %v2618
    %2631 = vset.pattern.permute.xlu0 3
    %2632 = vperm.xlu0 %2631, %v2116
    %v2633 = vpop.permute.xlu0 %2632
    %v2635 = vperm.slane %v2633, 0
    %v2636 = vmul.f32 %v2635, %v2107
    %v2637 = vmul.f32 %v2635, %v2108
    %v2638 = vmul.f32 %v2635, %v2109
    %v2639 = vmul.f32 %v2635, %v2110
    %v2640 = vmul.f32 %v2635, %v2111
    %v2641 = vmul.f32 %v2635, %v2112
    %v2648 = vrot.slane %v2636, 3
    %v2649 = vrot.slane %v2637, 3
    %v2650 = vrot.slane %v2638, 3
    %v2651 = vrot.slane %v2639, 3
    %v2652 = vrot.slane %v2640, 3
    %v2653 = vrot.slane %v2641, 3
    %v2660 = vadd.f32 %v2625, %v2648
    %v2661 = vadd.f32 %v2626, %v2649
    %v2662 = vadd.f32 %v2627, %v2650
    %v2663 = vadd.f32 %v2628, %v2651
    %v2664 = vadd.f32 %v2629, %v2652
    %v2665 = vadd.f32 %v2630, %v2653
    %2672 = vrot.lane.b32.xlu0 %v2660, 110
    %v2673 = vpop.permute.xlu0 %2672
    %2674 = vrot.lane.b32.xlu0 %v2661, 110
    %v2675 = vpop.permute.xlu0 %2674
    %2676 = vrot.lane.b32.xlu0 %v2662, 110
    %v2677 = vpop.permute.xlu0 %2676
    %2678 = vrot.lane.b32.xlu0 %v2663, 110
    %v2679 = vpop.permute.xlu0 %2678
    %2680 = vrot.lane.b32.xlu0 %v2664, 110
    %v2681 = vpop.permute.xlu0 %2680
    %2682 = vrot.lane.b32.xlu0 %v2665, 110
    %v2683 = vpop.permute.xlu0 %2682
    %v2684 = vsel %vm198, %v2673, %v2675
    %v2685 = vsel %vm198, %v2675, %v2677
    %v2686 = vsel %vm198, %v2677, %v2679
    %v2687 = vsel %vm198, %v2679, %v2681
    %v2688 = vsel %vm198, %v2681, %v2683
    %v2695 = vadd.f32 %v2543, %v2684
    %v2696 = vadd.f32 %v2544, %v2685
    %v2697 = vadd.f32 %v2545, %v2686
    %v2698 = vadd.f32 %v2546, %v2687
    %v2699 = vadd.f32 %v2547, %v2688
    %v2700 = vadd.f32 %v2548, %v2683
    %2702 = vset.pattern.permute.xlu0 0
    %2703 = vperm.xlu0 %2702, %v2117
    %v2704 = vpop.permute.xlu0 %2703
    %v2706 = vperm.slane %v2704, 0
    %v2707 = vmul.f32 %v2706, %v2107
    %v2708 = vmul.f32 %v2706, %v2108
    %v2709 = vmul.f32 %v2706, %v2109
    %v2710 = vmul.f32 %v2706, %v2110
    %v2711 = vmul.f32 %v2706, %v2111
    %v2712 = vmul.f32 %v2706, %v2112
    %2713 = vset.pattern.permute.xlu0 1
    %2714 = vperm.xlu0 %2713, %v2117
    %v2715 = vpop.permute.xlu0 %2714
    %v2717 = vperm.slane %v2715, 0
    %v2718 = vmul.f32 %v2717, %v2107
    %v2719 = vmul.f32 %v2717, %v2108
    %v2720 = vmul.f32 %v2717, %v2109
    %v2721 = vmul.f32 %v2717, %v2110
    %v2722 = vmul.f32 %v2717, %v2111
    %v2723 = vmul.f32 %v2717, %v2112
    %v2730 = vrot.slane %v2718, 1
    %v2731 = vrot.slane %v2719, 1
    %v2732 = vrot.slane %v2720, 1
    %v2733 = vrot.slane %v2721, 1
    %v2734 = vrot.slane %v2722, 1
    %v2735 = vrot.slane %v2723, 1
    %v2742 = vadd.f32 %v2707, %v2730
    %v2743 = vadd.f32 %v2708, %v2731
    %v2744 = vadd.f32 %v2709, %v2732
    %v2745 = vadd.f32 %v2710, %v2733
    %v2746 = vadd.f32 %v2711, %v2734
    %v2747 = vadd.f32 %v2712, %v2735
    %2748 = vset.pattern.permute.xlu0 2
    %2749 = vperm.xlu0 %2748, %v2117
    %v2750 = vpop.permute.xlu0 %2749
    %v2752 = vperm.slane %v2750, 0
    %v2753 = vmul.f32 %v2752, %v2107
    %v2754 = vmul.f32 %v2752, %v2108
    %v2755 = vmul.f32 %v2752, %v2109
    %v2756 = vmul.f32 %v2752, %v2110
    %v2757 = vmul.f32 %v2752, %v2111
    %v2758 = vmul.f32 %v2752, %v2112
    %v2765 = vrot.slane %v2753, 2
    %v2766 = vrot.slane %v2754, 2
    %v2767 = vrot.slane %v2755, 2
    %v2768 = vrot.slane %v2756, 2
    %v2769 = vrot.slane %v2757, 2
    %v2770 = vrot.slane %v2758, 2
    %v2777 = vadd.f32 %v2742, %v2765
    %v2778 = vadd.f32 %v2743, %v2766
    %v2779 = vadd.f32 %v2744, %v2767
    %v2780 = vadd.f32 %v2745, %v2768
    %v2781 = vadd.f32 %v2746, %v2769
    %v2782 = vadd.f32 %v2747, %v2770
    %2783 = vset.pattern.permute.xlu0 3
    %2784 = vperm.xlu0 %2783, %v2117
    %v2785 = vpop.permute.xlu0 %2784
    %v2787 = vperm.slane %v2785, 0
    %v2788 = vmul.f32 %v2787, %v2107
    %v2789 = vmul.f32 %v2787, %v2108
    %v2790 = vmul.f32 %v2787, %v2109
    %v2791 = vmul.f32 %v2787, %v2110
    %v2792 = vmul.f32 %v2787, %v2111
    %v2793 = vmul.f32 %v2787, %v2112
    %v2800 = vrot.slane %v2788, 3
    %v2801 = vrot.slane %v2789, 3
    %v2802 = vrot.slane %v2790, 3
    %v2803 = vrot.slane %v2791, 3
    %v2804 = vrot.slane %v2792, 3
    %v2805 = vrot.slane %v2793, 3
    %v2812 = vadd.f32 %v2777, %v2800
    %v2813 = vadd.f32 %v2778, %v2801
    %v2814 = vadd.f32 %v2779, %v2802
    %v2815 = vadd.f32 %v2780, %v2803
    %v2816 = vadd.f32 %v2781, %v2804
    %v2817 = vadd.f32 %v2782, %v2805
    %2824 = vrot.lane.b32.xlu0 %v2812, 109
    %v2825 = vpop.permute.xlu0 %2824
    %2826 = vrot.lane.b32.xlu0 %v2813, 109
    %v2827 = vpop.permute.xlu0 %2826
    %2828 = vrot.lane.b32.xlu0 %v2814, 109
    %v2829 = vpop.permute.xlu0 %2828
    %2830 = vrot.lane.b32.xlu0 %v2815, 109
    %v2831 = vpop.permute.xlu0 %2830
    %2832 = vrot.lane.b32.xlu0 %v2816, 109
    %v2833 = vpop.permute.xlu0 %2832
    %2834 = vrot.lane.b32.xlu0 %v2817, 109
    %v2835 = vpop.permute.xlu0 %2834
    %v2836 = vsel %vm245, %v2825, %v2827
    %v2837 = vsel %vm245, %v2827, %v2829
    %v2838 = vsel %vm245, %v2829, %v2831
    %v2839 = vsel %vm245, %v2831, %v2833
    %v2840 = vsel %vm245, %v2833, %v2835
    %v2847 = vadd.f32 %v2695, %v2836
    %v2848 = vadd.f32 %v2696, %v2837
    %v2849 = vadd.f32 %v2697, %v2838
    %v2850 = vadd.f32 %v2698, %v2839
    %v2851 = vadd.f32 %v2699, %v2840
    %v2852 = vadd.f32 %v2700, %v2835
    %2854 = vset.pattern.permute.xlu0 0
    %2855 = vperm.xlu0 %2854, %v2118
    %v2856 = vpop.permute.xlu0 %2855
    %v2858 = vperm.slane %v2856, 0
    %v2859 = vmul.f32 %v2858, %v2107
    %v2860 = vmul.f32 %v2858, %v2108
    %v2861 = vmul.f32 %v2858, %v2109
    %v2862 = vmul.f32 %v2858, %v2110
    %v2863 = vmul.f32 %v2858, %v2111
    %v2864 = vmul.f32 %v2858, %v2112
    %2865 = vset.pattern.permute.xlu0 1
    %2866 = vperm.xlu0 %2865, %v2118
    %v2867 = vpop.permute.xlu0 %2866
    %v2869 = vperm.slane %v2867, 0
    %v2870 = vmul.f32 %v2869, %v2107
    %v2871 = vmul.f32 %v2869, %v2108
    %v2872 = vmul.f32 %v2869, %v2109
    %v2873 = vmul.f32 %v2869, %v2110
    %v2874 = vmul.f32 %v2869, %v2111
    %v2875 = vmul.f32 %v2869, %v2112
    %v2882 = vrot.slane %v2870, 1
    %v2883 = vrot.slane %v2871, 1
    %v2884 = vrot.slane %v2872, 1
    %v2885 = vrot.slane %v2873, 1
    %v2886 = vrot.slane %v2874, 1
    %v2887 = vrot.slane %v2875, 1
    %v2894 = vadd.f32 %v2859, %v2882
    %v2895 = vadd.f32 %v2860, %v2883
    %v2896 = vadd.f32 %v2861, %v2884
    %v2897 = vadd.f32 %v2862, %v2885
    %v2898 = vadd.f32 %v2863, %v2886
    %v2899 = vadd.f32 %v2864, %v2887
    %2900 = vset.pattern.permute.xlu0 2
    %2901 = vperm.xlu0 %2900, %v2118
    %v2902 = vpop.permute.xlu0 %2901
    %v2904 = vperm.slane %v2902, 0
    %v2905 = vmul.f32 %v2904, %v2107
    %v2906 = vmul.f32 %v2904, %v2108
    %v2907 = vmul.f32 %v2904, %v2109
    %v2908 = vmul.f32 %v2904, %v2110
    %v2909 = vmul.f32 %v2904, %v2111
    %v2910 = vmul.f32 %v2904, %v2112
    %v2917 = vrot.slane %v2905, 2
    %v2918 = vrot.slane %v2906, 2
    %v2919 = vrot.slane %v2907, 2
    %v2920 = vrot.slane %v2908, 2
    %v2921 = vrot.slane %v2909, 2
    %v2922 = vrot.slane %v2910, 2
    %v2929 = vadd.f32 %v2894, %v2917
    %v2930 = vadd.f32 %v2895, %v2918
    %v2931 = vadd.f32 %v2896, %v2919
    %v2932 = vadd.f32 %v2897, %v2920
    %v2933 = vadd.f32 %v2898, %v2921
    %v2934 = vadd.f32 %v2899, %v2922
    %2935 = vset.pattern.permute.xlu0 3
    %2936 = vperm.xlu0 %2935, %v2118
    %v2937 = vpop.permute.xlu0 %2936
    %v2939 = vperm.slane %v2937, 0
    %v2940 = vmul.f32 %v2939, %v2107
    %v2941 = vmul.f32 %v2939, %v2108
    %v2942 = vmul.f32 %v2939, %v2109
    %v2943 = vmul.f32 %v2939, %v2110
    %v2944 = vmul.f32 %v2939, %v2111
    %v2945 = vmul.f32 %v2939, %v2112
    %v2952 = vrot.slane %v2940, 3
    %v2953 = vrot.slane %v2941, 3
    %v2954 = vrot.slane %v2942, 3
    %v2955 = vrot.slane %v2943, 3
    %v2956 = vrot.slane %v2944, 3
    %v2957 = vrot.slane %v2945, 3
    %v2964 = vadd.f32 %v2929, %v2952
    %v2965 = vadd.f32 %v2930, %v2953
    %v2966 = vadd.f32 %v2931, %v2954
    %v2967 = vadd.f32 %v2932, %v2955
    %v2968 = vadd.f32 %v2933, %v2956
    %v2969 = vadd.f32 %v2934, %v2957
    %2976 = vrot.lane.b32.xlu0 %v2964, 108
    %v2977 = vpop.permute.xlu0 %2976
    %2978 = vrot.lane.b32.xlu0 %v2965, 108
    %v2979 = vpop.permute.xlu0 %2978
    %2980 = vrot.lane.b32.xlu0 %v2966, 108
    %v2981 = vpop.permute.xlu0 %2980
    %2982 = vrot.lane.b32.xlu0 %v2967, 108
    %v2983 = vpop.permute.xlu0 %2982
    %2984 = vrot.lane.b32.xlu0 %v2968, 108
    %v2985 = vpop.permute.xlu0 %2984
    %2986 = vrot.lane.b32.xlu0 %v2969, 108
    %v2987 = vpop.permute.xlu0 %2986
    %v2988 = vsel %vm292, %v2977, %v2979
    %v2989 = vsel %vm292, %v2979, %v2981
    %v2990 = vsel %vm292, %v2981, %v2983
    %v2991 = vsel %vm292, %v2983, %v2985
    %v2992 = vsel %vm292, %v2985, %v2987
    %v2999 = vadd.f32 %v2847, %v2988
    %v3000 = vadd.f32 %v2848, %v2989
    %v3001 = vadd.f32 %v2849, %v2990
    %v3002 = vadd.f32 %v2850, %v2991
    %v3003 = vadd.f32 %v2851, %v2992
    %v3004 = vadd.f32 %v2852, %v2987
    %3006 = vset.pattern.permute.xlu0 0
    %3007 = vperm.xlu0 %3006, %v2119
    %v3008 = vpop.permute.xlu0 %3007
    %v3010 = vperm.slane %v3008, 0
    %v3011 = vmul.f32 %v3010, %v2107
    %v3012 = vmul.f32 %v3010, %v2108
    %v3013 = vmul.f32 %v3010, %v2109
    %v3014 = vmul.f32 %v3010, %v2110
    %v3015 = vmul.f32 %v3010, %v2111
    %v3016 = vmul.f32 %v3010, %v2112
    %3017 = vset.pattern.permute.xlu0 1
    %3018 = vperm.xlu0 %3017, %v2119
    %v3019 = vpop.permute.xlu0 %3018
    %v3021 = vperm.slane %v3019, 0
    %v3022 = vmul.f32 %v3021, %v2107
    %v3023 = vmul.f32 %v3021, %v2108
    %v3024 = vmul.f32 %v3021, %v2109
    %v3025 = vmul.f32 %v3021, %v2110
    %v3026 = vmul.f32 %v3021, %v2111
    %v3027 = vmul.f32 %v3021, %v2112
    %v3034 = vrot.slane %v3022, 1
    %v3035 = vrot.slane %v3023, 1
    %v3036 = vrot.slane %v3024, 1
    %v3037 = vrot.slane %v3025, 1
    %v3038 = vrot.slane %v3026, 1
    %v3039 = vrot.slane %v3027, 1
    %v3046 = vadd.f32 %v3011, %v3034
    %v3047 = vadd.f32 %v3012, %v3035
    %v3048 = vadd.f32 %v3013, %v3036
    %v3049 = vadd.f32 %v3014, %v3037
    %v3050 = vadd.f32 %v3015, %v3038
    %v3051 = vadd.f32 %v3016, %v3039
    %3052 = vset.pattern.permute.xlu0 2
    %3053 = vperm.xlu0 %3052, %v2119
    %v3054 = vpop.permute.xlu0 %3053
    %v3056 = vperm.slane %v3054, 0
    %v3057 = vmul.f32 %v3056, %v2107
    %v3058 = vmul.f32 %v3056, %v2108
    %v3059 = vmul.f32 %v3056, %v2109
    %v3060 = vmul.f32 %v3056, %v2110
    %v3061 = vmul.f32 %v3056, %v2111
    %v3062 = vmul.f32 %v3056, %v2112
    %v3069 = vrot.slane %v3057, 2
    %v3070 = vrot.slane %v3058, 2
    %v3071 = vrot.slane %v3059, 2
    %v3072 = vrot.slane %v3060, 2
    %v3073 = vrot.slane %v3061, 2
    %v3074 = vrot.slane %v3062, 2
    %v3081 = vadd.f32 %v3046, %v3069
    %v3082 = vadd.f32 %v3047, %v3070
    %v3083 = vadd.f32 %v3048, %v3071
    %v3084 = vadd.f32 %v3049, %v3072
    %v3085 = vadd.f32 %v3050, %v3073
    %v3086 = vadd.f32 %v3051, %v3074
    %3087 = vset.pattern.permute.xlu0 3
    %3088 = vperm.xlu0 %3087, %v2119
    %v3089 = vpop.permute.xlu0 %3088
    %v3091 = vperm.slane %v3089, 0
    %v3092 = vmul.f32 %v3091, %v2107
    %v3093 = vmul.f32 %v3091, %v2108
    %v3094 = vmul.f32 %v3091, %v2109
    %v3095 = vmul.f32 %v3091, %v2110
    %v3096 = vmul.f32 %v3091, %v2111
    %v3097 = vmul.f32 %v3091, %v2112
    %v3104 = vrot.slane %v3092, 3
    %v3105 = vrot.slane %v3093, 3
    %v3106 = vrot.slane %v3094, 3
    %v3107 = vrot.slane %v3095, 3
    %v3108 = vrot.slane %v3096, 3
    %v3109 = vrot.slane %v3097, 3
    %v3116 = vadd.f32 %v3081, %v3104
    %v3117 = vadd.f32 %v3082, %v3105
    %v3118 = vadd.f32 %v3083, %v3106
    %v3119 = vadd.f32 %v3084, %v3107
    %v3120 = vadd.f32 %v3085, %v3108
    %v3121 = vadd.f32 %v3086, %v3109
    %3128 = vrot.lane.b32.xlu0 %v3116, 92
    %v3129 = vpop.permute.xlu0 %3128
    %3130 = vrot.lane.b32.xlu0 %v3117, 92
    %v3131 = vpop.permute.xlu0 %3130
    %3132 = vrot.lane.b32.xlu0 %v3118, 92
    %v3133 = vpop.permute.xlu0 %3132
    %3134 = vrot.lane.b32.xlu0 %v3119, 92
    %v3135 = vpop.permute.xlu0 %3134
    %3136 = vrot.lane.b32.xlu0 %v3120, 92
    %v3137 = vpop.permute.xlu0 %3136
    %3138 = vrot.lane.b32.xlu0 %v3121, 92
    %v3139 = vpop.permute.xlu0 %3138
    %v3140 = vsel %vm339, %v3129, %v3131
    %v3141 = vsel %vm339, %v3131, %v3133
    %v3142 = vsel %vm339, %v3133, %v3135
    %v3143 = vsel %vm339, %v3135, %v3137
    %v3144 = vsel %vm339, %v3137, %v3139
    %v3151 = vadd.f32 %v2999, %v3140
    %v3152 = vadd.f32 %v3000, %v3141
    %v3153 = vadd.f32 %v3001, %v3142
    %v3154 = vadd.f32 %v3002, %v3143
    %v3155 = vadd.f32 %v3003, %v3144
    %v3156 = vadd.f32 %v3004, %v3139
    %3158 = vset.pattern.permute.xlu0 0
    %3159 = vperm.xlu0 %3158, %v2120
    %v3160 = vpop.permute.xlu0 %3159
    %v3162 = vperm.slane %v3160, 0
    %v3163 = vmul.f32 %v3162, %v2107
    %v3164 = vmul.f32 %v3162, %v2108
    %v3165 = vmul.f32 %v3162, %v2109
    %v3166 = vmul.f32 %v3162, %v2110
    %v3167 = vmul.f32 %v3162, %v2111
    %v3168 = vmul.f32 %v3162, %v2112
    %3169 = vset.pattern.permute.xlu0 1
    %3170 = vperm.xlu0 %3169, %v2120
    %v3171 = vpop.permute.xlu0 %3170
    %v3173 = vperm.slane %v3171, 0
    %v3174 = vmul.f32 %v3173, %v2107
    %v3175 = vmul.f32 %v3173, %v2108
    %v3176 = vmul.f32 %v3173, %v2109
    %v3177 = vmul.f32 %v3173, %v2110
    %v3178 = vmul.f32 %v3173, %v2111
    %v3179 = vmul.f32 %v3173, %v2112
    %v3186 = vrot.slane %v3174, 1
    %v3187 = vrot.slane %v3175, 1
    %v3188 = vrot.slane %v3176, 1
    %v3189 = vrot.slane %v3177, 1
    %v3190 = vrot.slane %v3178, 1
    %v3191 = vrot.slane %v3179, 1
    %v3198 = vadd.f32 %v3163, %v3186
    %v3199 = vadd.f32 %v3164, %v3187
    %v3200 = vadd.f32 %v3165, %v3188
    %v3201 = vadd.f32 %v3166, %v3189
    %v3202 = vadd.f32 %v3167, %v3190
    %v3203 = vadd.f32 %v3168, %v3191
    %3204 = vset.pattern.permute.xlu0 2
    %3205 = vperm.xlu0 %3204, %v2120
    %v3206 = vpop.permute.xlu0 %3205
    %v3208 = vperm.slane %v3206, 0
    %v3209 = vmul.f32 %v3208, %v2107
    %v3210 = vmul.f32 %v3208, %v2108
    %v3211 = vmul.f32 %v3208, %v2109
    %v3212 = vmul.f32 %v3208, %v2110
    %v3213 = vmul.f32 %v3208, %v2111
    %v3214 = vmul.f32 %v3208, %v2112
    %v3221 = vrot.slane %v3209, 2
    %v3222 = vrot.slane %v3210, 2
    %v3223 = vrot.slane %v3211, 2
    %v3224 = vrot.slane %v3212, 2
    %v3225 = vrot.slane %v3213, 2
    %v3226 = vrot.slane %v3214, 2
    %v3233 = vadd.f32 %v3198, %v3221
    %v3234 = vadd.f32 %v3199, %v3222
    %v3235 = vadd.f32 %v3200, %v3223
    %v3236 = vadd.f32 %v3201, %v3224
    %v3237 = vadd.f32 %v3202, %v3225
    %v3238 = vadd.f32 %v3203, %v3226
    %3239 = vset.pattern.permute.xlu0 3
    %3240 = vperm.xlu0 %3239, %v2120
    %v3241 = vpop.permute.xlu0 %3240
    %v3243 = vperm.slane %v3241, 0
    %v3244 = vmul.f32 %v3243, %v2107
    %v3245 = vmul.f32 %v3243, %v2108
    %v3246 = vmul.f32 %v3243, %v2109
    %v3247 = vmul.f32 %v3243, %v2110
    %v3248 = vmul.f32 %v3243, %v2111
    %v3249 = vmul.f32 %v3243, %v2112
    %v3256 = vrot.slane %v3244, 3
    %v3257 = vrot.slane %v3245, 3
    %v3258 = vrot.slane %v3246, 3
    %v3259 = vrot.slane %v3247, 3
    %v3260 = vrot.slane %v3248, 3
    %v3261 = vrot.slane %v3249, 3
    %v3268 = vadd.f32 %v3233, %v3256
    %v3269 = vadd.f32 %v3234, %v3257
    %v3270 = vadd.f32 %v3235, %v3258
    %v3271 = vadd.f32 %v3236, %v3259
    %v3272 = vadd.f32 %v3237, %v3260
    %v3273 = vadd.f32 %v3238, %v3261
    %3280 = vrot.lane.b32.xlu0 %v3268, 91
    %v3281 = vpop.permute.xlu0 %3280
    %3282 = vrot.lane.b32.xlu0 %v3269, 91
    %v3283 = vpop.permute.xlu0 %3282
    %3284 = vrot.lane.b32.xlu0 %v3270, 91
    %v3285 = vpop.permute.xlu0 %3284
    %3286 = vrot.lane.b32.xlu0 %v3271, 91
    %v3287 = vpop.permute.xlu0 %3286
    %3288 = vrot.lane.b32.xlu0 %v3272, 91
    %v3289 = vpop.permute.xlu0 %3288
    %3290 = vrot.lane.b32.xlu0 %v3273, 91
    %v3291 = vpop.permute.xlu0 %3290
    %v3292 = vsel %vm386, %v3281, %v3283
    %v3293 = vsel %vm386, %v3283, %v3285
    %v3294 = vsel %vm386, %v3285, %v3287
    %v3295 = vsel %vm386, %v3287, %v3289
    %v3296 = vsel %vm386, %v3289, %v3291
    %v3303 = vadd.f32 %v3151, %v3292
    %v3304 = vadd.f32 %v3152, %v3293
    %v3305 = vadd.f32 %v3153, %v3294
    %v3306 = vadd.f32 %v3154, %v3295
    %v3307 = vadd.f32 %v3155, %v3296
    %v3308 = vadd.f32 %v3156, %v3291
    %3310 = vset.pattern.permute.xlu0 0
    %3311 = vperm.xlu0 %3310, %v2121
    %v3312 = vpop.permute.xlu0 %3311
    %v3314 = vperm.slane %v3312, 0
    %v3315 = vmul.f32 %v3314, %v2107
    %v3316 = vmul.f32 %v3314, %v2108
    %v3317 = vmul.f32 %v3314, %v2109
    %v3318 = vmul.f32 %v3314, %v2110
    %v3319 = vmul.f32 %v3314, %v2111
    %v3320 = vmul.f32 %v3314, %v2112
    %3321 = vset.pattern.permute.xlu0 1
    %3322 = vperm.xlu0 %3321, %v2121
    %v3323 = vpop.permute.xlu0 %3322
    %v3325 = vperm.slane %v3323, 0
    %v3326 = vmul.f32 %v3325, %v2107
    %v3327 = vmul.f32 %v3325, %v2108
    %v3328 = vmul.f32 %v3325, %v2109
    %v3329 = vmul.f32 %v3325, %v2110
    %v3330 = vmul.f32 %v3325, %v2111
    %v3331 = vmul.f32 %v3325, %v2112
    %v3338 = vrot.slane %v3326, 1
    %v3339 = vrot.slane %v3327, 1
    %v3340 = vrot.slane %v3328, 1
    %v3341 = vrot.slane %v3329, 1
    %v3342 = vrot.slane %v3330, 1
    %v3343 = vrot.slane %v3331, 1
    %v3350 = vadd.f32 %v3315, %v3338
    %v3351 = vadd.f32 %v3316, %v3339
    %v3352 = vadd.f32 %v3317, %v3340
    %v3353 = vadd.f32 %v3318, %v3341
    %v3354 = vadd.f32 %v3319, %v3342
    %v3355 = vadd.f32 %v3320, %v3343
    %3356 = vset.pattern.permute.xlu0 2
    %3357 = vperm.xlu0 %3356, %v2121
    %v3358 = vpop.permute.xlu0 %3357
    %v3360 = vperm.slane %v3358, 0
    %v3361 = vmul.f32 %v3360, %v2107
    %v3362 = vmul.f32 %v3360, %v2108
    %v3363 = vmul.f32 %v3360, %v2109
    %v3364 = vmul.f32 %v3360, %v2110
    %v3365 = vmul.f32 %v3360, %v2111
    %v3366 = vmul.f32 %v3360, %v2112
    %v3373 = vrot.slane %v3361, 2
    %v3374 = vrot.slane %v3362, 2
    %v3375 = vrot.slane %v3363, 2
    %v3376 = vrot.slane %v3364, 2
    %v3377 = vrot.slane %v3365, 2
    %v3378 = vrot.slane %v3366, 2
    %v3385 = vadd.f32 %v3350, %v3373
    %v3386 = vadd.f32 %v3351, %v3374
    %v3387 = vadd.f32 %v3352, %v3375
    %v3388 = vadd.f32 %v3353, %v3376
    %v3389 = vadd.f32 %v3354, %v3377
    %v3390 = vadd.f32 %v3355, %v3378
    %3391 = vset.pattern.permute.xlu0 3
    %3392 = vperm.xlu0 %3391, %v2121
    %v3393 = vpop.permute.xlu0 %3392
    %v3395 = vperm.slane %v3393, 0
    %v3396 = vmul.f32 %v3395, %v2107
    %v3397 = vmul.f32 %v3395, %v2108
    %v3398 = vmul.f32 %v3395, %v2109
    %v3399 = vmul.f32 %v3395, %v2110
    %v3400 = vmul.f32 %v3395, %v2111
    %v3401 = vmul.f32 %v3395, %v2112
    %v3408 = vrot.slane %v3396, 3
    %v3409 = vrot.slane %v3397, 3
    %v3410 = vrot.slane %v3398, 3
    %v3411 = vrot.slane %v3399, 3
    %v3412 = vrot.slane %v3400, 3
    %v3413 = vrot.slane %v3401, 3
    %v3420 = vadd.f32 %v3385, %v3408
    %v3421 = vadd.f32 %v3386, %v3409
    %v3422 = vadd.f32 %v3387, %v3410
    %v3423 = vadd.f32 %v3388, %v3411
    %v3424 = vadd.f32 %v3389, %v3412
    %v3425 = vadd.f32 %v3390, %v3413
    %3432 = vrot.lane.b32.xlu0 %v3420, 90
    %v3433 = vpop.permute.xlu0 %3432
    %3434 = vrot.lane.b32.xlu0 %v3421, 90
    %v3435 = vpop.permute.xlu0 %3434
    %3436 = vrot.lane.b32.xlu0 %v3422, 90
    %v3437 = vpop.permute.xlu0 %3436
    %3438 = vrot.lane.b32.xlu0 %v3423, 90
    %v3439 = vpop.permute.xlu0 %3438
    %3440 = vrot.lane.b32.xlu0 %v3424, 90
    %v3441 = vpop.permute.xlu0 %3440
    %3442 = vrot.lane.b32.xlu0 %v3425, 90
    %v3443 = vpop.permute.xlu0 %3442
    %v3444 = vsel %vm433, %v3433, %v3435
    %v3445 = vsel %vm433, %v3435, %v3437
    %v3446 = vsel %vm433, %v3437, %v3439
    %v3447 = vsel %vm433, %v3439, %v3441
    %v3448 = vsel %vm433, %v3441, %v3443
    %v3455 = vadd.f32 %v3303, %v3444
    %v3456 = vadd.f32 %v3304, %v3445
    %v3457 = vadd.f32 %v3305, %v3446
    %v3458 = vadd.f32 %v3306, %v3447
    %v3459 = vadd.f32 %v3307, %v3448
    %v3460 = vadd.f32 %v3308, %v3443
    %v3465 = vrot.slane %v3457, 7
    %v3466 = vrot.slane %v3458, 7
    %v3467 = vrot.slane %v3459, 7
    %v3468 = vrot.slane %v3460, 7
    %3469 = vrot.lane.b32.xlu0 %v3465, 60
    %v3470 = vpop.permute.xlu0 %3469
    %3471 = vrot.lane.b32.xlu0 %v3466, 60
    %v3472 = vpop.permute.xlu0 %3471
    %3473 = vrot.lane.b32.xlu0 %v3467, 60
    %v3474 = vpop.permute.xlu0 %3473
    %3475 = vrot.lane.b32.xlu0 %v3468, 60
    %v3476 = vpop.permute.xlu0 %3475
    %vm3477 = vcmask 490496
    %v3478 = vsel %vm3477, %v3470, %v3472
    %v3479 = vsel %vm3477, %v3472, %v3474
    %v3480 = vsel %vm3477, %v3474, %v3476
    %vm3484 = vcmask 1040384
    %v3485 = vsel %vm3484, %v3455, %v3478
    %v3486 = vsel %vm3484, %v3456, %v3479
    %v3487 = vsel %vm3484, %v3457, %v3480
    %v3488 = vld [vmem:[%s7] sm:$0xff]
    %v3489 = vld [vmem:[%s7 + $0x8] sm:$0xff]
    %v3490 = vld [vmem:[%s7 + $0x10] sm:$0xff]
    %v3491 = vld [vmem:[%s7 + $0x18] sm:$0xff]
    %v3492 = vld [vmem:[%s7 + $0x20] sm:$0xff]
    %v3493 = vld [vmem:[%s7 + $0x28] sm:$0xff]
    %v3494 = vld [vmem:[%s7 + $0x30] sm:$0xff]
    %v3495 = vld [vmem:[%s7 + $0x38] sm:$0xff]
    %v3496 = vld [vmem:[%s7 + $0x40] sm:$0xff]
    %v3497 = vld [vmem:[%s7 + $0x48] sm:$0xff]
    %v3498 = vld [vmem:[%s7 + $0x50] sm:$0xff]
    %v3499 = vld [vmem:[%s7 + $0x58] sm:$0xff]
    %v3500 = vld [vmem:[%s7 + $0x60] sm:$0xff]
    %v3501 = vld [vmem:[%s7 + $0x68] sm:$0xff]
    %v3502 = vld [vmem:[%s7 + $0x70] sm:$0xff]
    %v3503 = vld [vmem:[%s7 + $0x78] sm:$0xff]
    %v3504 = vld [vmem:[%s7 + $0x80] sm:$0xff]
    %v3505 = vld [vmem:[%s7 + $0x88] sm:$0xff]
    %v3506 = vld [vmem:[%s7 + $0x90] sm:$0xff]
    %v3507 = vld [vmem:[%s7 + $0x98] sm:$0xff]
    %v3508 = vld [vmem:[%s7 + $0xa0] sm:$0xff]
    %v3509 = vld [vmem:[%s7 + $0xa8] sm:$0xff]
    %v3510 = vld [vmem:[%s7 + $0xb0] sm:$0xff]
    %v3511 = vld [vmem:[%s7 + $0xb8] sm:$0xff]
    %v3512 = vld [vmem:[%s7 + $0xc0] sm:$0xff]
    %v3513 = vld [vmem:[%s7 + $0xc8] sm:$0xff]
    %v3514 = vld [vmem:[%s7 + $0xd0] sm:$0xff]
    %v3515 = vld [vmem:[%s7 + $0xd8] sm:$0xff]
    %v3516 = vld [vmem:[%s7 + $0xe0] sm:$0xff]
    %v3517 = vld [vmem:[%s7 + $0xe8] sm:$0xff]
    %v3518 = vld [vmem:[%s7 + $0xf0] sm:$0xff]
    %v3519 = vld [vmem:[%s7 + $0xf8] sm:$0xff]
    %v3520 = vld [vmem:[%s7 + $0x100] sm:$0xff]
    %v3521 = vld [vmem:[%s7 + $0x108] sm:$0xff]
    %v3522 = vld [vmem:[%s7 + $0x110] sm:$0xff]
    %v3523 = vld [vmem:[%s7 + $0x118] sm:$0xff]
    %v3524 = vld [vmem:[%s7 + $0x120] sm:$0xff]
    %v3525 = vld [vmem:[%s7 + $0x128] sm:$0xff]
    %v3526 = vld [vmem:[%s7 + $0x130] sm:$0xff]
    %v3527 = vld [vmem:[%s7 + $0x138] sm:$0xff]
    %v3528 = vld [vmem:[%s7 + $0x140] sm:$0xf]
    %v3529 = vld [vmem:[%s8] sm:$0x1]
    %v3531 = vperm.slane %v3529, 0
    %vm3533 = vcmask 556032
    %v3535 = vsel %vm3533, %v3487, 0
    %v3538 = vsel %vm487, %v3528, 0
    %3540 = vmatpush.msra.mxu0 %v3503
    %3541 = vmatpush.msra.mxu0 %v3502
    %3542 = vmatpush.msra.mxu0 %v3501
    %3543 = vmatpush.msra.mxu0 %v3500
    %3544 = vmatpush.msra.mxu0 %v3499
    %3545 = vmatpush.msra.mxu0 %v3498
    %3546 = vmatpush.msra.mxu0 %v3497
    %3547 = vmatpush.msra.mxu0 %v3496
    %3548 = vmatpush.msra.mxu0 %v3495
    %3549 = vmatpush.msra.mxu0 %v3494
    %3550 = vmatpush.msra.mxu0 %v3493
    %3551 = vmatpush.msra.mxu0 %v3492
    %3552 = vmatpush.msra.mxu0 %v3491
    %3553 = vmatpush.msra.mxu0 %v3490
    %3554 = vmatpush.msra.mxu0 %v3489
    %3555 = vmatpush.msra.mxu0 %v3488
    %3556 = vmatmul.f32.gmra.mxu0 %v3485
    %v3557 = vpop.f32.mrf.mxu0
    %v3558 = vadd.f32 %v3531, %v3557
    %3559 = vdwg.mxu0
    %3560 = vmatpush.msra.mxu0 %v3519
    %3561 = vmatpush.msra.mxu0 %v3518
    %3562 = vmatpush.msra.mxu0 %v3517
    %3563 = vmatpush.msra.mxu0 %v3516
    %3564 = vmatpush.msra.mxu0 %v3515
    %3565 = vmatpush.msra.mxu0 %v3514
    %3566 = vmatpush.msra.mxu0 %v3513
    %3567 = vmatpush.msra.mxu0 %v3512
    %3568 = vmatpush.msra.mxu0 %v3511
    %3569 = vmatpush.msra.mxu0 %v3510
    %3570 = vmatpush.msra.mxu0 %v3509
    %3571 = vmatpush.msra.mxu0 %v3508
    %3572 = vmatpush.msra.mxu0 %v3507
    %3573 = vmatpush.msra.mxu0 %v3506
    %3574 = vmatpush.msra.mxu0 %v3505
    %3575 = vmatpush.msra.mxu0 %v3504
    %3576 = vmatmul.f32.gmra.mxu0 %v3486
    %v3577 = vpop.f32.mrf.mxu0
    %v3578 = vadd.f32 %v3558, %v3577
    %3579 = vdwg.mxu0
    %3580 = vmatpush.msra.mxu0 0.0
    %3581 = vmatpush.msra.mxu0 0.0
    %3582 = vmatpush.msra.mxu0 0.0
    %3583 = vmatpush.msra.mxu0 0.0
    %3584 = vmatpush.msra.mxu0 0.0
    %3585 = vmatpush.msra.mxu0 0.0
    %3586 = vmatpush.msra.mxu0 0.0
    %3587 = vmatpush.msra.mxu0 %v3538
    %3588 = vmatpush.msra.mxu0 %v3527
    %3589 = vmatpush.msra.mxu0 %v3526
    %3590 = vmatpush.msra.mxu0 %v3525
    %3591 = vmatpush.msra.mxu0 %v3524
    %3592 = vmatpush.msra.mxu0 %v3523
    %3593 = vmatpush.msra.mxu0 %v3522
    %3594 = vmatpush.msra.mxu0 %v3521
    %3595 = vmatpush.msra.mxu0 %v3520
    %3596 = vmatmul.f32.gmra.mxu0 %v3535
    %v3597 = vpop.f32.mrf.mxu0
    %v3598 = vadd.f32 %v3578, %v3597
    %3599 = vdwg.mxu0
    %vm3600 = vcmask 123904
    %3601 = vst.msk [vmem:[#allocation2] sm:$0x3] %vm3600, %v3598
    // Predicated region
    $region38: #{eig_conv_net_forward.1} parent=1 // pred_check
      _
    $region39: #{eig_conv_net_forward.1} parent=1 // pred_check_branch
      %3603 = sbr.rel (0) target = $region41
    $region40: #{eig_conv_net_forward.1} parent=1 // pred_region
      %3605 = vsyncadd [#allocation3], 0
      %s3607 = sshll.u32 [#allocation2], 4
      %s3608 = int_to_ptr.vmem [resolvable:$true] %s3607
      %s3609 = sshll.u32 %s9, 4
      %s3610 = int_to_ptr.hbm [resolvable:$true] %s3609
      %3612 = dma.vmem_to_hbm [thread:$0]  %s3608, 32, %s3610, [#allocation3]
    $region41: #{eig_conv_net_forward.1} parent=1 // pred_fallthru
      _
    // Predicated region
    $region42: #{eig_conv_net_forward.1} parent=1 // pred_check
      _
    $region43: #{eig_conv_net_forward.1} parent=1 // pred_check_branch
      %3614 = sbr.rel (0) target = $region45
    $region44: #{eig_conv_net_forward.1} parent=1 // pred_region
      %3616 = dma.done [#allocation3], 32
    $region45: #{eig_conv_net_forward.1} parent=1 // pred_fallthru
      _
    %3617 = vsyncpa [#allocation3], 1

</llo_original>
